<compile_context>
chip_gen: v7x
topology: tpu7x:2x2x1
jax: 0.10.0
libtpu: 0.0.40
codegen_flags: <defaults>
</compile_context>

<pallas_src>
import functools
import math

import jax
import jax.numpy as jnp
from jax import lax
from jax.experimental import pallas as pl
from jax.experimental.pallas import tpu as pltpu

# Make the pure-JAX reference use full-f32 matmuls so the comparison is meaningful.
jax.config.update("jax_default_matmul_precision", "highest")


# ----------------------------- packed-weight layout -----------------------------

def _layout_lists(C, hd, hid):
    """Ordered (name, n_columns) lists for the two packed per-block weight buffers."""
    a_list = [("wq", C), ("wk", C), ("wv", C), ("wp", hd), ("bp", 1),
              ("dwp1", 9), ("dwp2", 9), ("ln_g", 1), ("ln_b", 1),
              ("w2", hid), ("rescale", 1)]          # rows = C (== hd)
    b_list = [("w1", C), ("dwf", 9)]                # rows = hid
    return a_list, b_list


def _offsets(lst):
    offs, o = {}, 0
    for name, w in lst:
        offs[name] = (o, w)
        o += w
    return offs, o


def _pack_params(params, C, heads, a_list, b_list):
    """Pack each block's weights into one (C, LA) and one (hid, LB) f32 buffer."""
    A_blocks, B_blocks = [], []
    for p in params:
        resc = jnp.zeros((C, 1), jnp.float32).at[0:heads, :].set(
            p["rescale"].astype(jnp.float32).reshape(heads, 1))
        t = dict(p, rescale=resc)
        A_blocks.append(jnp.concatenate(
            [t[n].astype(jnp.float32) for n, _ in a_list], axis=1))
        B_blocks.append(jnp.concatenate(
            [t[n].astype(jnp.float32) for n, _ in b_list], axis=1))
    return jnp.stack(A_blocks), jnp.stack(B_blocks)


# ----------------------------- in-kernel helpers -----------------------------

def _gelu(x):
    """Exact (erf-based) GELU via the A&S 7.1.26 rational approximation (~1.5e-7 abs)."""
    z = x * 0.7071067811865476
    az = jnp.abs(z)
    t = 1.0 / (1.0 + 0.3275911 * az)
    poly = ((((1.061405429 * t - 1.453152027) * t + 1.421413741) * t
             - 0.284496736) * t + 0.254829592) * t
    erf_abs = 1.0 - poly * jnp.exp(-az * az)
    erf_z = jnp.where(z >= 0.0, erf_abs, -erf_abs)
    return 0.5 * x * (1.0 + erf_z)


def _mac(a, b):
    """a:(M,K) @ b:(K,N) as K unrolled VPU broadcast-MACs (K tiny and static)."""
    K = a.shape[1]
    out = a[:, 0:1] * b[0:1, :]
    for kk in range(1, K):
        out = out + a[:, kk:kk + 1] * b[kk:kk + 1, :]
    return out


# --------------------------------- fused kernel ------------------------------------

def _spectral_kernel(x_ref, wA_ref, wB_ref, o_ref, *,
                     num_blocks, heads, dim_head, H, W, offsA, offsB):
    C, N = x_ref.shape[1], x_ref.shape[2]
    d = dim_head
    x = x_ref[0].astype(jnp.float32)          # (C, N): channels on sublanes, spatial on lanes

    # --- 3x3 depthwise boundary masks, hoisted: computed ONCE, reused by every conv ---
    idx = lax.broadcasted_iota(jnp.int32, (1, N), 1)
    col = idx % W
    col_m = [col >= 1, None, col <= W - 2]            # valid left / - / valid right
    row_m = [idx >= W, None, idx < (H - 1) * W]       # valid above / - / valid below
    masks = []
    for dy in range(3):
        for dx in range(3):
            r, c = row_m[dy], col_m[dx]
            if r is None and c is None:
                masks.append(None)
            elif r is None:
                masks.append(c)
            elif c is None:
                masks.append(r)
            else:
                masks.append(jnp.logical_and(r, c))

    def dw3x3(h, dw_t):
        """3x3 depthwise conv (padding=1) on h:(Ch, H*W) via XLU lane rotations."""
        acc = dw_t[:, 4:5] * h                        # center tap (dy=1, dx=1)
        for tap in range(9):
            if tap == 4:
                continue
            dy, dx = tap // 3, tap % 3
            s = (dy - 1) * W + (dx - 1)               # flat-index offset of this tap
            t = pltpu.roll(h, (-s) % N, axis=1)       # t[:, n] = h[:, (n+s) mod N]
            t = jnp.where(masks[tap], t, 0.0)         # zero the wrapped / out-of-image taps
            acc = acc + dw_t[:, tap:tap + 1] * t
        return acc

    for bi in range(num_blocks):
        def wA(name):
            o, w = offsA[name]
            return wA_ref[bi, :, o:o + w]

        def wB(name):
            o, w = offsB[name]
            return wB_ref[bi, :, o:o + w]

        wq, wk, wv, wp = wA("wq"), wA("wk"), wA("wv"), wA("wp")
        bp, dwp1, dwp2 = wA("bp"), wA("dwp1"), wA("dwp2")
        ln_g, ln_b, w2 = wA("ln_g"), wA("ln_b"), wA("w2")
        ro_, rw_ = offsA["rescale"]
        resc = wA_ref[bi, 0:heads, ro_:ro_ + rw_]     # (heads, 1)
        w1, dwf = wB("w1"), wB("dwf")

        # ------------------------------ MS_MSA ------------------------------
        q = _mac(wq, x)                               # (hd, N)
        k = _mac(wk, x)
        v = _mac(wv, x)

        qn = q * lax.rsqrt(jnp.maximum(jnp.sum(q * q, axis=1, keepdims=True), 1e-24))
        kn = k * lax.rsqrt(jnp.maximum(jnp.sum(k * k, axis=1, keepdims=True), 1e-24))

        # channel attention per head with static 2D slices (no (heads,d,d,N) reshapes);
        # the proj 1x1 conv is folded into the per-row accumulation.
        out_c = jnp.zeros((C, N), jnp.float32)
        for hh in range(heads):
            qh = qn[hh * d:(hh + 1) * d, :]
            kh = kn[hh * d:(hh + 1) * d, :]
            vh = v[hh * d:(hh + 1) * d, :]
            rh = resc[hh:hh + 1, 0:1]                 # (1,1) per-head scale
            for i in range(d):
                a = jnp.sum(kh[i:i + 1, :] * qh, axis=1, keepdims=True) * rh   # (d,1)
                a = a - jnp.max(a, axis=0, keepdims=True)
                e = jnp.exp(a)
                p = e / jnp.sum(e, axis=0, keepdims=True)                      # softmax over j
                ro = p[0:1, 0:1] * vh[0:1, :]
                for j in range(1, d):
                    ro = ro + p[j:j + 1, 0:1] * vh[j:j + 1, :]                 # (1, N)
                kcol = hh * d + i
                out_c = out_c + wp[:, kcol:kcol + 1] * ro
        out_c = out_c + bp

        # positional branch: depthwise 3x3 -> GELU -> depthwise 3x3 on v (hd == dim)
        pe = _gelu(dw3x3(v, dwp1))
        out_p = dw3x3(pe, dwp2)

        y = out_c + out_p + x                         # attention residual

        # --------------- PreNorm (LayerNorm over channels) + FeedForward ---------------
        mu = jnp.mean(y, axis=0, keepdims=True)
        var = jnp.mean((y - mu) * (y - mu), axis=0, keepdims=True)
        yn = (y - mu) * lax.rsqrt(var + 1e-5)
        yn = yn * ln_g + ln_b

        h1 = _gelu(_mac(w1, yn))                      # (hid, N)
        h2 = _gelu(dw3x3(h1, dwf))
        ff = _mac(w2, h2)                             # (C, N)

        x = y + ff                                    # feed-forward residual

    o_ref[0] = x.astype(o_ref.dtype)


# ------------------------------- host wrapper --------------------------------

@functools.partial(jax.jit, static_argnames=("heads", "dim_head"))
def spectral_ab(x, params, *, heads, dim_head):
    """x: [B, C, H, W] float32 -> [B, C, H, W] float32 (matches SpectralAB.forward)."""
    B, C, H, W = x.shape
    N = H * W
    hd = heads * dim_head
    hid = params[0]["w1"].shape[0]
    num_blocks = len(params)
    assert hd == C, "MS_MSA requires heads * dim_head == dim (pos_emb reshape needs it)"
    assert H >= 2 and W >= 2

    a_list, b_list = _layout_lists(C, hd, hid)
    offsA, LA = _offsets(a_list)
    offsB, LB = _offsets(b_list)
    wA, wB = _pack_params(params, C, heads, a_list, b_list)

    xf = x.reshape(B, C, N)

    kern = functools.partial(
        _spectral_kernel, num_blocks=num_blocks, heads=heads, dim_head=dim_head,
        H=H, W=W, offsA=offsA, offsB=offsB)

    out = pl.pallas_call(
        kern,
        out_shape=jax.ShapeDtypeStruct((B, C, N), x.dtype),
        grid=(B,),
        in_specs=[pl.BlockSpec((1, C, N), lambda b: (b, 0, 0)),
                  pl.BlockSpec((num_blocks, C, LA), lambda b: (0, 0, 0)),
                  pl.BlockSpec((num_blocks, hid, LB), lambda b: (0, 0, 0))],
        out_specs=pl.BlockSpec((1, C, N), lambda b: (b, 0, 0)),
        compiler_params=pltpu.CompilerParams(
            dimension_semantics=("parallel",),
            vmem_limit_bytes=32 * 1024 * 1024),
    )(xf, wA, wB)
    return out.reshape(B, C, H, W)


# ------------------------------ pure-JAX reference -----------------------------

def _ref_depthwise(x, dw_t, H, W):
    B, Ch, N = x.shape
    xi = x.reshape(B, Ch, H, W)
    xp = jnp.pad(xi, ((0, 0), (0, 0), (1, 1), (1, 1)))
    acc = jnp.zeros_like(xi)
    for dy in range(3):
        for dx in range(3):
            acc = acc + xp[:, :, dy:dy + H, dx:dx + W] * dw_t[None, :, dy * 3 + dx, None, None]
    return acc.reshape(B, Ch, N)


def _ref_block(xf, p, heads, dim_head, H, W):
    B, C, N = xf.shape
    hd = heads * dim_head
    q = jnp.einsum('oc,bcn->bon', p['wq'], xf)
    k = jnp.einsum('oc,bcn->bon', p['wk'], xf)
    v = jnp.einsum('oc,bcn->bon', p['wv'], xf)
    q3 = q.reshape(B, heads, dim_head, N)
    k3 = k.reshape(B, heads, dim_head, N)
    v3 = v.reshape(B, heads, dim_head, N)
    qn = q3 / jnp.maximum(jnp.sqrt(jnp.sum(q3 * q3, -1, keepdims=True)), 1e-12)
    kn = k3 / jnp.maximum(jnp.sqrt(jnp.sum(k3 * k3, -1, keepdims=True)), 1e-12)
    attn = jnp.einsum('bhdn,bhen->bhde', kn, qn) * p['rescale'].reshape(1, heads, 1, 1)
    attn = jax.nn.softmax(attn, axis=-1)
    oh = jnp.einsum('bhde,bhen->bhdn', attn, v3).reshape(B, hd, N)
    out_c = jnp.einsum('co,bon->bcn', p['wp'], oh) + p['bp'][None, :, :]
    pe = jax.nn.gelu(_ref_depthwise(v, p['dwp1'], H, W), approximate=False)
    out_p = _ref_depthwise(pe, p['dwp2'], H, W)
    y = out_c + out_p + xf
    mu = jnp.mean(y, axis=1, keepdims=True)
    var = jnp.mean((y - mu) ** 2, axis=1, keepdims=True)
    yn = (y - mu) / jnp.sqrt(var + 1e-5) * p['ln_g'][None, :, :] + p['ln_b'][None, :, :]
    h1 = jax.nn.gelu(jnp.einsum('oc,bcn->bon', p['w1'], yn), approximate=False)
    h2 = jax.nn.gelu(_ref_depthwise(h1, p['dwf'], H, W), approximate=False)
    ff = jnp.einsum('co,bon->bcn', p['w2'], h2)
    return y + ff


def ref_spectral_ab(x, params, heads, dim_head):
    B, C, H, W = x.shape
    xf = x.reshape(B, C, H * W)
    for p in params:
        xf = _ref_block(xf, p, heads, dim_head, H, W)
    return xf.reshape(B, C, H, W)


# ----------------------------------- main --------------------------------------

def _init_block_params(key, dim, dim_head, heads, mult):
    hd = heads * dim_head
    hid = dim * mult
    ks = jax.random.split(key, 13)
    u = lambda k, shape, s: jax.random.uniform(k, shape, jnp.float32, -s, s)
    return dict(
        wq=u(ks[0], (hd, dim), 1.0 / math.sqrt(dim)),
        wk=u(ks[1], (hd, dim), 1.0 / math.sqrt(dim)),
        wv=u(ks[2], (hd, dim), 1.0 / math.sqrt(dim)),
        rescale=1.0 + 0.25 * jax.random.normal(ks[3], (heads, 1), jnp.float32),
        wp=u(ks[4], (dim, hd), 1.0 / math.sqrt(hd)),
        bp=u(ks[5], (dim, 1), 1.0 / math.sqrt(hd)),
        dwp1=u(ks[6], (dim, 9), 1.0 / 3.0),
        dwp2=u(ks[7], (dim, 9), 1.0 / 3.0),
        ln_g=1.0 + 0.1 * jax.random.normal(ks[8], (dim, 1), jnp.float32),
        ln_b=0.1 * jax.random.normal(ks[9], (dim, 1), jnp.float32),
        w1=u(ks[10], (hid, dim), 1.0 / math.sqrt(dim)),
        dwf=u(ks[11], (hid, 9), 1.0 / 3.0),
        w2=u(ks[12], (dim, hid), 1.0 / math.sqrt(hid)),
    )


if __name__ == "__main__":
    B, DIM, H, W = 2, 4, 16, 16
    HEADS, DIM_HEAD, MULT, NUM_BLOCKS = 2, 2, 4, 2     # heads * dim_head == DIM

    key = jax.random.PRNGKey(0)
    kx, kp = jax.random.split(key)
    x = jax.random.normal(kx, (B, DIM, H, W), jnp.float32)

    params = tuple(
        _init_block_params(jax.random.fold_in(kp, i), DIM, DIM_HEAD, HEADS, MULT)
        for i in range(NUM_BLOCKS))

    out = spectral_ab(x, params, heads=HEADS, dim_head=DIM_HEAD)
    out = jax.block_until_ready(out)

    ref = ref_spectral_ab(x, params, HEADS, DIM_HEAD)
    assert out.shape == (B, DIM, H, W)
    err = float(jnp.max(jnp.abs(out - ref)))
    assert err < 2e-4, f"mismatch vs reference: {err}"
    print("KERNEL_OK")
</pallas_src>

<mosaic_0001>
module attributes {stable_mosaic.version = 11 : i64} {
  func.func @_spectral_kernel(%arg0: i32, %arg1: memref<1x4x256xf32, #tpu.memory_space<vmem>>, %arg2: memref<2x4x54xf32, #tpu.memory_space<vmem>>, %arg3: memref<2x16x13xf32, #tpu.memory_space<vmem>>, %arg4: memref<1x4x256xf32, #tpu.memory_space<vmem>>) attributes {dimension_semantics = [#tpu.dimension_semantics<parallel>], iteration_bounds = array<i64: 2>, scalar_prefetch = 0 : i64, scratch_operands = 0 : i64, tpu.core_type = #tpu.core_type<tc>, window_params = [{transform_indices = @transform_0, window_bounds = array<i64: 1, 4, 256>}, {pipeline_mode = #tpu.pipeline_mode<synchronous>, transform_indices = @transform_1, window_bounds = array<i64: 2, 4, 54>}, {pipeline_mode = #tpu.pipeline_mode<synchronous>, transform_indices = @transform_2, window_bounds = array<i64: 2, 16, 13>}, {transform_indices = @transform_3, window_bounds = array<i64: 1, 4, 256>}]} {
    %c0 = arith.constant 0 : index
    %c0_0 = arith.constant 0 : index
    %c0_1 = arith.constant 0 : index
    %0 = vector.load %arg1[%c0, %c0_0, %c0_1] : memref<1x4x256xf32, #tpu.memory_space<vmem>>, vector<1x4x256xf32>
    %1 = vector.shape_cast %0 : vector<1x4x256xf32> to vector<4x256xf32>
    %2 = tpu.iota {dimensions = array<i32: 1>} : vector<1x256xi32>
    %c16_i32 = arith.constant 16 : i32
    %c0_i32 = arith.constant 0 : i32
    %3 = arith.cmpi eq, %c16_i32, %c0_i32 : i32
    %c1_i32 = arith.constant 1 : i32
    %4 = arith.select %3, %c1_i32, %c16_i32 : i32
    %5 = vector.broadcast %4 : i32 to vector<1x256xi32>
    %6 = arith.remsi %2, %5 : vector<1x256xi32>
    %c0_i32_2 = arith.constant 0 : i32
    %7 = vector.broadcast %c0_i32_2 : i32 to vector<1x256xi32>
    %8 = arith.cmpi ne, %6, %7 : vector<1x256xi32>
    %c0_i32_3 = arith.constant 0 : i32
    %9 = vector.broadcast %c0_i32_3 : i32 to vector<1x256xi32>
    %10 = arith.cmpi slt, %6, %9 : vector<1x256xi32>
    %c0_i32_4 = arith.constant 0 : i32
    %11 = arith.cmpi slt, %4, %c0_i32_4 : i32
    %12 = vector.broadcast %11 : i1 to vector<1x256xi1>
    %13 = vector.broadcast %12 : vector<1x256xi1> to vector<1x256xi1>
    %14 = arith.xori %10, %13 : vector<1x256xi1>
    %15 = arith.andi %14, %8 : vector<1x256xi1>
    %16 = vector.broadcast %4 : i32 to vector<1x256xi32>
    %17 = arith.addi %6, %16 : vector<1x256xi32>
    %18 = arith.select %15, %17, %6 : vector<1x256xi1>, vector<1x256xi32>
    %c1_i32_5 = arith.constant 1 : i32
    %19 = vector.broadcast %c1_i32_5 : i32 to vector<1x256xi32>
    %20 = arith.cmpi sge, %18, %19 : vector<1x256xi32>
    %c14_i32 = arith.constant 14 : i32
    %21 = vector.broadcast %c14_i32 : i32 to vector<1x256xi32>
    %22 = arith.cmpi sle, %18, %21 : vector<1x256xi32>
    %c16_i32_6 = arith.constant 16 : i32
    %23 = vector.broadcast %c16_i32_6 : i32 to vector<1x256xi32>
    %24 = arith.cmpi sge, %2, %23 : vector<1x256xi32>
    %c240_i32 = arith.constant 240 : i32
    %25 = vector.broadcast %c240_i32 : i32 to vector<1x256xi32>
    %26 = arith.cmpi slt, %2, %25 : vector<1x256xi32>
    %27 = arith.andi %24, %20 : vector<1x256xi1>
    %28 = arith.andi %24, %22 : vector<1x256xi1>
    %29 = arith.andi %26, %20 : vector<1x256xi1>
    %30 = arith.andi %26, %22 : vector<1x256xi1>
    %c0_7 = arith.constant 0 : index
    %c0_8 = arith.constant 0 : index
    %c0_9 = arith.constant 0 : index
    %31 = vector.load %arg2[%c0_7, %c0_8, %c0_9] : memref<2x4x54xf32, #tpu.memory_space<vmem>>, vector<1x4x4xf32>
    %32 = vector.shape_cast %31 : vector<1x4x4xf32> to vector<4x4xf32>
    %c0_10 = arith.constant 0 : index
    %c0_11 = arith.constant 0 : index
    %c4 = arith.constant 4 : index
    %33 = vector.load %arg2[%c0_10, %c0_11, %c4] : memref<2x4x54xf32, #tpu.memory_space<vmem>>, vector<1x4x4xf32>
    %34 = vector.shape_cast %33 : vector<1x4x4xf32> to vector<4x4xf32>
    %c0_12 = arith.constant 0 : index
    %c0_13 = arith.constant 0 : index
    %c8 = arith.constant 8 : index
    %35 = vector.load %arg2[%c0_12, %c0_13, %c8] : memref<2x4x54xf32, #tpu.memory_space<vmem>>, vector<1x4x4xf32>
    %36 = vector.shape_cast %35 : vector<1x4x4xf32> to vector<4x4xf32>
    %c0_14 = arith.constant 0 : index
    %c0_15 = arith.constant 0 : index
    %c12 = arith.constant 12 : index
    %37 = vector.load %arg2[%c0_14, %c0_15, %c12] : memref<2x4x54xf32, #tpu.memory_space<vmem>>, vector<1x4x4xf32>
    %38 = vector.shape_cast %37 : vector<1x4x4xf32> to vector<4x4xf32>
    %c0_16 = arith.constant 0 : index
    %c0_17 = arith.constant 0 : index
    %c16 = arith.constant 16 : index
    %39 = vector.load %arg2[%c0_16, %c0_17, %c16] : memref<2x4x54xf32, #tpu.memory_space<vmem>>, vector<1x4x1xf32>
    %40 = vector.shape_cast %39 : vector<1x4x1xf32> to vector<4x1xf32>
    %c0_18 = arith.constant 0 : index
    %c0_19 = arith.constant 0 : index
    %c17 = arith.constant 17 : index
    %41 = vector.load %arg2[%c0_18, %c0_19, %c17] : memref<2x4x54xf32, #tpu.memory_space<vmem>>, vector<1x4x9xf32>
    %42 = vector.shape_cast %41 : vector<1x4x9xf32> to vector<4x9xf32>
    %c0_20 = arith.constant 0 : index
    %c0_21 = arith.constant 0 : index
    %c26 = arith.constant 26 : index
    %43 = vector.load %arg2[%c0_20, %c0_21, %c26] : memref<2x4x54xf32, #tpu.memory_space<vmem>>, vector<1x4x9xf32>
    %44 = vector.shape_cast %43 : vector<1x4x9xf32> to vector<4x9xf32>
    %c0_22 = arith.constant 0 : index
    %c0_23 = arith.constant 0 : index
    %c35 = arith.constant 35 : index
    %45 = vector.load %arg2[%c0_22, %c0_23, %c35] : memref<2x4x54xf32, #tpu.memory_space<vmem>>, vector<1x4x1xf32>
    %46 = vector.shape_cast %45 : vector<1x4x1xf32> to vector<4x1xf32>
    %c0_24 = arith.constant 0 : index
    %c0_25 = arith.constant 0 : index
    %c36 = arith.constant 36 : index
    %47 = vector.load %arg2[%c0_24, %c0_25, %c36] : memref<2x4x54xf32, #tpu.memory_space<vmem>>, vector<1x4x1xf32>
    %48 = vector.shape_cast %47 : vector<1x4x1xf32> to vector<4x1xf32>
    %c0_26 = arith.constant 0 : index
    %c0_27 = arith.constant 0 : index
    %c37 = arith.constant 37 : index
    %49 = vector.load %arg2[%c0_26, %c0_27, %c37] : memref<2x4x54xf32, #tpu.memory_space<vmem>>, vector<1x4x16xf32>
    %50 = vector.shape_cast %49 : vector<1x4x16xf32> to vector<4x16xf32>
    %c0_28 = arith.constant 0 : index
    %c0_29 = arith.constant 0 : index
    %c53 = arith.constant 53 : index
    %51 = vector.load %arg2[%c0_28, %c0_29, %c53] : memref<2x4x54xf32, #tpu.memory_space<vmem>>, vector<1x2x1xf32>
    %52 = vector.shape_cast %51 : vector<1x2x1xf32> to vector<2x1xf32>
    %c0_30 = arith.constant 0 : index
    %c0_31 = arith.constant 0 : index
    %c0_32 = arith.constant 0 : index
    %53 = vector.load %arg3[%c0_30, %c0_31, %c0_32] : memref<2x16x13xf32, #tpu.memory_space<vmem>>, vector<1x16x4xf32>
    %54 = vector.shape_cast %53 : vector<1x16x4xf32> to vector<16x4xf32>
    %c0_33 = arith.constant 0 : index
    %c0_34 = arith.constant 0 : index
    %c4_35 = arith.constant 4 : index
    %55 = vector.load %arg3[%c0_33, %c0_34, %c4_35] : memref<2x16x13xf32, #tpu.memory_space<vmem>>, vector<1x16x9xf32>
    %56 = vector.shape_cast %55 : vector<1x16x9xf32> to vector<16x9xf32>
    %57 = vector.extract_strided_slice %32 {offsets = [0, 0], sizes = [4, 1], strides = [1, 1]} : vector<4x4xf32> to vector<4x1xf32>
    %58 = vector.extract_strided_slice %1 {offsets = [0, 0], sizes = [1, 256], strides = [1, 1]} : vector<4x256xf32> to vector<1x256xf32>
    %59 = vector.broadcast %57 : vector<4x1xf32> to vector<4x256xf32>
    %60 = vector.broadcast %58 : vector<1x256xf32> to vector<4x256xf32>
    %61 = arith.mulf %59, %60 : vector<4x256xf32>
    %62 = vector.extract_strided_slice %32 {offsets = [0, 1], sizes = [4, 1], strides = [1, 1]} : vector<4x4xf32> to vector<4x1xf32>
    %63 = vector.extract_strided_slice %1 {offsets = [1, 0], sizes = [1, 256], strides = [1, 1]} : vector<4x256xf32> to vector<1x256xf32>
    %64 = vector.broadcast %62 : vector<4x1xf32> to vector<4x256xf32>
    %65 = vector.broadcast %63 : vector<1x256xf32> to vector<4x256xf32>
    %66 = arith.mulf %64, %65 : vector<4x256xf32>
    %67 = arith.addf %61, %66 : vector<4x256xf32>
    %68 = vector.extract_strided_slice %32 {offsets = [0, 2], sizes = [4, 1], strides = [1, 1]} : vector<4x4xf32> to vector<4x1xf32>
    %69 = vector.extract_strided_slice %1 {offsets = [2, 0], sizes = [1, 256], strides = [1, 1]} : vector<4x256xf32> to vector<1x256xf32>
    %70 = vector.broadcast %68 : vector<4x1xf32> to vector<4x256xf32>
    %71 = vector.broadcast %69 : vector<1x256xf32> to vector<4x256xf32>
    %72 = arith.mulf %70, %71 : vector<4x256xf32>
    %73 = arith.addf %67, %72 : vector<4x256xf32>
    %74 = vector.extract_strided_slice %32 {offsets = [0, 3], sizes = [4, 1], strides = [1, 1]} : vector<4x4xf32> to vector<4x1xf32>
    %75 = vector.extract_strided_slice %1 {offsets = [3, 0], sizes = [1, 256], strides = [1, 1]} : vector<4x256xf32> to vector<1x256xf32>
    %76 = vector.broadcast %74 : vector<4x1xf32> to vector<4x256xf32>
    %77 = vector.broadcast %75 : vector<1x256xf32> to vector<4x256xf32>
    %78 = arith.mulf %76, %77 : vector<4x256xf32>
    %79 = arith.addf %73, %78 : vector<4x256xf32>
    %80 = vector.extract_strided_slice %34 {offsets = [0, 0], sizes = [4, 1], strides = [1, 1]} : vector<4x4xf32> to vector<4x1xf32>
    %81 = vector.extract_strided_slice %1 {offsets = [0, 0], sizes = [1, 256], strides = [1, 1]} : vector<4x256xf32> to vector<1x256xf32>
    %82 = vector.broadcast %80 : vector<4x1xf32> to vector<4x256xf32>
    %83 = vector.broadcast %81 : vector<1x256xf32> to vector<4x256xf32>
    %84 = arith.mulf %82, %83 : vector<4x256xf32>
    %85 = vector.extract_strided_slice %34 {offsets = [0, 1], sizes = [4, 1], strides = [1, 1]} : vector<4x4xf32> to vector<4x1xf32>
    %86 = vector.extract_strided_slice %1 {offsets = [1, 0], sizes = [1, 256], strides = [1, 1]} : vector<4x256xf32> to vector<1x256xf32>
    %87 = vector.broadcast %85 : vector<4x1xf32> to vector<4x256xf32>
    %88 = vector.broadcast %86 : vector<1x256xf32> to vector<4x256xf32>
    %89 = arith.mulf %87, %88 : vector<4x256xf32>
    %90 = arith.addf %84, %89 : vector<4x256xf32>
    %91 = vector.extract_strided_slice %34 {offsets = [0, 2], sizes = [4, 1], strides = [1, 1]} : vector<4x4xf32> to vector<4x1xf32>
    %92 = vector.extract_strided_slice %1 {offsets = [2, 0], sizes = [1, 256], strides = [1, 1]} : vector<4x256xf32> to vector<1x256xf32>
    %93 = vector.broadcast %91 : vector<4x1xf32> to vector<4x256xf32>
    %94 = vector.broadcast %92 : vector<1x256xf32> to vector<4x256xf32>
    %95 = arith.mulf %93, %94 : vector<4x256xf32>
    %96 = arith.addf %90, %95 : vector<4x256xf32>
    %97 = vector.extract_strided_slice %34 {offsets = [0, 3], sizes = [4, 1], strides = [1, 1]} : vector<4x4xf32> to vector<4x1xf32>
    %98 = vector.extract_strided_slice %1 {offsets = [3, 0], sizes = [1, 256], strides = [1, 1]} : vector<4x256xf32> to vector<1x256xf32>
    %99 = vector.broadcast %97 : vector<4x1xf32> to vector<4x256xf32>
    %100 = vector.broadcast %98 : vector<1x256xf32> to vector<4x256xf32>
    %101 = arith.mulf %99, %100 : vector<4x256xf32>
    %102 = arith.addf %96, %101 : vector<4x256xf32>
    %103 = vector.extract_strided_slice %36 {offsets = [0, 0], sizes = [4, 1], strides = [1, 1]} : vector<4x4xf32> to vector<4x1xf32>
    %104 = vector.extract_strided_slice %1 {offsets = [0, 0], sizes = [1, 256], strides = [1, 1]} : vector<4x256xf32> to vector<1x256xf32>
    %105 = vector.broadcast %103 : vector<4x1xf32> to vector<4x256xf32>
    %106 = vector.broadcast %104 : vector<1x256xf32> to vector<4x256xf32>
    %107 = arith.mulf %105, %106 : vector<4x256xf32>
    %108 = vector.extract_strided_slice %36 {offsets = [0, 1], sizes = [4, 1], strides = [1, 1]} : vector<4x4xf32> to vector<4x1xf32>
    %109 = vector.extract_strided_slice %1 {offsets = [1, 0], sizes = [1, 256], strides = [1, 1]} : vector<4x256xf32> to vector<1x256xf32>
    %110 = vector.broadcast %108 : vector<4x1xf32> to vector<4x256xf32>
    %111 = vector.broadcast %109 : vector<1x256xf32> to vector<4x256xf32>
    %112 = arith.mulf %110, %111 : vector<4x256xf32>
    %113 = arith.addf %107, %112 : vector<4x256xf32>
    %114 = vector.extract_strided_slice %36 {offsets = [0, 2], sizes = [4, 1], strides = [1, 1]} : vector<4x4xf32> to vector<4x1xf32>
    %115 = vector.extract_strided_slice %1 {offsets = [2, 0], sizes = [1, 256], strides = [1, 1]} : vector<4x256xf32> to vector<1x256xf32>
    %116 = vector.broadcast %114 : vector<4x1xf32> to vector<4x256xf32>
    %117 = vector.broadcast %115 : vector<1x256xf32> to vector<4x256xf32>
    %118 = arith.mulf %116, %117 : vector<4x256xf32>
    %119 = arith.addf %113, %118 : vector<4x256xf32>
    %120 = vector.extract_strided_slice %36 {offsets = [0, 3], sizes = [4, 1], strides = [1, 1]} : vector<4x4xf32> to vector<4x1xf32>
    %121 = vector.extract_strided_slice %1 {offsets = [3, 0], sizes = [1, 256], strides = [1, 1]} : vector<4x256xf32> to vector<1x256xf32>
    %122 = vector.broadcast %120 : vector<4x1xf32> to vector<4x256xf32>
    %123 = vector.broadcast %121 : vector<1x256xf32> to vector<4x256xf32>
    %124 = arith.mulf %122, %123 : vector<4x256xf32>
    %125 = arith.addf %119, %124 : vector<4x256xf32>
    %126 = arith.mulf %79, %79 : vector<4x256xf32>
    %cst = arith.constant dense<0.000000e+00> : vector<4xf32>
    %127 = vector.multi_reduction <add>, %126, %cst [1] : vector<4x256xf32> to vector<4xf32>
    %128 = vector.shape_cast %127 : vector<4xf32> to vector<4x1xf32>
    %cst_36 = arith.constant 1.000000e-24 : f32
    %129 = vector.broadcast %cst_36 : f32 to vector<4x1xf32>
    %130 = arith.maximumf %128, %129 : vector<4x1xf32>
    %131 = math.rsqrt %130 : vector<4x1xf32>
    %132 = vector.broadcast %131 : vector<4x1xf32> to vector<4x256xf32>
    %133 = arith.mulf %79, %132 : vector<4x256xf32>
    %134 = arith.mulf %102, %102 : vector<4x256xf32>
    %cst_37 = arith.constant dense<0.000000e+00> : vector<4xf32>
    %135 = vector.multi_reduction <add>, %134, %cst_37 [1] : vector<4x256xf32> to vector<4xf32>
    %136 = vector.shape_cast %135 : vector<4xf32> to vector<4x1xf32>
    %cst_38 = arith.constant 1.000000e-24 : f32
    %137 = vector.broadcast %cst_38 : f32 to vector<4x1xf32>
    %138 = arith.maximumf %136, %137 : vector<4x1xf32>
    %139 = math.rsqrt %138 : vector<4x1xf32>
    %140 = vector.broadcast %139 : vector<4x1xf32> to vector<4x256xf32>
    %141 = arith.mulf %102, %140 : vector<4x256xf32>
    %cst_39 = arith.constant 0.000000e+00 : f32
    %142 = vector.broadcast %cst_39 : f32 to vector<4x256xf32>
    %143 = vector.extract_strided_slice %133 {offsets = [0, 0], sizes = [2, 256], strides = [1, 1]} : vector<4x256xf32> to vector<2x256xf32>
    %144 = vector.extract_strided_slice %141 {offsets = [0, 0], sizes = [2, 256], strides = [1, 1]} : vector<4x256xf32> to vector<2x256xf32>
    %145 = vector.extract_strided_slice %125 {offsets = [0, 0], sizes = [2, 256], strides = [1, 1]} : vector<4x256xf32> to vector<2x256xf32>
    %146 = vector.extract_strided_slice %52 {offsets = [0, 0], sizes = [1, 1], strides = [1, 1]} : vector<2x1xf32> to vector<1x1xf32>
    %147 = vector.extract_strided_slice %144 {offsets = [0, 0], sizes = [1, 256], strides = [1, 1]} : vector<2x256xf32> to vector<1x256xf32>
    %148 = vector.broadcast %147 : vector<1x256xf32> to vector<2x256xf32>
    %149 = arith.mulf %148, %143 : vector<2x256xf32>
    %cst_40 = arith.constant dense<0.000000e+00> : vector<2xf32>
    %150 = vector.multi_reduction <add>, %149, %cst_40 [1] : vector<2x256xf32> to vector<2xf32>
    %151 = vector.shape_cast %150 : vector<2xf32> to vector<2x1xf32>
    %152 = vector.broadcast %146 : vector<1x1xf32> to vector<2x1xf32>
    %153 = arith.mulf %151, %152 : vector<2x1xf32>
    %cst_41 = arith.constant dense<0xFF800000> : vector<1xf32>
    %154 = vector.multi_reduction <maximumf>, %153, %cst_41 [0] : vector<2x1xf32> to vector<1xf32>
    %155 = vector.shape_cast %154 : vector<1xf32> to vector<1x1xf32>
    %156 = vector.broadcast %155 : vector<1x1xf32> to vector<2x1xf32>
    %157 = arith.subf %153, %156 : vector<2x1xf32>
    %158 = math.exp %157 : vector<2x1xf32>
    %cst_42 = arith.constant dense<0.000000e+00> : vector<1xf32>
    %159 = vector.multi_reduction <add>, %158, %cst_42 [0] : vector<2x1xf32> to vector<1xf32>
    %160 = vector.shape_cast %159 : vector<1xf32> to vector<1x1xf32>
    %161 = vector.broadcast %160 : vector<1x1xf32> to vector<2x1xf32>
    %162 = arith.divf %158, %161 : vector<2x1xf32>
    %163 = vector.extract_strided_slice %162 {offsets = [0, 0], sizes = [1, 1], strides = [1, 1]} : vector<2x1xf32> to vector<1x1xf32>
    %164 = vector.extract_strided_slice %145 {offsets = [0, 0], sizes = [1, 256], strides = [1, 1]} : vector<2x256xf32> to vector<1x256xf32>
    %165 = vector.broadcast %163 : vector<1x1xf32> to vector<1x256xf32>
    %166 = arith.mulf %165, %164 : vector<1x256xf32>
    %167 = vector.extract_strided_slice %162 {offsets = [1, 0], sizes = [1, 1], strides = [1, 1]} : vector<2x1xf32> to vector<1x1xf32>
    %168 = vector.extract_strided_slice %145 {offsets = [1, 0], sizes = [1, 256], strides = [1, 1]} : vector<2x256xf32> to vector<1x256xf32>
    %169 = vector.broadcast %167 : vector<1x1xf32> to vector<1x256xf32>
    %170 = arith.mulf %169, %168 : vector<1x256xf32>
    %171 = arith.addf %166, %170 : vector<1x256xf32>
    %172 = vector.extract_strided_slice %38 {offsets = [0, 0], sizes = [4, 1], strides = [1, 1]} : vector<4x4xf32> to vector<4x1xf32>
    %173 = vector.broadcast %172 : vector<4x1xf32> to vector<4x256xf32>
    %174 = vector.broadcast %171 : vector<1x256xf32> to vector<4x256xf32>
    %175 = arith.mulf %173, %174 : vector<4x256xf32>
    %176 = arith.addf %142, %175 : vector<4x256xf32>
    %177 = vector.extract_strided_slice %144 {offsets = [1, 0], sizes = [1, 256], strides = [1, 1]} : vector<2x256xf32> to vector<1x256xf32>
    %178 = vector.broadcast %177 : vector<1x256xf32> to vector<2x256xf32>
    %179 = arith.mulf %178, %143 : vector<2x256xf32>
    %cst_43 = arith.constant dense<0.000000e+00> : vector<2xf32>
    %180 = vector.multi_reduction <add>, %179, %cst_43 [1] : vector<2x256xf32> to vector<2xf32>
    %181 = vector.shape_cast %180 : vector<2xf32> to vector<2x1xf32>
    %182 = vector.broadcast %146 : vector<1x1xf32> to vector<2x1xf32>
    %183 = arith.mulf %181, %182 : vector<2x1xf32>
    %cst_44 = arith.constant dense<0xFF800000> : vector<1xf32>
    %184 = vector.multi_reduction <maximumf>, %183, %cst_44 [0] : vector<2x1xf32> to vector<1xf32>
    %185 = vector.shape_cast %184 : vector<1xf32> to vector<1x1xf32>
    %186 = vector.broadcast %185 : vector<1x1xf32> to vector<2x1xf32>
    %187 = arith.subf %183, %186 : vector<2x1xf32>
    %188 = math.exp %187 : vector<2x1xf32>
    %cst_45 = arith.constant dense<0.000000e+00> : vector<1xf32>
    %189 = vector.multi_reduction <add>, %188, %cst_45 [0] : vector<2x1xf32> to vector<1xf32>
    %190 = vector.shape_cast %189 : vector<1xf32> to vector<1x1xf32>
    %191 = vector.broadcast %190 : vector<1x1xf32> to vector<2x1xf32>
    %192 = arith.divf %188, %191 : vector<2x1xf32>
    %193 = vector.extract_strided_slice %192 {offsets = [0, 0], sizes = [1, 1], strides = [1, 1]} : vector<2x1xf32> to vector<1x1xf32>
    %194 = vector.extract_strided_slice %145 {offsets = [0, 0], sizes = [1, 256], strides = [1, 1]} : vector<2x256xf32> to vector<1x256xf32>
    %195 = vector.broadcast %193 : vector<1x1xf32> to vector<1x256xf32>
    %196 = arith.mulf %195, %194 : vector<1x256xf32>
    %197 = vector.extract_strided_slice %192 {offsets = [1, 0], sizes = [1, 1], strides = [1, 1]} : vector<2x1xf32> to vector<1x1xf32>
    %198 = vector.extract_strided_slice %145 {offsets = [1, 0], sizes = [1, 256], strides = [1, 1]} : vector<2x256xf32> to vector<1x256xf32>
    %199 = vector.broadcast %197 : vector<1x1xf32> to vector<1x256xf32>
    %200 = arith.mulf %199, %198 : vector<1x256xf32>
    %201 = arith.addf %196, %200 : vector<1x256xf32>
    %202 = vector.extract_strided_slice %38 {offsets = [0, 1], sizes = [4, 1], strides = [1, 1]} : vector<4x4xf32> to vector<4x1xf32>
    %203 = vector.broadcast %202 : vector<4x1xf32> to vector<4x256xf32>
    %204 = vector.broadcast %201 : vector<1x256xf32> to vector<4x256xf32>
    %205 = arith.mulf %203, %204 : vector<4x256xf32>
    %206 = arith.addf %176, %205 : vector<4x256xf32>
    %207 = vector.extract_strided_slice %133 {offsets = [2, 0], sizes = [2, 256], strides = [1, 1]} : vector<4x256xf32> to vector<2x256xf32>
    %208 = vector.extract_strided_slice %141 {offsets = [2, 0], sizes = [2, 256], strides = [1, 1]} : vector<4x256xf32> to vector<2x256xf32>
    %209 = vector.extract_strided_slice %125 {offsets = [2, 0], sizes = [2, 256], strides = [1, 1]} : vector<4x256xf32> to vector<2x256xf32>
    %210 = vector.extract_strided_slice %52 {offsets = [1, 0], sizes = [1, 1], strides = [1, 1]} : vector<2x1xf32> to vector<1x1xf32>
    %211 = vector.extract_strided_slice %208 {offsets = [0, 0], sizes = [1, 256], strides = [1, 1]} : vector<2x256xf32> to vector<1x256xf32>
    %212 = vector.broadcast %211 : vector<1x256xf32> to vector<2x256xf32>
    %213 = arith.mulf %212, %207 : vector<2x256xf32>
    %cst_46 = arith.constant dense<0.000000e+00> : vector<2xf32>
    %214 = vector.multi_reduction <add>, %213, %cst_46 [1] : vector<2x256xf32> to vector<2xf32>
    %215 = vector.shape_cast %214 : vector<2xf32> to vector<2x1xf32>
    %216 = vector.broadcast %210 : vector<1x1xf32> to vector<2x1xf32>
    %217 = arith.mulf %215, %216 : vector<2x1xf32>
    %cst_47 = arith.constant dense<0xFF800000> : vector<1xf32>
    %218 = vector.multi_reduction <maximumf>, %217, %cst_47 [0] : vector<2x1xf32> to vector<1xf32>
    %219 = vector.shape_cast %218 : vector<1xf32> to vector<1x1xf32>
    %220 = vector.broadcast %219 : vector<1x1xf32> to vector<2x1xf32>
    %221 = arith.subf %217, %220 : vector<2x1xf32>
    %222 = math.exp %221 : vector<2x1xf32>
    %cst_48 = arith.constant dense<0.000000e+00> : vector<1xf32>
    %223 = vector.multi_reduction <add>, %222, %cst_48 [0] : vector<2x1xf32> to vector<1xf32>
    %224 = vector.shape_cast %223 : vector<1xf32> to vector<1x1xf32>
    %225 = vector.broadcast %224 : vector<1x1xf32> to vector<2x1xf32>
    %226 = arith.divf %222, %225 : vector<2x1xf32>
    %227 = vector.extract_strided_slice %226 {offsets = [0, 0], sizes = [1, 1], strides = [1, 1]} : vector<2x1xf32> to vector<1x1xf32>
    %228 = vector.extract_strided_slice %209 {offsets = [0, 0], sizes = [1, 256], strides = [1, 1]} : vector<2x256xf32> to vector<1x256xf32>
    %229 = vector.broadcast %227 : vector<1x1xf32> to vector<1x256xf32>
    %230 = arith.mulf %229, %228 : vector<1x256xf32>
    %231 = vector.extract_strided_slice %226 {offsets = [1, 0], sizes = [1, 1], strides = [1, 1]} : vector<2x1xf32> to vector<1x1xf32>
    %232 = vector.extract_strided_slice %209 {offsets = [1, 0], sizes = [1, 256], strides = [1, 1]} : vector<2x256xf32> to vector<1x256xf32>
    %233 = vector.broadcast %231 : vector<1x1xf32> to vector<1x256xf32>
    %234 = arith.mulf %233, %232 : vector<1x256xf32>
    %235 = arith.addf %230, %234 : vector<1x256xf32>
    %236 = vector.extract_strided_slice %38 {offsets = [0, 2], sizes = [4, 1], strides = [1, 1]} : vector<4x4xf32> to vector<4x1xf32>
    %237 = vector.broadcast %236 : vector<4x1xf32> to vector<4x256xf32>
    %238 = vector.broadcast %235 : vector<1x256xf32> to vector<4x256xf32>
    %239 = arith.mulf %237, %238 : vector<4x256xf32>
    %240 = arith.addf %206, %239 : vector<4x256xf32>
    %241 = vector.extract_strided_slice %208 {offsets = [1, 0], sizes = [1, 256], strides = [1, 1]} : vector<2x256xf32> to vector<1x256xf32>
    %242 = vector.broadcast %241 : vector<1x256xf32> to vector<2x256xf32>
    %243 = arith.mulf %242, %207 : vector<2x256xf32>
    %cst_49 = arith.constant dense<0.000000e+00> : vector<2xf32>
    %244 = vector.multi_reduction <add>, %243, %cst_49 [1] : vector<2x256xf32> to vector<2xf32>
    %245 = vector.shape_cast %244 : vector<2xf32> to vector<2x1xf32>
    %246 = vector.broadcast %210 : vector<1x1xf32> to vector<2x1xf32>
    %247 = arith.mulf %245, %246 : vector<2x1xf32>
    %cst_50 = arith.constant dense<0xFF800000> : vector<1xf32>
    %248 = vector.multi_reduction <maximumf>, %247, %cst_50 [0] : vector<2x1xf32> to vector<1xf32>
    %249 = vector.shape_cast %248 : vector<1xf32> to vector<1x1xf32>
    %250 = vector.broadcast %249 : vector<1x1xf32> to vector<2x1xf32>
    %251 = arith.subf %247, %250 : vector<2x1xf32>
    %252 = math.exp %251 : vector<2x1xf32>
    %cst_51 = arith.constant dense<0.000000e+00> : vector<1xf32>
    %253 = vector.multi_reduction <add>, %252, %cst_51 [0] : vector<2x1xf32> to vector<1xf32>
    %254 = vector.shape_cast %253 : vector<1xf32> to vector<1x1xf32>
    %255 = vector.broadcast %254 : vector<1x1xf32> to vector<2x1xf32>
    %256 = arith.divf %252, %255 : vector<2x1xf32>
    %257 = vector.extract_strided_slice %256 {offsets = [0, 0], sizes = [1, 1], strides = [1, 1]} : vector<2x1xf32> to vector<1x1xf32>
    %258 = vector.extract_strided_slice %209 {offsets = [0, 0], sizes = [1, 256], strides = [1, 1]} : vector<2x256xf32> to vector<1x256xf32>
    %259 = vector.broadcast %257 : vector<1x1xf32> to vector<1x256xf32>
    %260 = arith.mulf %259, %258 : vector<1x256xf32>
    %261 = vector.extract_strided_slice %256 {offsets = [1, 0], sizes = [1, 1], strides = [1, 1]} : vector<2x1xf32> to vector<1x1xf32>
    %262 = vector.extract_strided_slice %209 {offsets = [1, 0], sizes = [1, 256], strides = [1, 1]} : vector<2x256xf32> to vector<1x256xf32>
    %263 = vector.broadcast %261 : vector<1x1xf32> to vector<1x256xf32>
    %264 = arith.mulf %263, %262 : vector<1x256xf32>
    %265 = arith.addf %260, %264 : vector<1x256xf32>
    %266 = vector.extract_strided_slice %38 {offsets = [0, 3], sizes = [4, 1], strides = [1, 1]} : vector<4x4xf32> to vector<4x1xf32>
    %267 = vector.broadcast %266 : vector<4x1xf32> to vector<4x256xf32>
    %268 = vector.broadcast %265 : vector<1x256xf32> to vector<4x256xf32>
    %269 = arith.mulf %267, %268 : vector<4x256xf32>
    %270 = arith.addf %240, %269 : vector<4x256xf32>
    %271 = vector.broadcast %40 : vector<4x1xf32> to vector<4x256xf32>
    %272 = arith.addf %270, %271 : vector<4x256xf32>
    %273 = vector.extract_strided_slice %42 {offsets = [0, 4], sizes = [4, 1], strides = [1, 1]} : vector<4x9xf32> to vector<4x1xf32>
    %274 = vector.broadcast %273 : vector<4x1xf32> to vector<4x256xf32>
    %275 = arith.mulf %274, %125 : vector<4x256xf32>
    %c17_i32 = arith.constant 17 : i32
    %276 = tpu.dynamic_rotate %125 by %c17_i32 dim 1 : vector<4x256xf32>, i32 -> vector<4x256xf32>
    %cst_52 = arith.constant 0.000000e+00 : f32
    %277 = vector.shape_cast %27 : vector<1x256xi1> to vector<1x256xi1>
    %278 = vector.broadcast %277 : vector<1x256xi1> to vector<4x256xi1>
    %279 = vector.broadcast %cst_52 : f32 to vector<4x256xf32>
    %280 = arith.select %278, %276, %279 : vector<4x256xi1>, vector<4x256xf32>
    %281 = vector.extract_strided_slice %42 {offsets = [0, 0], sizes = [4, 1], strides = [1, 1]} : vector<4x9xf32> to vector<4x1xf32>
    %282 = vector.broadcast %281 : vector<4x1xf32> to vector<4x256xf32>
    %283 = arith.mulf %282, %280 : vector<4x256xf32>
    %284 = arith.addf %275, %283 : vector<4x256xf32>
    %c16_i32_53 = arith.constant 16 : i32
    %285 = tpu.dynamic_rotate %125 by %c16_i32_53 dim 1 : vector<4x256xf32>, i32 -> vector<4x256xf32>
    %cst_54 = arith.constant 0.000000e+00 : f32
    %286 = vector.shape_cast %24 : vector<1x256xi1> to vector<1x256xi1>
    %287 = vector.broadcast %286 : vector<1x256xi1> to vector<4x256xi1>
    %288 = vector.broadcast %cst_54 : f32 to vector<4x256xf32>
    %289 = arith.select %287, %285, %288 : vector<4x256xi1>, vector<4x256xf32>
    %290 = vector.extract_strided_slice %42 {offsets = [0, 1], sizes = [4, 1], strides = [1, 1]} : vector<4x9xf32> to vector<4x1xf32>
    %291 = vector.broadcast %290 : vector<4x1xf32> to vector<4x256xf32>
    %292 = arith.mulf %291, %289 : vector<4x256xf32>
    %293 = arith.addf %284, %292 : vector<4x256xf32>
    %c15_i32 = arith.constant 15 : i32
    %294 = tpu.dynamic_rotate %125 by %c15_i32 dim 1 : vector<4x256xf32>, i32 -> vector<4x256xf32>
    %cst_55 = arith.constant 0.000000e+00 : f32
    %295 = vector.shape_cast %28 : vector<1x256xi1> to vector<1x256xi1>
    %296 = vector.broadcast %295 : vector<1x256xi1> to vector<4x256xi1>
    %297 = vector.broadcast %cst_55 : f32 to vector<4x256xf32>
    %298 = arith.select %296, %294, %297 : vector<4x256xi1>, vector<4x256xf32>
    %299 = vector.extract_strided_slice %42 {offsets = [0, 2], sizes = [4, 1], strides = [1, 1]} : vector<4x9xf32> to vector<4x1xf32>
    %300 = vector.broadcast %299 : vector<4x1xf32> to vector<4x256xf32>
    %301 = arith.mulf %300, %298 : vector<4x256xf32>
    %302 = arith.addf %293, %301 : vector<4x256xf32>
    %c1_i32_56 = arith.constant 1 : i32
    %303 = tpu.dynamic_rotate %125 by %c1_i32_56 dim 1 : vector<4x256xf32>, i32 -> vector<4x256xf32>
    %cst_57 = arith.constant 0.000000e+00 : f32
    %304 = vector.shape_cast %20 : vector<1x256xi1> to vector<1x256xi1>
    %305 = vector.broadcast %304 : vector<1x256xi1> to vector<4x256xi1>
    %306 = vector.broadcast %cst_57 : f32 to vector<4x256xf32>
    %307 = arith.select %305, %303, %306 : vector<4x256xi1>, vector<4x256xf32>
    %308 = vector.extract_strided_slice %42 {offsets = [0, 3], sizes = [4, 1], strides = [1, 1]} : vector<4x9xf32> to vector<4x1xf32>
    %309 = vector.broadcast %308 : vector<4x1xf32> to vector<4x256xf32>
    %310 = arith.mulf %309, %307 : vector<4x256xf32>
    %311 = arith.addf %302, %310 : vector<4x256xf32>
    %c255_i32 = arith.constant 255 : i32
    %312 = tpu.dynamic_rotate %125 by %c255_i32 dim 1 : vector<4x256xf32>, i32 -> vector<4x256xf32>
    %cst_58 = arith.constant 0.000000e+00 : f32
    %313 = vector.shape_cast %22 : vector<1x256xi1> to vector<1x256xi1>
    %314 = vector.broadcast %313 : vector<1x256xi1> to vector<4x256xi1>
    %315 = vector.broadcast %cst_58 : f32 to vector<4x256xf32>
    %316 = arith.select %314, %312, %315 : vector<4x256xi1>, vector<4x256xf32>
    %317 = vector.extract_strided_slice %42 {offsets = [0, 5], sizes = [4, 1], strides = [1, 1]} : vector<4x9xf32> to vector<4x1xf32>
    %318 = vector.broadcast %317 : vector<4x1xf32> to vector<4x256xf32>
    %319 = arith.mulf %318, %316 : vector<4x256xf32>
    %320 = arith.addf %311, %319 : vector<4x256xf32>
    %c241_i32 = arith.constant 241 : i32
    %321 = tpu.dynamic_rotate %125 by %c241_i32 dim 1 : vector<4x256xf32>, i32 -> vector<4x256xf32>
    %cst_59 = arith.constant 0.000000e+00 : f32
    %322 = vector.shape_cast %29 : vector<1x256xi1> to vector<1x256xi1>
    %323 = vector.broadcast %322 : vector<1x256xi1> to vector<4x256xi1>
    %324 = vector.broadcast %cst_59 : f32 to vector<4x256xf32>
    %325 = arith.select %323, %321, %324 : vector<4x256xi1>, vector<4x256xf32>
    %326 = vector.extract_strided_slice %42 {offsets = [0, 6], sizes = [4, 1], strides = [1, 1]} : vector<4x9xf32> to vector<4x1xf32>
    %327 = vector.broadcast %326 : vector<4x1xf32> to vector<4x256xf32>
    %328 = arith.mulf %327, %325 : vector<4x256xf32>
    %329 = arith.addf %320, %328 : vector<4x256xf32>
    %c240_i32_60 = arith.constant 240 : i32
    %330 = tpu.dynamic_rotate %125 by %c240_i32_60 dim 1 : vector<4x256xf32>, i32 -> vector<4x256xf32>
    %cst_61 = arith.constant 0.000000e+00 : f32
    %331 = vector.shape_cast %26 : vector<1x256xi1> to vector<1x256xi1>
    %332 = vector.broadcast %331 : vector<1x256xi1> to vector<4x256xi1>
    %333 = vector.broadcast %cst_61 : f32 to vector<4x256xf32>
    %334 = arith.select %332, %330, %333 : vector<4x256xi1>, vector<4x256xf32>
    %335 = vector.extract_strided_slice %42 {offsets = [0, 7], sizes = [4, 1], strides = [1, 1]} : vector<4x9xf32> to vector<4x1xf32>
    %336 = vector.broadcast %335 : vector<4x1xf32> to vector<4x256xf32>
    %337 = arith.mulf %336, %334 : vector<4x256xf32>
    %338 = arith.addf %329, %337 : vector<4x256xf32>
    %c239_i32 = arith.constant 239 : i32
    %339 = tpu.dynamic_rotate %125 by %c239_i32 dim 1 : vector<4x256xf32>, i32 -> vector<4x256xf32>
    %cst_62 = arith.constant 0.000000e+00 : f32
    %340 = vector.shape_cast %30 : vector<1x256xi1> to vector<1x256xi1>
    %341 = vector.broadcast %340 : vector<1x256xi1> to vector<4x256xi1>
    %342 = vector.broadcast %cst_62 : f32 to vector<4x256xf32>
    %343 = arith.select %341, %339, %342 : vector<4x256xi1>, vector<4x256xf32>
    %344 = vector.extract_strided_slice %42 {offsets = [0, 8], sizes = [4, 1], strides = [1, 1]} : vector<4x9xf32> to vector<4x1xf32>
    %345 = vector.broadcast %344 : vector<4x1xf32> to vector<4x256xf32>
    %346 = arith.mulf %345, %343 : vector<4x256xf32>
    %347 = arith.addf %338, %346 : vector<4x256xf32>
    %cst_63 = arith.constant 0.707106769 : f32
    %348 = vector.broadcast %cst_63 : f32 to vector<4x256xf32>
    %349 = arith.mulf %347, %348 : vector<4x256xf32>
    %350 = math.absf %349 : vector<4x256xf32>
    %cst_64 = arith.constant 0.327591091 : f32
    %351 = vector.broadcast %cst_64 : f32 to vector<4x256xf32>
    %352 = arith.mulf %351, %350 : vector<4x256xf32>
    %cst_65 = arith.constant 1.000000e+00 : f32
    %353 = vector.broadcast %cst_65 : f32 to vector<4x256xf32>
    %354 = arith.addf %353, %352 : vector<4x256xf32>
    %cst_66 = arith.constant 1.000000e+00 : f32
    %355 = vector.broadcast %cst_66 : f32 to vector<4x256xf32>
    %356 = arith.divf %355, %354 : vector<4x256xf32>
    %cst_67 = arith.constant 1.06140542 : f32
    %357 = vector.broadcast %cst_67 : f32 to vector<4x256xf32>
    %358 = arith.mulf %357, %356 : vector<4x256xf32>
    %cst_68 = arith.constant 1.45315206 : f32
    %359 = vector.broadcast %cst_68 : f32 to vector<4x256xf32>
    %360 = arith.subf %358, %359 : vector<4x256xf32>
    %361 = arith.mulf %360, %356 : vector<4x256xf32>
    %cst_69 = arith.constant 1.42141378 : f32
    %362 = vector.broadcast %cst_69 : f32 to vector<4x256xf32>
    %363 = arith.addf %361, %362 : vector<4x256xf32>
    %364 = arith.mulf %363, %356 : vector<4x256xf32>
    %cst_70 = arith.constant 0.284496725 : f32
    %365 = vector.broadcast %cst_70 : f32 to vector<4x256xf32>
    %366 = arith.subf %364, %365 : vector<4x256xf32>
    %367 = arith.mulf %366, %356 : vector<4x256xf32>
    %cst_71 = arith.constant 0.254829586 : f32
    %368 = vector.broadcast %cst_71 : f32 to vector<4x256xf32>
    %369 = arith.addf %367, %368 : vector<4x256xf32>
    %370 = arith.mulf %369, %356 : vector<4x256xf32>
    %cst_72 = arith.constant 0.000000e+00 : f32
    %371 = vector.broadcast %cst_72 : f32 to vector<4x256xf32>
    %372 = arith.subf %371, %350 : vector<4x256xf32>
    %373 = arith.mulf %372, %350 : vector<4x256xf32>
    %374 = math.exp %373 : vector<4x256xf32>
    %375 = arith.mulf %370, %374 : vector<4x256xf32>
    %cst_73 = arith.constant 1.000000e+00 : f32
    %376 = vector.broadcast %cst_73 : f32 to vector<4x256xf32>
    %377 = arith.subf %376, %375 : vector<4x256xf32>
    %cst_74 = arith.constant 0.000000e+00 : f32
    %378 = vector.broadcast %cst_74 : f32 to vector<4x256xf32>
    %379 = arith.cmpf oge, %349, %378 : vector<4x256xf32>
    %cst_75 = arith.constant 0.000000e+00 : f32
    %380 = vector.broadcast %cst_75 : f32 to vector<4x256xf32>
    %381 = arith.subf %380, %377 : vector<4x256xf32>
    %382 = arith.select %379, %377, %381 : vector<4x256xi1>, vector<4x256xf32>
    %cst_76 = arith.constant 5.000000e-01 : f32
    %383 = vector.broadcast %cst_76 : f32 to vector<4x256xf32>
    %384 = arith.mulf %383, %347 : vector<4x256xf32>
    %cst_77 = arith.constant 1.000000e+00 : f32
    %385 = vector.broadcast %cst_77 : f32 to vector<4x256xf32>
    %386 = arith.addf %385, %382 : vector<4x256xf32>
    %387 = arith.mulf %384, %386 : vector<4x256xf32>
    %388 = vector.extract_strided_slice %44 {offsets = [0, 4], sizes = [4, 1], strides = [1, 1]} : vector<4x9xf32> to vector<4x1xf32>
    %389 = vector.broadcast %388 : vector<4x1xf32> to vector<4x256xf32>
    %390 = arith.mulf %389, %387 : vector<4x256xf32>
    %c17_i32_78 = arith.constant 17 : i32
    %391 = tpu.dynamic_rotate %387 by %c17_i32_78 dim 1 : vector<4x256xf32>, i32 -> vector<4x256xf32>
    %cst_79 = arith.constant 0.000000e+00 : f32
    %392 = vector.shape_cast %27 : vector<1x256xi1> to vector<1x256xi1>
    %393 = vector.broadcast %392 : vector<1x256xi1> to vector<4x256xi1>
    %394 = vector.broadcast %cst_79 : f32 to vector<4x256xf32>
    %395 = arith.select %393, %391, %394 : vector<4x256xi1>, vector<4x256xf32>
    %396 = vector.extract_strided_slice %44 {offsets = [0, 0], sizes = [4, 1], strides = [1, 1]} : vector<4x9xf32> to vector<4x1xf32>
    %397 = vector.broadcast %396 : vector<4x1xf32> to vector<4x256xf32>
    %398 = arith.mulf %397, %395 : vector<4x256xf32>
    %399 = arith.addf %390, %398 : vector<4x256xf32>
    %c16_i32_80 = arith.constant 16 : i32
    %400 = tpu.dynamic_rotate %387 by %c16_i32_80 dim 1 : vector<4x256xf32>, i32 -> vector<4x256xf32>
    %cst_81 = arith.constant 0.000000e+00 : f32
    %401 = vector.shape_cast %24 : vector<1x256xi1> to vector<1x256xi1>
    %402 = vector.broadcast %401 : vector<1x256xi1> to vector<4x256xi1>
    %403 = vector.broadcast %cst_81 : f32 to vector<4x256xf32>
    %404 = arith.select %402, %400, %403 : vector<4x256xi1>, vector<4x256xf32>
    %405 = vector.extract_strided_slice %44 {offsets = [0, 1], sizes = [4, 1], strides = [1, 1]} : vector<4x9xf32> to vector<4x1xf32>
    %406 = vector.broadcast %405 : vector<4x1xf32> to vector<4x256xf32>
    %407 = arith.mulf %406, %404 : vector<4x256xf32>
    %408 = arith.addf %399, %407 : vector<4x256xf32>
    %c15_i32_82 = arith.constant 15 : i32
    %409 = tpu.dynamic_rotate %387 by %c15_i32_82 dim 1 : vector<4x256xf32>, i32 -> vector<4x256xf32>
    %cst_83 = arith.constant 0.000000e+00 : f32
    %410 = vector.shape_cast %28 : vector<1x256xi1> to vector<1x256xi1>
    %411 = vector.broadcast %410 : vector<1x256xi1> to vector<4x256xi1>
    %412 = vector.broadcast %cst_83 : f32 to vector<4x256xf32>
    %413 = arith.select %411, %409, %412 : vector<4x256xi1>, vector<4x256xf32>
    %414 = vector.extract_strided_slice %44 {offsets = [0, 2], sizes = [4, 1], strides = [1, 1]} : vector<4x9xf32> to vector<4x1xf32>
    %415 = vector.broadcast %414 : vector<4x1xf32> to vector<4x256xf32>
    %416 = arith.mulf %415, %413 : vector<4x256xf32>
    %417 = arith.addf %408, %416 : vector<4x256xf32>
    %c1_i32_84 = arith.constant 1 : i32
    %418 = tpu.dynamic_rotate %387 by %c1_i32_84 dim 1 : vector<4x256xf32>, i32 -> vector<4x256xf32>
    %cst_85 = arith.constant 0.000000e+00 : f32
    %419 = vector.shape_cast %20 : vector<1x256xi1> to vector<1x256xi1>
    %420 = vector.broadcast %419 : vector<1x256xi1> to vector<4x256xi1>
    %421 = vector.broadcast %cst_85 : f32 to vector<4x256xf32>
    %422 = arith.select %420, %418, %421 : vector<4x256xi1>, vector<4x256xf32>
    %423 = vector.extract_strided_slice %44 {offsets = [0, 3], sizes = [4, 1], strides = [1, 1]} : vector<4x9xf32> to vector<4x1xf32>
    %424 = vector.broadcast %423 : vector<4x1xf32> to vector<4x256xf32>
    %425 = arith.mulf %424, %422 : vector<4x256xf32>
    %426 = arith.addf %417, %425 : vector<4x256xf32>
    %c255_i32_86 = arith.constant 255 : i32
    %427 = tpu.dynamic_rotate %387 by %c255_i32_86 dim 1 : vector<4x256xf32>, i32 -> vector<4x256xf32>
    %cst_87 = arith.constant 0.000000e+00 : f32
    %428 = vector.shape_cast %22 : vector<1x256xi1> to vector<1x256xi1>
    %429 = vector.broadcast %428 : vector<1x256xi1> to vector<4x256xi1>
    %430 = vector.broadcast %cst_87 : f32 to vector<4x256xf32>
    %431 = arith.select %429, %427, %430 : vector<4x256xi1>, vector<4x256xf32>
    %432 = vector.extract_strided_slice %44 {offsets = [0, 5], sizes = [4, 1], strides = [1, 1]} : vector<4x9xf32> to vector<4x1xf32>
    %433 = vector.broadcast %432 : vector<4x1xf32> to vector<4x256xf32>
    %434 = arith.mulf %433, %431 : vector<4x256xf32>
    %435 = arith.addf %426, %434 : vector<4x256xf32>
    %c241_i32_88 = arith.constant 241 : i32
    %436 = tpu.dynamic_rotate %387 by %c241_i32_88 dim 1 : vector<4x256xf32>, i32 -> vector<4x256xf32>
    %cst_89 = arith.constant 0.000000e+00 : f32
    %437 = vector.shape_cast %29 : vector<1x256xi1> to vector<1x256xi1>
    %438 = vector.broadcast %437 : vector<1x256xi1> to vector<4x256xi1>
    %439 = vector.broadcast %cst_89 : f32 to vector<4x256xf32>
    %440 = arith.select %438, %436, %439 : vector<4x256xi1>, vector<4x256xf32>
    %441 = vector.extract_strided_slice %44 {offsets = [0, 6], sizes = [4, 1], strides = [1, 1]} : vector<4x9xf32> to vector<4x1xf32>
    %442 = vector.broadcast %441 : vector<4x1xf32> to vector<4x256xf32>
    %443 = arith.mulf %442, %440 : vector<4x256xf32>
    %444 = arith.addf %435, %443 : vector<4x256xf32>
    %c240_i32_90 = arith.constant 240 : i32
    %445 = tpu.dynamic_rotate %387 by %c240_i32_90 dim 1 : vector<4x256xf32>, i32 -> vector<4x256xf32>
    %cst_91 = arith.constant 0.000000e+00 : f32
    %446 = vector.shape_cast %26 : vector<1x256xi1> to vector<1x256xi1>
    %447 = vector.broadcast %446 : vector<1x256xi1> to vector<4x256xi1>
    %448 = vector.broadcast %cst_91 : f32 to vector<4x256xf32>
    %449 = arith.select %447, %445, %448 : vector<4x256xi1>, vector<4x256xf32>
    %450 = vector.extract_strided_slice %44 {offsets = [0, 7], sizes = [4, 1], strides = [1, 1]} : vector<4x9xf32> to vector<4x1xf32>
    %451 = vector.broadcast %450 : vector<4x1xf32> to vector<4x256xf32>
    %452 = arith.mulf %451, %449 : vector<4x256xf32>
    %453 = arith.addf %444, %452 : vector<4x256xf32>
    %c239_i32_92 = arith.constant 239 : i32
    %454 = tpu.dynamic_rotate %387 by %c239_i32_92 dim 1 : vector<4x256xf32>, i32 -> vector<4x256xf32>
    %cst_93 = arith.constant 0.000000e+00 : f32
    %455 = vector.shape_cast %30 : vector<1x256xi1> to vector<1x256xi1>
    %456 = vector.broadcast %455 : vector<1x256xi1> to vector<4x256xi1>
    %457 = vector.broadcast %cst_93 : f32 to vector<4x256xf32>
    %458 = arith.select %456, %454, %457 : vector<4x256xi1>, vector<4x256xf32>
    %459 = vector.extract_strided_slice %44 {offsets = [0, 8], sizes = [4, 1], strides = [1, 1]} : vector<4x9xf32> to vector<4x1xf32>
    %460 = vector.broadcast %459 : vector<4x1xf32> to vector<4x256xf32>
    %461 = arith.mulf %460, %458 : vector<4x256xf32>
    %462 = arith.addf %453, %461 : vector<4x256xf32>
    %463 = arith.addf %272, %462 : vector<4x256xf32>
    %464 = arith.addf %463, %1 : vector<4x256xf32>
    %cst_94 = arith.constant dense<0.000000e+00> : vector<256xf32>
    %465 = vector.multi_reduction <add>, %464, %cst_94 [0] : vector<4x256xf32> to vector<256xf32>
    %466 = vector.shape_cast %465 : vector<256xf32> to vector<1x256xf32>
    %cst_95 = arith.constant 4.000000e+00 : f32
    %467 = vector.broadcast %cst_95 : f32 to vector<1x256xf32>
    %468 = arith.divf %466, %467 : vector<1x256xf32>
    %469 = vector.broadcast %468 : vector<1x256xf32> to vector<4x256xf32>
    %470 = arith.subf %464, %469 : vector<4x256xf32>
    %471 = vector.broadcast %468 : vector<1x256xf32> to vector<4x256xf32>
    %472 = arith.subf %464, %471 : vector<4x256xf32>
    %473 = arith.mulf %470, %472 : vector<4x256xf32>
    %cst_96 = arith.constant dense<0.000000e+00> : vector<256xf32>
    %474 = vector.multi_reduction <add>, %473, %cst_96 [0] : vector<4x256xf32> to vector<256xf32>
    %475 = vector.shape_cast %474 : vector<256xf32> to vector<1x256xf32>
    %cst_97 = arith.constant 4.000000e+00 : f32
    %476 = vector.broadcast %cst_97 : f32 to vector<1x256xf32>
    %477 = arith.divf %475, %476 : vector<1x256xf32>
    %478 = vector.broadcast %468 : vector<1x256xf32> to vector<4x256xf32>
    %479 = arith.subf %464, %478 : vector<4x256xf32>
    %cst_98 = arith.constant 9.99999974E-6 : f32
    %480 = vector.broadcast %cst_98 : f32 to vector<1x256xf32>
    %481 = arith.addf %477, %480 : vector<1x256xf32>
    %482 = math.rsqrt %481 : vector<1x256xf32>
    %483 = vector.broadcast %482 : vector<1x256xf32> to vector<4x256xf32>
    %484 = arith.mulf %479, %483 : vector<4x256xf32>
    %485 = vector.broadcast %46 : vector<4x1xf32> to vector<4x256xf32>
    %486 = arith.mulf %484, %485 : vector<4x256xf32>
    %487 = vector.broadcast %48 : vector<4x1xf32> to vector<4x256xf32>
    %488 = arith.addf %486, %487 : vector<4x256xf32>
    %489 = vector.extract_strided_slice %54 {offsets = [0, 0], sizes = [16, 1], strides = [1, 1]} : vector<16x4xf32> to vector<16x1xf32>
    %490 = vector.extract_strided_slice %488 {offsets = [0, 0], sizes = [1, 256], strides = [1, 1]} : vector<4x256xf32> to vector<1x256xf32>
    %491 = vector.broadcast %489 : vector<16x1xf32> to vector<16x256xf32>
    %492 = vector.broadcast %490 : vector<1x256xf32> to vector<16x256xf32>
    %493 = arith.mulf %491, %492 : vector<16x256xf32>
    %494 = vector.extract_strided_slice %54 {offsets = [0, 1], sizes = [16, 1], strides = [1, 1]} : vector<16x4xf32> to vector<16x1xf32>
    %495 = vector.extract_strided_slice %488 {offsets = [1, 0], sizes = [1, 256], strides = [1, 1]} : vector<4x256xf32> to vector<1x256xf32>
    %496 = vector.broadcast %494 : vector<16x1xf32> to vector<16x256xf32>
    %497 = vector.broadcast %495 : vector<1x256xf32> to vector<16x256xf32>
    %498 = arith.mulf %496, %497 : vector<16x256xf32>
    %499 = arith.addf %493, %498 : vector<16x256xf32>
    %500 = vector.extract_strided_slice %54 {offsets = [0, 2], sizes = [16, 1], strides = [1, 1]} : vector<16x4xf32> to vector<16x1xf32>
    %501 = vector.extract_strided_slice %488 {offsets = [2, 0], sizes = [1, 256], strides = [1, 1]} : vector<4x256xf32> to vector<1x256xf32>
    %502 = vector.broadcast %500 : vector<16x1xf32> to vector<16x256xf32>
    %503 = vector.broadcast %501 : vector<1x256xf32> to vector<16x256xf32>
    %504 = arith.mulf %502, %503 : vector<16x256xf32>
    %505 = arith.addf %499, %504 : vector<16x256xf32>
    %506 = vector.extract_strided_slice %54 {offsets = [0, 3], sizes = [16, 1], strides = [1, 1]} : vector<16x4xf32> to vector<16x1xf32>
    %507 = vector.extract_strided_slice %488 {offsets = [3, 0], sizes = [1, 256], strides = [1, 1]} : vector<4x256xf32> to vector<1x256xf32>
    %508 = vector.broadcast %506 : vector<16x1xf32> to vector<16x256xf32>
    %509 = vector.broadcast %507 : vector<1x256xf32> to vector<16x256xf32>
    %510 = arith.mulf %508, %509 : vector<16x256xf32>
    %511 = arith.addf %505, %510 : vector<16x256xf32>
    %cst_99 = arith.constant 0.707106769 : f32
    %512 = vector.broadcast %cst_99 : f32 to vector<16x256xf32>
    %513 = arith.mulf %511, %512 : vector<16x256xf32>
    %514 = math.absf %513 : vector<16x256xf32>
    %cst_100 = arith.constant 0.327591091 : f32
    %515 = vector.broadcast %cst_100 : f32 to vector<16x256xf32>
    %516 = arith.mulf %515, %514 : vector<16x256xf32>
    %cst_101 = arith.constant 1.000000e+00 : f32
    %517 = vector.broadcast %cst_101 : f32 to vector<16x256xf32>
    %518 = arith.addf %517, %516 : vector<16x256xf32>
    %cst_102 = arith.constant 1.000000e+00 : f32
    %519 = vector.broadcast %cst_102 : f32 to vector<16x256xf32>
    %520 = arith.divf %519, %518 : vector<16x256xf32>
    %cst_103 = arith.constant 1.06140542 : f32
    %521 = vector.broadcast %cst_103 : f32 to vector<16x256xf32>
    %522 = arith.mulf %521, %520 : vector<16x256xf32>
    %cst_104 = arith.constant 1.45315206 : f32
    %523 = vector.broadcast %cst_104 : f32 to vector<16x256xf32>
    %524 = arith.subf %522, %523 : vector<16x256xf32>
    %525 = arith.mulf %524, %520 : vector<16x256xf32>
    %cst_105 = arith.constant 1.42141378 : f32
    %526 = vector.broadcast %cst_105 : f32 to vector<16x256xf32>
    %527 = arith.addf %525, %526 : vector<16x256xf32>
    %528 = arith.mulf %527, %520 : vector<16x256xf32>
    %cst_106 = arith.constant 0.284496725 : f32
    %529 = vector.broadcast %cst_106 : f32 to vector<16x256xf32>
    %530 = arith.subf %528, %529 : vector<16x256xf32>
    %531 = arith.mulf %530, %520 : vector<16x256xf32>
    %cst_107 = arith.constant 0.254829586 : f32
    %532 = vector.broadcast %cst_107 : f32 to vector<16x256xf32>
    %533 = arith.addf %531, %532 : vector<16x256xf32>
    %534 = arith.mulf %533, %520 : vector<16x256xf32>
    %cst_108 = arith.constant 0.000000e+00 : f32
    %535 = vector.broadcast %cst_108 : f32 to vector<16x256xf32>
    %536 = arith.subf %535, %514 : vector<16x256xf32>
    %537 = arith.mulf %536, %514 : vector<16x256xf32>
    %538 = math.exp %537 : vector<16x256xf32>
    %539 = arith.mulf %534, %538 : vector<16x256xf32>
    %cst_109 = arith.constant 1.000000e+00 : f32
    %540 = vector.broadcast %cst_109 : f32 to vector<16x256xf32>
    %541 = arith.subf %540, %539 : vector<16x256xf32>
    %cst_110 = arith.constant 0.000000e+00 : f32
    %542 = vector.broadcast %cst_110 : f32 to vector<16x256xf32>
    %543 = arith.cmpf oge, %513, %542 : vector<16x256xf32>
    %cst_111 = arith.constant 0.000000e+00 : f32
    %544 = vector.broadcast %cst_111 : f32 to vector<16x256xf32>
    %545 = arith.subf %544, %541 : vector<16x256xf32>
    %546 = arith.select %543, %541, %545 : vector<16x256xi1>, vector<16x256xf32>
    %cst_112 = arith.constant 5.000000e-01 : f32
    %547 = vector.broadcast %cst_112 : f32 to vector<16x256xf32>
    %548 = arith.mulf %547, %511 : vector<16x256xf32>
    %cst_113 = arith.constant 1.000000e+00 : f32
    %549 = vector.broadcast %cst_113 : f32 to vector<16x256xf32>
    %550 = arith.addf %549, %546 : vector<16x256xf32>
    %551 = arith.mulf %548, %550 : vector<16x256xf32>
    %552 = vector.extract_strided_slice %56 {offsets = [0, 4], sizes = [16, 1], strides = [1, 1]} : vector<16x9xf32> to vector<16x1xf32>
    %553 = vector.broadcast %552 : vector<16x1xf32> to vector<16x256xf32>
    %554 = arith.mulf %553, %551 : vector<16x256xf32>
    %c17_i32_114 = arith.constant 17 : i32
    %555 = tpu.dynamic_rotate %551 by %c17_i32_114 dim 1 : vector<16x256xf32>, i32 -> vector<16x256xf32>
    %cst_115 = arith.constant 0.000000e+00 : f32
    %556 = vector.shape_cast %27 : vector<1x256xi1> to vector<1x256xi1>
    %557 = vector.broadcast %556 : vector<1x256xi1> to vector<16x256xi1>
    %558 = vector.broadcast %cst_115 : f32 to vector<16x256xf32>
    %559 = arith.select %557, %555, %558 : vector<16x256xi1>, vector<16x256xf32>
    %560 = vector.extract_strided_slice %56 {offsets = [0, 0], sizes = [16, 1], strides = [1, 1]} : vector<16x9xf32> to vector<16x1xf32>
    %561 = vector.broadcast %560 : vector<16x1xf32> to vector<16x256xf32>
    %562 = arith.mulf %561, %559 : vector<16x256xf32>
    %563 = arith.addf %554, %562 : vector<16x256xf32>
    %c16_i32_116 = arith.constant 16 : i32
    %564 = tpu.dynamic_rotate %551 by %c16_i32_116 dim 1 : vector<16x256xf32>, i32 -> vector<16x256xf32>
    %cst_117 = arith.constant 0.000000e+00 : f32
    %565 = vector.shape_cast %24 : vector<1x256xi1> to vector<1x256xi1>
    %566 = vector.broadcast %565 : vector<1x256xi1> to vector<16x256xi1>
    %567 = vector.broadcast %cst_117 : f32 to vector<16x256xf32>
    %568 = arith.select %566, %564, %567 : vector<16x256xi1>, vector<16x256xf32>
    %569 = vector.extract_strided_slice %56 {offsets = [0, 1], sizes = [16, 1], strides = [1, 1]} : vector<16x9xf32> to vector<16x1xf32>
    %570 = vector.broadcast %569 : vector<16x1xf32> to vector<16x256xf32>
    %571 = arith.mulf %570, %568 : vector<16x256xf32>
    %572 = arith.addf %563, %571 : vector<16x256xf32>
    %c15_i32_118 = arith.constant 15 : i32
    %573 = tpu.dynamic_rotate %551 by %c15_i32_118 dim 1 : vector<16x256xf32>, i32 -> vector<16x256xf32>
    %cst_119 = arith.constant 0.000000e+00 : f32
    %574 = vector.shape_cast %28 : vector<1x256xi1> to vector<1x256xi1>
    %575 = vector.broadcast %574 : vector<1x256xi1> to vector<16x256xi1>
    %576 = vector.broadcast %cst_119 : f32 to vector<16x256xf32>
    %577 = arith.select %575, %573, %576 : vector<16x256xi1>, vector<16x256xf32>
    %578 = vector.extract_strided_slice %56 {offsets = [0, 2], sizes = [16, 1], strides = [1, 1]} : vector<16x9xf32> to vector<16x1xf32>
    %579 = vector.broadcast %578 : vector<16x1xf32> to vector<16x256xf32>
    %580 = arith.mulf %579, %577 : vector<16x256xf32>
    %581 = arith.addf %572, %580 : vector<16x256xf32>
    %c1_i32_120 = arith.constant 1 : i32
    %582 = tpu.dynamic_rotate %551 by %c1_i32_120 dim 1 : vector<16x256xf32>, i32 -> vector<16x256xf32>
    %cst_121 = arith.constant 0.000000e+00 : f32
    %583 = vector.shape_cast %20 : vector<1x256xi1> to vector<1x256xi1>
    %584 = vector.broadcast %583 : vector<1x256xi1> to vector<16x256xi1>
    %585 = vector.broadcast %cst_121 : f32 to vector<16x256xf32>
    %586 = arith.select %584, %582, %585 : vector<16x256xi1>, vector<16x256xf32>
    %587 = vector.extract_strided_slice %56 {offsets = [0, 3], sizes = [16, 1], strides = [1, 1]} : vector<16x9xf32> to vector<16x1xf32>
    %588 = vector.broadcast %587 : vector<16x1xf32> to vector<16x256xf32>
    %589 = arith.mulf %588, %586 : vector<16x256xf32>
    %590 = arith.addf %581, %589 : vector<16x256xf32>
    %c255_i32_122 = arith.constant 255 : i32
    %591 = tpu.dynamic_rotate %551 by %c255_i32_122 dim 1 : vector<16x256xf32>, i32 -> vector<16x256xf32>
    %cst_123 = arith.constant 0.000000e+00 : f32
    %592 = vector.shape_cast %22 : vector<1x256xi1> to vector<1x256xi1>
    %593 = vector.broadcast %592 : vector<1x256xi1> to vector<16x256xi1>
    %594 = vector.broadcast %cst_123 : f32 to vector<16x256xf32>
    %595 = arith.select %593, %591, %594 : vector<16x256xi1>, vector<16x256xf32>
    %596 = vector.extract_strided_slice %56 {offsets = [0, 5], sizes = [16, 1], strides = [1, 1]} : vector<16x9xf32> to vector<16x1xf32>
    %597 = vector.broadcast %596 : vector<16x1xf32> to vector<16x256xf32>
    %598 = arith.mulf %597, %595 : vector<16x256xf32>
    %599 = arith.addf %590, %598 : vector<16x256xf32>
    %c241_i32_124 = arith.constant 241 : i32
    %600 = tpu.dynamic_rotate %551 by %c241_i32_124 dim 1 : vector<16x256xf32>, i32 -> vector<16x256xf32>
    %cst_125 = arith.constant 0.000000e+00 : f32
    %601 = vector.shape_cast %29 : vector<1x256xi1> to vector<1x256xi1>
    %602 = vector.broadcast %601 : vector<1x256xi1> to vector<16x256xi1>
    %603 = vector.broadcast %cst_125 : f32 to vector<16x256xf32>
    %604 = arith.select %602, %600, %603 : vector<16x256xi1>, vector<16x256xf32>
    %605 = vector.extract_strided_slice %56 {offsets = [0, 6], sizes = [16, 1], strides = [1, 1]} : vector<16x9xf32> to vector<16x1xf32>
    %606 = vector.broadcast %605 : vector<16x1xf32> to vector<16x256xf32>
    %607 = arith.mulf %606, %604 : vector<16x256xf32>
    %608 = arith.addf %599, %607 : vector<16x256xf32>
    %c240_i32_126 = arith.constant 240 : i32
    %609 = tpu.dynamic_rotate %551 by %c240_i32_126 dim 1 : vector<16x256xf32>, i32 -> vector<16x256xf32>
    %cst_127 = arith.constant 0.000000e+00 : f32
    %610 = vector.shape_cast %26 : vector<1x256xi1> to vector<1x256xi1>
    %611 = vector.broadcast %610 : vector<1x256xi1> to vector<16x256xi1>
    %612 = vector.broadcast %cst_127 : f32 to vector<16x256xf32>
    %613 = arith.select %611, %609, %612 : vector<16x256xi1>, vector<16x256xf32>
    %614 = vector.extract_strided_slice %56 {offsets = [0, 7], sizes = [16, 1], strides = [1, 1]} : vector<16x9xf32> to vector<16x1xf32>
    %615 = vector.broadcast %614 : vector<16x1xf32> to vector<16x256xf32>
    %616 = arith.mulf %615, %613 : vector<16x256xf32>
    %617 = arith.addf %608, %616 : vector<16x256xf32>
    %c239_i32_128 = arith.constant 239 : i32
    %618 = tpu.dynamic_rotate %551 by %c239_i32_128 dim 1 : vector<16x256xf32>, i32 -> vector<16x256xf32>
    %cst_129 = arith.constant 0.000000e+00 : f32
    %619 = vector.shape_cast %30 : vector<1x256xi1> to vector<1x256xi1>
    %620 = vector.broadcast %619 : vector<1x256xi1> to vector<16x256xi1>
    %621 = vector.broadcast %cst_129 : f32 to vector<16x256xf32>
    %622 = arith.select %620, %618, %621 : vector<16x256xi1>, vector<16x256xf32>
    %623 = vector.extract_strided_slice %56 {offsets = [0, 8], sizes = [16, 1], strides = [1, 1]} : vector<16x9xf32> to vector<16x1xf32>
    %624 = vector.broadcast %623 : vector<16x1xf32> to vector<16x256xf32>
    %625 = arith.mulf %624, %622 : vector<16x256xf32>
    %626 = arith.addf %617, %625 : vector<16x256xf32>
    %cst_130 = arith.constant 0.707106769 : f32
    %627 = vector.broadcast %cst_130 : f32 to vector<16x256xf32>
    %628 = arith.mulf %626, %627 : vector<16x256xf32>
    %629 = math.absf %628 : vector<16x256xf32>
    %cst_131 = arith.constant 0.327591091 : f32
    %630 = vector.broadcast %cst_131 : f32 to vector<16x256xf32>
    %631 = arith.mulf %630, %629 : vector<16x256xf32>
    %cst_132 = arith.constant 1.000000e+00 : f32
    %632 = vector.broadcast %cst_132 : f32 to vector<16x256xf32>
    %633 = arith.addf %632, %631 : vector<16x256xf32>
    %cst_133 = arith.constant 1.000000e+00 : f32
    %634 = vector.broadcast %cst_133 : f32 to vector<16x256xf32>
    %635 = arith.divf %634, %633 : vector<16x256xf32>
    %cst_134 = arith.constant 1.06140542 : f32
    %636 = vector.broadcast %cst_134 : f32 to vector<16x256xf32>
    %637 = arith.mulf %636, %635 : vector<16x256xf32>
    %cst_135 = arith.constant 1.45315206 : f32
    %638 = vector.broadcast %cst_135 : f32 to vector<16x256xf32>
    %639 = arith.subf %637, %638 : vector<16x256xf32>
    %640 = arith.mulf %639, %635 : vector<16x256xf32>
    %cst_136 = arith.constant 1.42141378 : f32
    %641 = vector.broadcast %cst_136 : f32 to vector<16x256xf32>
    %642 = arith.addf %640, %641 : vector<16x256xf32>
    %643 = arith.mulf %642, %635 : vector<16x256xf32>
    %cst_137 = arith.constant 0.284496725 : f32
    %644 = vector.broadcast %cst_137 : f32 to vector<16x256xf32>
    %645 = arith.subf %643, %644 : vector<16x256xf32>
    %646 = arith.mulf %645, %635 : vector<16x256xf32>
    %cst_138 = arith.constant 0.254829586 : f32
    %647 = vector.broadcast %cst_138 : f32 to vector<16x256xf32>
    %648 = arith.addf %646, %647 : vector<16x256xf32>
    %649 = arith.mulf %648, %635 : vector<16x256xf32>
    %cst_139 = arith.constant 0.000000e+00 : f32
    %650 = vector.broadcast %cst_139 : f32 to vector<16x256xf32>
    %651 = arith.subf %650, %629 : vector<16x256xf32>
    %652 = arith.mulf %651, %629 : vector<16x256xf32>
    %653 = math.exp %652 : vector<16x256xf32>
    %654 = arith.mulf %649, %653 : vector<16x256xf32>
    %cst_140 = arith.constant 1.000000e+00 : f32
    %655 = vector.broadcast %cst_140 : f32 to vector<16x256xf32>
    %656 = arith.subf %655, %654 : vector<16x256xf32>
    %cst_141 = arith.constant 0.000000e+00 : f32
    %657 = vector.broadcast %cst_141 : f32 to vector<16x256xf32>
    %658 = arith.cmpf oge, %628, %657 : vector<16x256xf32>
    %cst_142 = arith.constant 0.000000e+00 : f32
    %659 = vector.broadcast %cst_142 : f32 to vector<16x256xf32>
    %660 = arith.subf %659, %656 : vector<16x256xf32>
    %661 = arith.select %658, %656, %660 : vector<16x256xi1>, vector<16x256xf32>
    %cst_143 = arith.constant 5.000000e-01 : f32
    %662 = vector.broadcast %cst_143 : f32 to vector<16x256xf32>
    %663 = arith.mulf %662, %626 : vector<16x256xf32>
    %cst_144 = arith.constant 1.000000e+00 : f32
    %664 = vector.broadcast %cst_144 : f32 to vector<16x256xf32>
    %665 = arith.addf %664, %661 : vector<16x256xf32>
    %666 = arith.mulf %663, %665 : vector<16x256xf32>
    %667 = vector.extract_strided_slice %50 {offsets = [0, 0], sizes = [4, 1], strides = [1, 1]} : vector<4x16xf32> to vector<4x1xf32>
    %668 = vector.extract_strided_slice %666 {offsets = [0, 0], sizes = [1, 256], strides = [1, 1]} : vector<16x256xf32> to vector<1x256xf32>
    %669 = vector.broadcast %667 : vector<4x1xf32> to vector<4x256xf32>
    %670 = vector.broadcast %668 : vector<1x256xf32> to vector<4x256xf32>
    %671 = arith.mulf %669, %670 : vector<4x256xf32>
    %672 = vector.extract_strided_slice %50 {offsets = [0, 1], sizes = [4, 1], strides = [1, 1]} : vector<4x16xf32> to vector<4x1xf32>
    %673 = vector.extract_strided_slice %666 {offsets = [1, 0], sizes = [1, 256], strides = [1, 1]} : vector<16x256xf32> to vector<1x256xf32>
    %674 = vector.broadcast %672 : vector<4x1xf32> to vector<4x256xf32>
    %675 = vector.broadcast %673 : vector<1x256xf32> to vector<4x256xf32>
    %676 = arith.mulf %674, %675 : vector<4x256xf32>
    %677 = arith.addf %671, %676 : vector<4x256xf32>
    %678 = vector.extract_strided_slice %50 {offsets = [0, 2], sizes = [4, 1], strides = [1, 1]} : vector<4x16xf32> to vector<4x1xf32>
    %679 = vector.extract_strided_slice %666 {offsets = [2, 0], sizes = [1, 256], strides = [1, 1]} : vector<16x256xf32> to vector<1x256xf32>
    %680 = vector.broadcast %678 : vector<4x1xf32> to vector<4x256xf32>
    %681 = vector.broadcast %679 : vector<1x256xf32> to vector<4x256xf32>
    %682 = arith.mulf %680, %681 : vector<4x256xf32>
    %683 = arith.addf %677, %682 : vector<4x256xf32>
    %684 = vector.extract_strided_slice %50 {offsets = [0, 3], sizes = [4, 1], strides = [1, 1]} : vector<4x16xf32> to vector<4x1xf32>
    %685 = vector.extract_strided_slice %666 {offsets = [3, 0], sizes = [1, 256], strides = [1, 1]} : vector<16x256xf32> to vector<1x256xf32>
    %686 = vector.broadcast %684 : vector<4x1xf32> to vector<4x256xf32>
    %687 = vector.broadcast %685 : vector<1x256xf32> to vector<4x256xf32>
    %688 = arith.mulf %686, %687 : vector<4x256xf32>
    %689 = arith.addf %683, %688 : vector<4x256xf32>
    %690 = vector.extract_strided_slice %50 {offsets = [0, 4], sizes = [4, 1], strides = [1, 1]} : vector<4x16xf32> to vector<4x1xf32>
    %691 = vector.extract_strided_slice %666 {offsets = [4, 0], sizes = [1, 256], strides = [1, 1]} : vector<16x256xf32> to vector<1x256xf32>
    %692 = vector.broadcast %690 : vector<4x1xf32> to vector<4x256xf32>
    %693 = vector.broadcast %691 : vector<1x256xf32> to vector<4x256xf32>
    %694 = arith.mulf %692, %693 : vector<4x256xf32>
    %695 = arith.addf %689, %694 : vector<4x256xf32>
    %696 = vector.extract_strided_slice %50 {offsets = [0, 5], sizes = [4, 1], strides = [1, 1]} : vector<4x16xf32> to vector<4x1xf32>
    %697 = vector.extract_strided_slice %666 {offsets = [5, 0], sizes = [1, 256], strides = [1, 1]} : vector<16x256xf32> to vector<1x256xf32>
    %698 = vector.broadcast %696 : vector<4x1xf32> to vector<4x256xf32>
    %699 = vector.broadcast %697 : vector<1x256xf32> to vector<4x256xf32>
    %700 = arith.mulf %698, %699 : vector<4x256xf32>
    %701 = arith.addf %695, %700 : vector<4x256xf32>
    %702 = vector.extract_strided_slice %50 {offsets = [0, 6], sizes = [4, 1], strides = [1, 1]} : vector<4x16xf32> to vector<4x1xf32>
    %703 = vector.extract_strided_slice %666 {offsets = [6, 0], sizes = [1, 256], strides = [1, 1]} : vector<16x256xf32> to vector<1x256xf32>
    %704 = vector.broadcast %702 : vector<4x1xf32> to vector<4x256xf32>
    %705 = vector.broadcast %703 : vector<1x256xf32> to vector<4x256xf32>
    %706 = arith.mulf %704, %705 : vector<4x256xf32>
    %707 = arith.addf %701, %706 : vector<4x256xf32>
    %708 = vector.extract_strided_slice %50 {offsets = [0, 7], sizes = [4, 1], strides = [1, 1]} : vector<4x16xf32> to vector<4x1xf32>
    %709 = vector.extract_strided_slice %666 {offsets = [7, 0], sizes = [1, 256], strides = [1, 1]} : vector<16x256xf32> to vector<1x256xf32>
    %710 = vector.broadcast %708 : vector<4x1xf32> to vector<4x256xf32>
    %711 = vector.broadcast %709 : vector<1x256xf32> to vector<4x256xf32>
    %712 = arith.mulf %710, %711 : vector<4x256xf32>
    %713 = arith.addf %707, %712 : vector<4x256xf32>
    %714 = vector.extract_strided_slice %50 {offsets = [0, 8], sizes = [4, 1], strides = [1, 1]} : vector<4x16xf32> to vector<4x1xf32>
    %715 = vector.extract_strided_slice %666 {offsets = [8, 0], sizes = [1, 256], strides = [1, 1]} : vector<16x256xf32> to vector<1x256xf32>
    %716 = vector.broadcast %714 : vector<4x1xf32> to vector<4x256xf32>
    %717 = vector.broadcast %715 : vector<1x256xf32> to vector<4x256xf32>
    %718 = arith.mulf %716, %717 : vector<4x256xf32>
    %719 = arith.addf %713, %718 : vector<4x256xf32>
    %720 = vector.extract_strided_slice %50 {offsets = [0, 9], sizes = [4, 1], strides = [1, 1]} : vector<4x16xf32> to vector<4x1xf32>
    %721 = vector.extract_strided_slice %666 {offsets = [9, 0], sizes = [1, 256], strides = [1, 1]} : vector<16x256xf32> to vector<1x256xf32>
    %722 = vector.broadcast %720 : vector<4x1xf32> to vector<4x256xf32>
    %723 = vector.broadcast %721 : vector<1x256xf32> to vector<4x256xf32>
    %724 = arith.mulf %722, %723 : vector<4x256xf32>
    %725 = arith.addf %719, %724 : vector<4x256xf32>
    %726 = vector.extract_strided_slice %50 {offsets = [0, 10], sizes = [4, 1], strides = [1, 1]} : vector<4x16xf32> to vector<4x1xf32>
    %727 = vector.extract_strided_slice %666 {offsets = [10, 0], sizes = [1, 256], strides = [1, 1]} : vector<16x256xf32> to vector<1x256xf32>
    %728 = vector.broadcast %726 : vector<4x1xf32> to vector<4x256xf32>
    %729 = vector.broadcast %727 : vector<1x256xf32> to vector<4x256xf32>
    %730 = arith.mulf %728, %729 : vector<4x256xf32>
    %731 = arith.addf %725, %730 : vector<4x256xf32>
    %732 = vector.extract_strided_slice %50 {offsets = [0, 11], sizes = [4, 1], strides = [1, 1]} : vector<4x16xf32> to vector<4x1xf32>
    %733 = vector.extract_strided_slice %666 {offsets = [11, 0], sizes = [1, 256], strides = [1, 1]} : vector<16x256xf32> to vector<1x256xf32>
    %734 = vector.broadcast %732 : vector<4x1xf32> to vector<4x256xf32>
    %735 = vector.broadcast %733 : vector<1x256xf32> to vector<4x256xf32>
    %736 = arith.mulf %734, %735 : vector<4x256xf32>
    %737 = arith.addf %731, %736 : vector<4x256xf32>
    %738 = vector.extract_strided_slice %50 {offsets = [0, 12], sizes = [4, 1], strides = [1, 1]} : vector<4x16xf32> to vector<4x1xf32>
    %739 = vector.extract_strided_slice %666 {offsets = [12, 0], sizes = [1, 256], strides = [1, 1]} : vector<16x256xf32> to vector<1x256xf32>
    %740 = vector.broadcast %738 : vector<4x1xf32> to vector<4x256xf32>
    %741 = vector.broadcast %739 : vector<1x256xf32> to vector<4x256xf32>
    %742 = arith.mulf %740, %741 : vector<4x256xf32>
    %743 = arith.addf %737, %742 : vector<4x256xf32>
    %744 = vector.extract_strided_slice %50 {offsets = [0, 13], sizes = [4, 1], strides = [1, 1]} : vector<4x16xf32> to vector<4x1xf32>
    %745 = vector.extract_strided_slice %666 {offsets = [13, 0], sizes = [1, 256], strides = [1, 1]} : vector<16x256xf32> to vector<1x256xf32>
    %746 = vector.broadcast %744 : vector<4x1xf32> to vector<4x256xf32>
    %747 = vector.broadcast %745 : vector<1x256xf32> to vector<4x256xf32>
    %748 = arith.mulf %746, %747 : vector<4x256xf32>
    %749 = arith.addf %743, %748 : vector<4x256xf32>
    %750 = vector.extract_strided_slice %50 {offsets = [0, 14], sizes = [4, 1], strides = [1, 1]} : vector<4x16xf32> to vector<4x1xf32>
    %751 = vector.extract_strided_slice %666 {offsets = [14, 0], sizes = [1, 256], strides = [1, 1]} : vector<16x256xf32> to vector<1x256xf32>
    %752 = vector.broadcast %750 : vector<4x1xf32> to vector<4x256xf32>
    %753 = vector.broadcast %751 : vector<1x256xf32> to vector<4x256xf32>
    %754 = arith.mulf %752, %753 : vector<4x256xf32>
    %755 = arith.addf %749, %754 : vector<4x256xf32>
    %756 = vector.extract_strided_slice %50 {offsets = [0, 15], sizes = [4, 1], strides = [1, 1]} : vector<4x16xf32> to vector<4x1xf32>
    %757 = vector.extract_strided_slice %666 {offsets = [15, 0], sizes = [1, 256], strides = [1, 1]} : vector<16x256xf32> to vector<1x256xf32>
    %758 = vector.broadcast %756 : vector<4x1xf32> to vector<4x256xf32>
    %759 = vector.broadcast %757 : vector<1x256xf32> to vector<4x256xf32>
    %760 = arith.mulf %758, %759 : vector<4x256xf32>
    %761 = arith.addf %755, %760 : vector<4x256xf32>
    %762 = arith.addf %464, %761 : vector<4x256xf32>
    %c1 = arith.constant 1 : index
    %c0_145 = arith.constant 0 : index
    %c0_146 = arith.constant 0 : index
    %763 = vector.load %arg2[%c1, %c0_145, %c0_146] : memref<2x4x54xf32, #tpu.memory_space<vmem>>, vector<1x4x4xf32>
    %764 = vector.shape_cast %763 : vector<1x4x4xf32> to vector<4x4xf32>
    %c1_147 = arith.constant 1 : index
    %c0_148 = arith.constant 0 : index
    %c4_149 = arith.constant 4 : index
    %765 = vector.load %arg2[%c1_147, %c0_148, %c4_149] : memref<2x4x54xf32, #tpu.memory_space<vmem>>, vector<1x4x4xf32>
    %766 = vector.shape_cast %765 : vector<1x4x4xf32> to vector<4x4xf32>
    %c1_150 = arith.constant 1 : index
    %c0_151 = arith.constant 0 : index
    %c8_152 = arith.constant 8 : index
    %767 = vector.load %arg2[%c1_150, %c0_151, %c8_152] : memref<2x4x54xf32, #tpu.memory_space<vmem>>, vector<1x4x4xf32>
    %768 = vector.shape_cast %767 : vector<1x4x4xf32> to vector<4x4xf32>
    %c1_153 = arith.constant 1 : index
    %c0_154 = arith.constant 0 : index
    %c12_155 = arith.constant 12 : index
    %769 = vector.load %arg2[%c1_153, %c0_154, %c12_155] : memref<2x4x54xf32, #tpu.memory_space<vmem>>, vector<1x4x4xf32>
    %770 = vector.shape_cast %769 : vector<1x4x4xf32> to vector<4x4xf32>
    %c1_156 = arith.constant 1 : index
    %c0_157 = arith.constant 0 : index
    %c16_158 = arith.constant 16 : index
    %771 = vector.load %arg2[%c1_156, %c0_157, %c16_158] : memref<2x4x54xf32, #tpu.memory_space<vmem>>, vector<1x4x1xf32>
    %772 = vector.shape_cast %771 : vector<1x4x1xf32> to vector<4x1xf32>
    %c1_159 = arith.constant 1 : index
    %c0_160 = arith.constant 0 : index
    %c17_161 = arith.constant 17 : index
    %773 = vector.load %arg2[%c1_159, %c0_160, %c17_161] : memref<2x4x54xf32, #tpu.memory_space<vmem>>, vector<1x4x9xf32>
    %774 = vector.shape_cast %773 : vector<1x4x9xf32> to vector<4x9xf32>
    %c1_162 = arith.constant 1 : index
    %c0_163 = arith.constant 0 : index
    %c26_164 = arith.constant 26 : index
    %775 = vector.load %arg2[%c1_162, %c0_163, %c26_164] : memref<2x4x54xf32, #tpu.memory_space<vmem>>, vector<1x4x9xf32>
    %776 = vector.shape_cast %775 : vector<1x4x9xf32> to vector<4x9xf32>
    %c1_165 = arith.constant 1 : index
    %c0_166 = arith.constant 0 : index
    %c35_167 = arith.constant 35 : index
    %777 = vector.load %arg2[%c1_165, %c0_166, %c35_167] : memref<2x4x54xf32, #tpu.memory_space<vmem>>, vector<1x4x1xf32>
    %778 = vector.shape_cast %777 : vector<1x4x1xf32> to vector<4x1xf32>
    %c1_168 = arith.constant 1 : index
    %c0_169 = arith.constant 0 : index
    %c36_170 = arith.constant 36 : index
    %779 = vector.load %arg2[%c1_168, %c0_169, %c36_170] : memref<2x4x54xf32, #tpu.memory_space<vmem>>, vector<1x4x1xf32>
    %780 = vector.shape_cast %779 : vector<1x4x1xf32> to vector<4x1xf32>
    %c1_171 = arith.constant 1 : index
    %c0_172 = arith.constant 0 : index
    %c37_173 = arith.constant 37 : index
    %781 = vector.load %arg2[%c1_171, %c0_172, %c37_173] : memref<2x4x54xf32, #tpu.memory_space<vmem>>, vector<1x4x16xf32>
    %782 = vector.shape_cast %781 : vector<1x4x16xf32> to vector<4x16xf32>
    %c1_174 = arith.constant 1 : index
    %c0_175 = arith.constant 0 : index
    %c53_176 = arith.constant 53 : index
    %783 = vector.load %arg2[%c1_174, %c0_175, %c53_176] : memref<2x4x54xf32, #tpu.memory_space<vmem>>, vector<1x2x1xf32>
    %784 = vector.shape_cast %783 : vector<1x2x1xf32> to vector<2x1xf32>
    %c1_177 = arith.constant 1 : index
    %c0_178 = arith.constant 0 : index
    %c0_179 = arith.constant 0 : index
    %785 = vector.load %arg3[%c1_177, %c0_178, %c0_179] : memref<2x16x13xf32, #tpu.memory_space<vmem>>, vector<1x16x4xf32>
    %786 = vector.shape_cast %785 : vector<1x16x4xf32> to vector<16x4xf32>
    %c1_180 = arith.constant 1 : index
    %c0_181 = arith.constant 0 : index
    %c4_182 = arith.constant 4 : index
    %787 = vector.load %arg3[%c1_180, %c0_181, %c4_182] : memref<2x16x13xf32, #tpu.memory_space<vmem>>, vector<1x16x9xf32>
    %788 = vector.shape_cast %787 : vector<1x16x9xf32> to vector<16x9xf32>
    %789 = vector.extract_strided_slice %764 {offsets = [0, 0], sizes = [4, 1], strides = [1, 1]} : vector<4x4xf32> to vector<4x1xf32>
    %790 = vector.extract_strided_slice %762 {offsets = [0, 0], sizes = [1, 256], strides = [1, 1]} : vector<4x256xf32> to vector<1x256xf32>
    %791 = vector.broadcast %789 : vector<4x1xf32> to vector<4x256xf32>
    %792 = vector.broadcast %790 : vector<1x256xf32> to vector<4x256xf32>
    %793 = arith.mulf %791, %792 : vector<4x256xf32>
    %794 = vector.extract_strided_slice %764 {offsets = [0, 1], sizes = [4, 1], strides = [1, 1]} : vector<4x4xf32> to vector<4x1xf32>
    %795 = vector.extract_strided_slice %762 {offsets = [1, 0], sizes = [1, 256], strides = [1, 1]} : vector<4x256xf32> to vector<1x256xf32>
    %796 = vector.broadcast %794 : vector<4x1xf32> to vector<4x256xf32>
    %797 = vector.broadcast %795 : vector<1x256xf32> to vector<4x256xf32>
    %798 = arith.mulf %796, %797 : vector<4x256xf32>
    %799 = arith.addf %793, %798 : vector<4x256xf32>
    %800 = vector.extract_strided_slice %764 {offsets = [0, 2], sizes = [4, 1], strides = [1, 1]} : vector<4x4xf32> to vector<4x1xf32>
    %801 = vector.extract_strided_slice %762 {offsets = [2, 0], sizes = [1, 256], strides = [1, 1]} : vector<4x256xf32> to vector<1x256xf32>
    %802 = vector.broadcast %800 : vector<4x1xf32> to vector<4x256xf32>
    %803 = vector.broadcast %801 : vector<1x256xf32> to vector<4x256xf32>
    %804 = arith.mulf %802, %803 : vector<4x256xf32>
    %805 = arith.addf %799, %804 : vector<4x256xf32>
    %806 = vector.extract_strided_slice %764 {offsets = [0, 3], sizes = [4, 1], strides = [1, 1]} : vector<4x4xf32> to vector<4x1xf32>
    %807 = vector.extract_strided_slice %762 {offsets = [3, 0], sizes = [1, 256], strides = [1, 1]} : vector<4x256xf32> to vector<1x256xf32>
    %808 = vector.broadcast %806 : vector<4x1xf32> to vector<4x256xf32>
    %809 = vector.broadcast %807 : vector<1x256xf32> to vector<4x256xf32>
    %810 = arith.mulf %808, %809 : vector<4x256xf32>
    %811 = arith.addf %805, %810 : vector<4x256xf32>
    %812 = vector.extract_strided_slice %766 {offsets = [0, 0], sizes = [4, 1], strides = [1, 1]} : vector<4x4xf32> to vector<4x1xf32>
    %813 = vector.extract_strided_slice %762 {offsets = [0, 0], sizes = [1, 256], strides = [1, 1]} : vector<4x256xf32> to vector<1x256xf32>
    %814 = vector.broadcast %812 : vector<4x1xf32> to vector<4x256xf32>
    %815 = vector.broadcast %813 : vector<1x256xf32> to vector<4x256xf32>
    %816 = arith.mulf %814, %815 : vector<4x256xf32>
    %817 = vector.extract_strided_slice %766 {offsets = [0, 1], sizes = [4, 1], strides = [1, 1]} : vector<4x4xf32> to vector<4x1xf32>
    %818 = vector.extract_strided_slice %762 {offsets = [1, 0], sizes = [1, 256], strides = [1, 1]} : vector<4x256xf32> to vector<1x256xf32>
    %819 = vector.broadcast %817 : vector<4x1xf32> to vector<4x256xf32>
    %820 = vector.broadcast %818 : vector<1x256xf32> to vector<4x256xf32>
    %821 = arith.mulf %819, %820 : vector<4x256xf32>
    %822 = arith.addf %816, %821 : vector<4x256xf32>
    %823 = vector.extract_strided_slice %766 {offsets = [0, 2], sizes = [4, 1], strides = [1, 1]} : vector<4x4xf32> to vector<4x1xf32>
    %824 = vector.extract_strided_slice %762 {offsets = [2, 0], sizes = [1, 256], strides = [1, 1]} : vector<4x256xf32> to vector<1x256xf32>
    %825 = vector.broadcast %823 : vector<4x1xf32> to vector<4x256xf32>
    %826 = vector.broadcast %824 : vector<1x256xf32> to vector<4x256xf32>
    %827 = arith.mulf %825, %826 : vector<4x256xf32>
    %828 = arith.addf %822, %827 : vector<4x256xf32>
    %829 = vector.extract_strided_slice %766 {offsets = [0, 3], sizes = [4, 1], strides = [1, 1]} : vector<4x4xf32> to vector<4x1xf32>
    %830 = vector.extract_strided_slice %762 {offsets = [3, 0], sizes = [1, 256], strides = [1, 1]} : vector<4x256xf32> to vector<1x256xf32>
    %831 = vector.broadcast %829 : vector<4x1xf32> to vector<4x256xf32>
    %832 = vector.broadcast %830 : vector<1x256xf32> to vector<4x256xf32>
    %833 = arith.mulf %831, %832 : vector<4x256xf32>
    %834 = arith.addf %828, %833 : vector<4x256xf32>
    %835 = vector.extract_strided_slice %768 {offsets = [0, 0], sizes = [4, 1], strides = [1, 1]} : vector<4x4xf32> to vector<4x1xf32>
    %836 = vector.extract_strided_slice %762 {offsets = [0, 0], sizes = [1, 256], strides = [1, 1]} : vector<4x256xf32> to vector<1x256xf32>
    %837 = vector.broadcast %835 : vector<4x1xf32> to vector<4x256xf32>
    %838 = vector.broadcast %836 : vector<1x256xf32> to vector<4x256xf32>
    %839 = arith.mulf %837, %838 : vector<4x256xf32>
    %840 = vector.extract_strided_slice %768 {offsets = [0, 1], sizes = [4, 1], strides = [1, 1]} : vector<4x4xf32> to vector<4x1xf32>
    %841 = vector.extract_strided_slice %762 {offsets = [1, 0], sizes = [1, 256], strides = [1, 1]} : vector<4x256xf32> to vector<1x256xf32>
    %842 = vector.broadcast %840 : vector<4x1xf32> to vector<4x256xf32>
    %843 = vector.broadcast %841 : vector<1x256xf32> to vector<4x256xf32>
    %844 = arith.mulf %842, %843 : vector<4x256xf32>
    %845 = arith.addf %839, %844 : vector<4x256xf32>
    %846 = vector.extract_strided_slice %768 {offsets = [0, 2], sizes = [4, 1], strides = [1, 1]} : vector<4x4xf32> to vector<4x1xf32>
    %847 = vector.extract_strided_slice %762 {offsets = [2, 0], sizes = [1, 256], strides = [1, 1]} : vector<4x256xf32> to vector<1x256xf32>
    %848 = vector.broadcast %846 : vector<4x1xf32> to vector<4x256xf32>
    %849 = vector.broadcast %847 : vector<1x256xf32> to vector<4x256xf32>
    %850 = arith.mulf %848, %849 : vector<4x256xf32>
    %851 = arith.addf %845, %850 : vector<4x256xf32>
    %852 = vector.extract_strided_slice %768 {offsets = [0, 3], sizes = [4, 1], strides = [1, 1]} : vector<4x4xf32> to vector<4x1xf32>
    %853 = vector.extract_strided_slice %762 {offsets = [3, 0], sizes = [1, 256], strides = [1, 1]} : vector<4x256xf32> to vector<1x256xf32>
    %854 = vector.broadcast %852 : vector<4x1xf32> to vector<4x256xf32>
    %855 = vector.broadcast %853 : vector<1x256xf32> to vector<4x256xf32>
    %856 = arith.mulf %854, %855 : vector<4x256xf32>
    %857 = arith.addf %851, %856 : vector<4x256xf32>
    %858 = arith.mulf %811, %811 : vector<4x256xf32>
    %cst_183 = arith.constant dense<0.000000e+00> : vector<4xf32>
    %859 = vector.multi_reduction <add>, %858, %cst_183 [1] : vector<4x256xf32> to vector<4xf32>
    %860 = vector.shape_cast %859 : vector<4xf32> to vector<4x1xf32>
    %cst_184 = arith.constant 1.000000e-24 : f32
    %861 = vector.broadcast %cst_184 : f32 to vector<4x1xf32>
    %862 = arith.maximumf %860, %861 : vector<4x1xf32>
    %863 = math.rsqrt %862 : vector<4x1xf32>
    %864 = vector.broadcast %863 : vector<4x1xf32> to vector<4x256xf32>
    %865 = arith.mulf %811, %864 : vector<4x256xf32>
    %866 = arith.mulf %834, %834 : vector<4x256xf32>
    %cst_185 = arith.constant dense<0.000000e+00> : vector<4xf32>
    %867 = vector.multi_reduction <add>, %866, %cst_185 [1] : vector<4x256xf32> to vector<4xf32>
    %868 = vector.shape_cast %867 : vector<4xf32> to vector<4x1xf32>
    %cst_186 = arith.constant 1.000000e-24 : f32
    %869 = vector.broadcast %cst_186 : f32 to vector<4x1xf32>
    %870 = arith.maximumf %868, %869 : vector<4x1xf32>
    %871 = math.rsqrt %870 : vector<4x1xf32>
    %872 = vector.broadcast %871 : vector<4x1xf32> to vector<4x256xf32>
    %873 = arith.mulf %834, %872 : vector<4x256xf32>
    %cst_187 = arith.constant 0.000000e+00 : f32
    %874 = vector.broadcast %cst_187 : f32 to vector<4x256xf32>
    %875 = vector.extract_strided_slice %865 {offsets = [0, 0], sizes = [2, 256], strides = [1, 1]} : vector<4x256xf32> to vector<2x256xf32>
    %876 = vector.extract_strided_slice %873 {offsets = [0, 0], sizes = [2, 256], strides = [1, 1]} : vector<4x256xf32> to vector<2x256xf32>
    %877 = vector.extract_strided_slice %857 {offsets = [0, 0], sizes = [2, 256], strides = [1, 1]} : vector<4x256xf32> to vector<2x256xf32>
    %878 = vector.extract_strided_slice %784 {offsets = [0, 0], sizes = [1, 1], strides = [1, 1]} : vector<2x1xf32> to vector<1x1xf32>
    %879 = vector.extract_strided_slice %876 {offsets = [0, 0], sizes = [1, 256], strides = [1, 1]} : vector<2x256xf32> to vector<1x256xf32>
    %880 = vector.broadcast %879 : vector<1x256xf32> to vector<2x256xf32>
    %881 = arith.mulf %880, %875 : vector<2x256xf32>
    %cst_188 = arith.constant dense<0.000000e+00> : vector<2xf32>
    %882 = vector.multi_reduction <add>, %881, %cst_188 [1] : vector<2x256xf32> to vector<2xf32>
    %883 = vector.shape_cast %882 : vector<2xf32> to vector<2x1xf32>
    %884 = vector.broadcast %878 : vector<1x1xf32> to vector<2x1xf32>
    %885 = arith.mulf %883, %884 : vector<2x1xf32>
    %cst_189 = arith.constant dense<0xFF800000> : vector<1xf32>
    %886 = vector.multi_reduction <maximumf>, %885, %cst_189 [0] : vector<2x1xf32> to vector<1xf32>
    %887 = vector.shape_cast %886 : vector<1xf32> to vector<1x1xf32>
    %888 = vector.broadcast %887 : vector<1x1xf32> to vector<2x1xf32>
    %889 = arith.subf %885, %888 : vector<2x1xf32>
    %890 = math.exp %889 : vector<2x1xf32>
    %cst_190 = arith.constant dense<0.000000e+00> : vector<1xf32>
    %891 = vector.multi_reduction <add>, %890, %cst_190 [0] : vector<2x1xf32> to vector<1xf32>
    %892 = vector.shape_cast %891 : vector<1xf32> to vector<1x1xf32>
    %893 = vector.broadcast %892 : vector<1x1xf32> to vector<2x1xf32>
    %894 = arith.divf %890, %893 : vector<2x1xf32>
    %895 = vector.extract_strided_slice %894 {offsets = [0, 0], sizes = [1, 1], strides = [1, 1]} : vector<2x1xf32> to vector<1x1xf32>
    %896 = vector.extract_strided_slice %877 {offsets = [0, 0], sizes = [1, 256], strides = [1, 1]} : vector<2x256xf32> to vector<1x256xf32>
    %897 = vector.broadcast %895 : vector<1x1xf32> to vector<1x256xf32>
    %898 = arith.mulf %897, %896 : vector<1x256xf32>
    %899 = vector.extract_strided_slice %894 {offsets = [1, 0], sizes = [1, 1], strides = [1, 1]} : vector<2x1xf32> to vector<1x1xf32>
    %900 = vector.extract_strided_slice %877 {offsets = [1, 0], sizes = [1, 256], strides = [1, 1]} : vector<2x256xf32> to vector<1x256xf32>
    %901 = vector.broadcast %899 : vector<1x1xf32> to vector<1x256xf32>
    %902 = arith.mulf %901, %900 : vector<1x256xf32>
    %903 = arith.addf %898, %902 : vector<1x256xf32>
    %904 = vector.extract_strided_slice %770 {offsets = [0, 0], sizes = [4, 1], strides = [1, 1]} : vector<4x4xf32> to vector<4x1xf32>
    %905 = vector.broadcast %904 : vector<4x1xf32> to vector<4x256xf32>
    %906 = vector.broadcast %903 : vector<1x256xf32> to vector<4x256xf32>
    %907 = arith.mulf %905, %906 : vector<4x256xf32>
    %908 = arith.addf %874, %907 : vector<4x256xf32>
    %909 = vector.extract_strided_slice %876 {offsets = [1, 0], sizes = [1, 256], strides = [1, 1]} : vector<2x256xf32> to vector<1x256xf32>
    %910 = vector.broadcast %909 : vector<1x256xf32> to vector<2x256xf32>
    %911 = arith.mulf %910, %875 : vector<2x256xf32>
    %cst_191 = arith.constant dense<0.000000e+00> : vector<2xf32>
    %912 = vector.multi_reduction <add>, %911, %cst_191 [1] : vector<2x256xf32> to vector<2xf32>
    %913 = vector.shape_cast %912 : vector<2xf32> to vector<2x1xf32>
    %914 = vector.broadcast %878 : vector<1x1xf32> to vector<2x1xf32>
    %915 = arith.mulf %913, %914 : vector<2x1xf32>
    %cst_192 = arith.constant dense<0xFF800000> : vector<1xf32>
    %916 = vector.multi_reduction <maximumf>, %915, %cst_192 [0] : vector<2x1xf32> to vector<1xf32>
    %917 = vector.shape_cast %916 : vector<1xf32> to vector<1x1xf32>
    %918 = vector.broadcast %917 : vector<1x1xf32> to vector<2x1xf32>
    %919 = arith.subf %915, %918 : vector<2x1xf32>
    %920 = math.exp %919 : vector<2x1xf32>
    %cst_193 = arith.constant dense<0.000000e+00> : vector<1xf32>
    %921 = vector.multi_reduction <add>, %920, %cst_193 [0] : vector<2x1xf32> to vector<1xf32>
    %922 = vector.shape_cast %921 : vector<1xf32> to vector<1x1xf32>
    %923 = vector.broadcast %922 : vector<1x1xf32> to vector<2x1xf32>
    %924 = arith.divf %920, %923 : vector<2x1xf32>
    %925 = vector.extract_strided_slice %924 {offsets = [0, 0], sizes = [1, 1], strides = [1, 1]} : vector<2x1xf32> to vector<1x1xf32>
    %926 = vector.extract_strided_slice %877 {offsets = [0, 0], sizes = [1, 256], strides = [1, 1]} : vector<2x256xf32> to vector<1x256xf32>
    %927 = vector.broadcast %925 : vector<1x1xf32> to vector<1x256xf32>
    %928 = arith.mulf %927, %926 : vector<1x256xf32>
    %929 = vector.extract_strided_slice %924 {offsets = [1, 0], sizes = [1, 1], strides = [1, 1]} : vector<2x1xf32> to vector<1x1xf32>
    %930 = vector.extract_strided_slice %877 {offsets = [1, 0], sizes = [1, 256], strides = [1, 1]} : vector<2x256xf32> to vector<1x256xf32>
    %931 = vector.broadcast %929 : vector<1x1xf32> to vector<1x256xf32>
    %932 = arith.mulf %931, %930 : vector<1x256xf32>
    %933 = arith.addf %928, %932 : vector<1x256xf32>
    %934 = vector.extract_strided_slice %770 {offsets = [0, 1], sizes = [4, 1], strides = [1, 1]} : vector<4x4xf32> to vector<4x1xf32>
    %935 = vector.broadcast %934 : vector<4x1xf32> to vector<4x256xf32>
    %936 = vector.broadcast %933 : vector<1x256xf32> to vector<4x256xf32>
    %937 = arith.mulf %935, %936 : vector<4x256xf32>
    %938 = arith.addf %908, %937 : vector<4x256xf32>
    %939 = vector.extract_strided_slice %865 {offsets = [2, 0], sizes = [2, 256], strides = [1, 1]} : vector<4x256xf32> to vector<2x256xf32>
    %940 = vector.extract_strided_slice %873 {offsets = [2, 0], sizes = [2, 256], strides = [1, 1]} : vector<4x256xf32> to vector<2x256xf32>
    %941 = vector.extract_strided_slice %857 {offsets = [2, 0], sizes = [2, 256], strides = [1, 1]} : vector<4x256xf32> to vector<2x256xf32>
    %942 = vector.extract_strided_slice %784 {offsets = [1, 0], sizes = [1, 1], strides = [1, 1]} : vector<2x1xf32> to vector<1x1xf32>
    %943 = vector.extract_strided_slice %940 {offsets = [0, 0], sizes = [1, 256], strides = [1, 1]} : vector<2x256xf32> to vector<1x256xf32>
    %944 = vector.broadcast %943 : vector<1x256xf32> to vector<2x256xf32>
    %945 = arith.mulf %944, %939 : vector<2x256xf32>
    %cst_194 = arith.constant dense<0.000000e+00> : vector<2xf32>
    %946 = vector.multi_reduction <add>, %945, %cst_194 [1] : vector<2x256xf32> to vector<2xf32>
    %947 = vector.shape_cast %946 : vector<2xf32> to vector<2x1xf32>
    %948 = vector.broadcast %942 : vector<1x1xf32> to vector<2x1xf32>
    %949 = arith.mulf %947, %948 : vector<2x1xf32>
    %cst_195 = arith.constant dense<0xFF800000> : vector<1xf32>
    %950 = vector.multi_reduction <maximumf>, %949, %cst_195 [0] : vector<2x1xf32> to vector<1xf32>
    %951 = vector.shape_cast %950 : vector<1xf32> to vector<1x1xf32>
    %952 = vector.broadcast %951 : vector<1x1xf32> to vector<2x1xf32>
    %953 = arith.subf %949, %952 : vector<2x1xf32>
    %954 = math.exp %953 : vector<2x1xf32>
    %cst_196 = arith.constant dense<0.000000e+00> : vector<1xf32>
    %955 = vector.multi_reduction <add>, %954, %cst_196 [0] : vector<2x1xf32> to vector<1xf32>
    %956 = vector.shape_cast %955 : vector<1xf32> to vector<1x1xf32>
    %957 = vector.broadcast %956 : vector<1x1xf32> to vector<2x1xf32>
    %958 = arith.divf %954, %957 : vector<2x1xf32>
    %959 = vector.extract_strided_slice %958 {offsets = [0, 0], sizes = [1, 1], strides = [1, 1]} : vector<2x1xf32> to vector<1x1xf32>
    %960 = vector.extract_strided_slice %941 {offsets = [0, 0], sizes = [1, 256], strides = [1, 1]} : vector<2x256xf32> to vector<1x256xf32>
    %961 = vector.broadcast %959 : vector<1x1xf32> to vector<1x256xf32>
    %962 = arith.mulf %961, %960 : vector<1x256xf32>
    %963 = vector.extract_strided_slice %958 {offsets = [1, 0], sizes = [1, 1], strides = [1, 1]} : vector<2x1xf32> to vector<1x1xf32>
    %964 = vector.extract_strided_slice %941 {offsets = [1, 0], sizes = [1, 256], strides = [1, 1]} : vector<2x256xf32> to vector<1x256xf32>
    %965 = vector.broadcast %963 : vector<1x1xf32> to vector<1x256xf32>
    %966 = arith.mulf %965, %964 : vector<1x256xf32>
    %967 = arith.addf %962, %966 : vector<1x256xf32>
    %968 = vector.extract_strided_slice %770 {offsets = [0, 2], sizes = [4, 1], strides = [1, 1]} : vector<4x4xf32> to vector<4x1xf32>
    %969 = vector.broadcast %968 : vector<4x1xf32> to vector<4x256xf32>
    %970 = vector.broadcast %967 : vector<1x256xf32> to vector<4x256xf32>
    %971 = arith.mulf %969, %970 : vector<4x256xf32>
    %972 = arith.addf %938, %971 : vector<4x256xf32>
    %973 = vector.extract_strided_slice %940 {offsets = [1, 0], sizes = [1, 256], strides = [1, 1]} : vector<2x256xf32> to vector<1x256xf32>
    %974 = vector.broadcast %973 : vector<1x256xf32> to vector<2x256xf32>
    %975 = arith.mulf %974, %939 : vector<2x256xf32>
    %cst_197 = arith.constant dense<0.000000e+00> : vector<2xf32>
    %976 = vector.multi_reduction <add>, %975, %cst_197 [1] : vector<2x256xf32> to vector<2xf32>
    %977 = vector.shape_cast %976 : vector<2xf32> to vector<2x1xf32>
    %978 = vector.broadcast %942 : vector<1x1xf32> to vector<2x1xf32>
    %979 = arith.mulf %977, %978 : vector<2x1xf32>
    %cst_198 = arith.constant dense<0xFF800000> : vector<1xf32>
    %980 = vector.multi_reduction <maximumf>, %979, %cst_198 [0] : vector<2x1xf32> to vector<1xf32>
    %981 = vector.shape_cast %980 : vector<1xf32> to vector<1x1xf32>
    %982 = vector.broadcast %981 : vector<1x1xf32> to vector<2x1xf32>
    %983 = arith.subf %979, %982 : vector<2x1xf32>
    %984 = math.exp %983 : vector<2x1xf32>
    %cst_199 = arith.constant dense<0.000000e+00> : vector<1xf32>
    %985 = vector.multi_reduction <add>, %984, %cst_199 [0] : vector<2x1xf32> to vector<1xf32>
    %986 = vector.shape_cast %985 : vector<1xf32> to vector<1x1xf32>
    %987 = vector.broadcast %986 : vector<1x1xf32> to vector<2x1xf32>
    %988 = arith.divf %984, %987 : vector<2x1xf32>
    %989 = vector.extract_strided_slice %988 {offsets = [0, 0], sizes = [1, 1], strides = [1, 1]} : vector<2x1xf32> to vector<1x1xf32>
    %990 = vector.extract_strided_slice %941 {offsets = [0, 0], sizes = [1, 256], strides = [1, 1]} : vector<2x256xf32> to vector<1x256xf32>
    %991 = vector.broadcast %989 : vector<1x1xf32> to vector<1x256xf32>
    %992 = arith.mulf %991, %990 : vector<1x256xf32>
    %993 = vector.extract_strided_slice %988 {offsets = [1, 0], sizes = [1, 1], strides = [1, 1]} : vector<2x1xf32> to vector<1x1xf32>
    %994 = vector.extract_strided_slice %941 {offsets = [1, 0], sizes = [1, 256], strides = [1, 1]} : vector<2x256xf32> to vector<1x256xf32>
    %995 = vector.broadcast %993 : vector<1x1xf32> to vector<1x256xf32>
    %996 = arith.mulf %995, %994 : vector<1x256xf32>
    %997 = arith.addf %992, %996 : vector<1x256xf32>
    %998 = vector.extract_strided_slice %770 {offsets = [0, 3], sizes = [4, 1], strides = [1, 1]} : vector<4x4xf32> to vector<4x1xf32>
    %999 = vector.broadcast %998 : vector<4x1xf32> to vector<4x256xf32>
    %1000 = vector.broadcast %997 : vector<1x256xf32> to vector<4x256xf32>
    %1001 = arith.mulf %999, %1000 : vector<4x256xf32>
    %1002 = arith.addf %972, %1001 : vector<4x256xf32>
    %1003 = vector.broadcast %772 : vector<4x1xf32> to vector<4x256xf32>
    %1004 = arith.addf %1002, %1003 : vector<4x256xf32>
    %1005 = vector.extract_strided_slice %774 {offsets = [0, 4], sizes = [4, 1], strides = [1, 1]} : vector<4x9xf32> to vector<4x1xf32>
    %1006 = vector.broadcast %1005 : vector<4x1xf32> to vector<4x256xf32>
    %1007 = arith.mulf %1006, %857 : vector<4x256xf32>
    %c17_i32_200 = arith.constant 17 : i32
    %1008 = tpu.dynamic_rotate %857 by %c17_i32_200 dim 1 : vector<4x256xf32>, i32 -> vector<4x256xf32>
    %cst_201 = arith.constant 0.000000e+00 : f32
    %1009 = vector.shape_cast %27 : vector<1x256xi1> to vector<1x256xi1>
    %1010 = vector.broadcast %1009 : vector<1x256xi1> to vector<4x256xi1>
    %1011 = vector.broadcast %cst_201 : f32 to vector<4x256xf32>
    %1012 = arith.select %1010, %1008, %1011 : vector<4x256xi1>, vector<4x256xf32>
    %1013 = vector.extract_strided_slice %774 {offsets = [0, 0], sizes = [4, 1], strides = [1, 1]} : vector<4x9xf32> to vector<4x1xf32>
    %1014 = vector.broadcast %1013 : vector<4x1xf32> to vector<4x256xf32>
    %1015 = arith.mulf %1014, %1012 : vector<4x256xf32>
    %1016 = arith.addf %1007, %1015 : vector<4x256xf32>
    %c16_i32_202 = arith.constant 16 : i32
    %1017 = tpu.dynamic_rotate %857 by %c16_i32_202 dim 1 : vector<4x256xf32>, i32 -> vector<4x256xf32>
    %cst_203 = arith.constant 0.000000e+00 : f32
    %1018 = vector.shape_cast %24 : vector<1x256xi1> to vector<1x256xi1>
    %1019 = vector.broadcast %1018 : vector<1x256xi1> to vector<4x256xi1>
    %1020 = vector.broadcast %cst_203 : f32 to vector<4x256xf32>
    %1021 = arith.select %1019, %1017, %1020 : vector<4x256xi1>, vector<4x256xf32>
    %1022 = vector.extract_strided_slice %774 {offsets = [0, 1], sizes = [4, 1], strides = [1, 1]} : vector<4x9xf32> to vector<4x1xf32>
    %1023 = vector.broadcast %1022 : vector<4x1xf32> to vector<4x256xf32>
    %1024 = arith.mulf %1023, %1021 : vector<4x256xf32>
    %1025 = arith.addf %1016, %1024 : vector<4x256xf32>
    %c15_i32_204 = arith.constant 15 : i32
    %1026 = tpu.dynamic_rotate %857 by %c15_i32_204 dim 1 : vector<4x256xf32>, i32 -> vector<4x256xf32>
    %cst_205 = arith.constant 0.000000e+00 : f32
    %1027 = vector.shape_cast %28 : vector<1x256xi1> to vector<1x256xi1>
    %1028 = vector.broadcast %1027 : vector<1x256xi1> to vector<4x256xi1>
    %1029 = vector.broadcast %cst_205 : f32 to vector<4x256xf32>
    %1030 = arith.select %1028, %1026, %1029 : vector<4x256xi1>, vector<4x256xf32>
    %1031 = vector.extract_strided_slice %774 {offsets = [0, 2], sizes = [4, 1], strides = [1, 1]} : vector<4x9xf32> to vector<4x1xf32>
    %1032 = vector.broadcast %1031 : vector<4x1xf32> to vector<4x256xf32>
    %1033 = arith.mulf %1032, %1030 : vector<4x256xf32>
    %1034 = arith.addf %1025, %1033 : vector<4x256xf32>
    %c1_i32_206 = arith.constant 1 : i32
    %1035 = tpu.dynamic_rotate %857 by %c1_i32_206 dim 1 : vector<4x256xf32>, i32 -> vector<4x256xf32>
    %cst_207 = arith.constant 0.000000e+00 : f32
    %1036 = vector.shape_cast %20 : vector<1x256xi1> to vector<1x256xi1>
    %1037 = vector.broadcast %1036 : vector<1x256xi1> to vector<4x256xi1>
    %1038 = vector.broadcast %cst_207 : f32 to vector<4x256xf32>
    %1039 = arith.select %1037, %1035, %1038 : vector<4x256xi1>, vector<4x256xf32>
    %1040 = vector.extract_strided_slice %774 {offsets = [0, 3], sizes = [4, 1], strides = [1, 1]} : vector<4x9xf32> to vector<4x1xf32>
    %1041 = vector.broadcast %1040 : vector<4x1xf32> to vector<4x256xf32>
    %1042 = arith.mulf %1041, %1039 : vector<4x256xf32>
    %1043 = arith.addf %1034, %1042 : vector<4x256xf32>
    %c255_i32_208 = arith.constant 255 : i32
    %1044 = tpu.dynamic_rotate %857 by %c255_i32_208 dim 1 : vector<4x256xf32>, i32 -> vector<4x256xf32>
    %cst_209 = arith.constant 0.000000e+00 : f32
    %1045 = vector.shape_cast %22 : vector<1x256xi1> to vector<1x256xi1>
    %1046 = vector.broadcast %1045 : vector<1x256xi1> to vector<4x256xi1>
    %1047 = vector.broadcast %cst_209 : f32 to vector<4x256xf32>
    %1048 = arith.select %1046, %1044, %1047 : vector<4x256xi1>, vector<4x256xf32>
    %1049 = vector.extract_strided_slice %774 {offsets = [0, 5], sizes = [4, 1], strides = [1, 1]} : vector<4x9xf32> to vector<4x1xf32>
    %1050 = vector.broadcast %1049 : vector<4x1xf32> to vector<4x256xf32>
    %1051 = arith.mulf %1050, %1048 : vector<4x256xf32>
    %1052 = arith.addf %1043, %1051 : vector<4x256xf32>
    %c241_i32_210 = arith.constant 241 : i32
    %1053 = tpu.dynamic_rotate %857 by %c241_i32_210 dim 1 : vector<4x256xf32>, i32 -> vector<4x256xf32>
    %cst_211 = arith.constant 0.000000e+00 : f32
    %1054 = vector.shape_cast %29 : vector<1x256xi1> to vector<1x256xi1>
    %1055 = vector.broadcast %1054 : vector<1x256xi1> to vector<4x256xi1>
    %1056 = vector.broadcast %cst_211 : f32 to vector<4x256xf32>
    %1057 = arith.select %1055, %1053, %1056 : vector<4x256xi1>, vector<4x256xf32>
    %1058 = vector.extract_strided_slice %774 {offsets = [0, 6], sizes = [4, 1], strides = [1, 1]} : vector<4x9xf32> to vector<4x1xf32>
    %1059 = vector.broadcast %1058 : vector<4x1xf32> to vector<4x256xf32>
    %1060 = arith.mulf %1059, %1057 : vector<4x256xf32>
    %1061 = arith.addf %1052, %1060 : vector<4x256xf32>
    %c240_i32_212 = arith.constant 240 : i32
    %1062 = tpu.dynamic_rotate %857 by %c240_i32_212 dim 1 : vector<4x256xf32>, i32 -> vector<4x256xf32>
    %cst_213 = arith.constant 0.000000e+00 : f32
    %1063 = vector.shape_cast %26 : vector<1x256xi1> to vector<1x256xi1>
    %1064 = vector.broadcast %1063 : vector<1x256xi1> to vector<4x256xi1>
    %1065 = vector.broadcast %cst_213 : f32 to vector<4x256xf32>
    %1066 = arith.select %1064, %1062, %1065 : vector<4x256xi1>, vector<4x256xf32>
    %1067 = vector.extract_strided_slice %774 {offsets = [0, 7], sizes = [4, 1], strides = [1, 1]} : vector<4x9xf32> to vector<4x1xf32>
    %1068 = vector.broadcast %1067 : vector<4x1xf32> to vector<4x256xf32>
    %1069 = arith.mulf %1068, %1066 : vector<4x256xf32>
    %1070 = arith.addf %1061, %1069 : vector<4x256xf32>
    %c239_i32_214 = arith.constant 239 : i32
    %1071 = tpu.dynamic_rotate %857 by %c239_i32_214 dim 1 : vector<4x256xf32>, i32 -> vector<4x256xf32>
    %cst_215 = arith.constant 0.000000e+00 : f32
    %1072 = vector.shape_cast %30 : vector<1x256xi1> to vector<1x256xi1>
    %1073 = vector.broadcast %1072 : vector<1x256xi1> to vector<4x256xi1>
    %1074 = vector.broadcast %cst_215 : f32 to vector<4x256xf32>
    %1075 = arith.select %1073, %1071, %1074 : vector<4x256xi1>, vector<4x256xf32>
    %1076 = vector.extract_strided_slice %774 {offsets = [0, 8], sizes = [4, 1], strides = [1, 1]} : vector<4x9xf32> to vector<4x1xf32>
    %1077 = vector.broadcast %1076 : vector<4x1xf32> to vector<4x256xf32>
    %1078 = arith.mulf %1077, %1075 : vector<4x256xf32>
    %1079 = arith.addf %1070, %1078 : vector<4x256xf32>
    %cst_216 = arith.constant 0.707106769 : f32
    %1080 = vector.broadcast %cst_216 : f32 to vector<4x256xf32>
    %1081 = arith.mulf %1079, %1080 : vector<4x256xf32>
    %1082 = math.absf %1081 : vector<4x256xf32>
    %cst_217 = arith.constant 0.327591091 : f32
    %1083 = vector.broadcast %cst_217 : f32 to vector<4x256xf32>
    %1084 = arith.mulf %1083, %1082 : vector<4x256xf32>
    %cst_218 = arith.constant 1.000000e+00 : f32
    %1085 = vector.broadcast %cst_218 : f32 to vector<4x256xf32>
    %1086 = arith.addf %1085, %1084 : vector<4x256xf32>
    %cst_219 = arith.constant 1.000000e+00 : f32
    %1087 = vector.broadcast %cst_219 : f32 to vector<4x256xf32>
    %1088 = arith.divf %1087, %1086 : vector<4x256xf32>
    %cst_220 = arith.constant 1.06140542 : f32
    %1089 = vector.broadcast %cst_220 : f32 to vector<4x256xf32>
    %1090 = arith.mulf %1089, %1088 : vector<4x256xf32>
    %cst_221 = arith.constant 1.45315206 : f32
    %1091 = vector.broadcast %cst_221 : f32 to vector<4x256xf32>
    %1092 = arith.subf %1090, %1091 : vector<4x256xf32>
    %1093 = arith.mulf %1092, %1088 : vector<4x256xf32>
    %cst_222 = arith.constant 1.42141378 : f32
    %1094 = vector.broadcast %cst_222 : f32 to vector<4x256xf32>
    %1095 = arith.addf %1093, %1094 : vector<4x256xf32>
    %1096 = arith.mulf %1095, %1088 : vector<4x256xf32>
    %cst_223 = arith.constant 0.284496725 : f32
    %1097 = vector.broadcast %cst_223 : f32 to vector<4x256xf32>
    %1098 = arith.subf %1096, %1097 : vector<4x256xf32>
    %1099 = arith.mulf %1098, %1088 : vector<4x256xf32>
    %cst_224 = arith.constant 0.254829586 : f32
    %1100 = vector.broadcast %cst_224 : f32 to vector<4x256xf32>
    %1101 = arith.addf %1099, %1100 : vector<4x256xf32>
    %1102 = arith.mulf %1101, %1088 : vector<4x256xf32>
    %cst_225 = arith.constant 0.000000e+00 : f32
    %1103 = vector.broadcast %cst_225 : f32 to vector<4x256xf32>
    %1104 = arith.subf %1103, %1082 : vector<4x256xf32>
    %1105 = arith.mulf %1104, %1082 : vector<4x256xf32>
    %1106 = math.exp %1105 : vector<4x256xf32>
    %1107 = arith.mulf %1102, %1106 : vector<4x256xf32>
    %cst_226 = arith.constant 1.000000e+00 : f32
    %1108 = vector.broadcast %cst_226 : f32 to vector<4x256xf32>
    %1109 = arith.subf %1108, %1107 : vector<4x256xf32>
    %cst_227 = arith.constant 0.000000e+00 : f32
    %1110 = vector.broadcast %cst_227 : f32 to vector<4x256xf32>
    %1111 = arith.cmpf oge, %1081, %1110 : vector<4x256xf32>
    %cst_228 = arith.constant 0.000000e+00 : f32
    %1112 = vector.broadcast %cst_228 : f32 to vector<4x256xf32>
    %1113 = arith.subf %1112, %1109 : vector<4x256xf32>
    %1114 = arith.select %1111, %1109, %1113 : vector<4x256xi1>, vector<4x256xf32>
    %cst_229 = arith.constant 5.000000e-01 : f32
    %1115 = vector.broadcast %cst_229 : f32 to vector<4x256xf32>
    %1116 = arith.mulf %1115, %1079 : vector<4x256xf32>
    %cst_230 = arith.constant 1.000000e+00 : f32
    %1117 = vector.broadcast %cst_230 : f32 to vector<4x256xf32>
    %1118 = arith.addf %1117, %1114 : vector<4x256xf32>
    %1119 = arith.mulf %1116, %1118 : vector<4x256xf32>
    %1120 = vector.extract_strided_slice %776 {offsets = [0, 4], sizes = [4, 1], strides = [1, 1]} : vector<4x9xf32> to vector<4x1xf32>
    %1121 = vector.broadcast %1120 : vector<4x1xf32> to vector<4x256xf32>
    %1122 = arith.mulf %1121, %1119 : vector<4x256xf32>
    %c17_i32_231 = arith.constant 17 : i32
    %1123 = tpu.dynamic_rotate %1119 by %c17_i32_231 dim 1 : vector<4x256xf32>, i32 -> vector<4x256xf32>
    %cst_232 = arith.constant 0.000000e+00 : f32
    %1124 = vector.shape_cast %27 : vector<1x256xi1> to vector<1x256xi1>
    %1125 = vector.broadcast %1124 : vector<1x256xi1> to vector<4x256xi1>
    %1126 = vector.broadcast %cst_232 : f32 to vector<4x256xf32>
    %1127 = arith.select %1125, %1123, %1126 : vector<4x256xi1>, vector<4x256xf32>
    %1128 = vector.extract_strided_slice %776 {offsets = [0, 0], sizes = [4, 1], strides = [1, 1]} : vector<4x9xf32> to vector<4x1xf32>
    %1129 = vector.broadcast %1128 : vector<4x1xf32> to vector<4x256xf32>
    %1130 = arith.mulf %1129, %1127 : vector<4x256xf32>
    %1131 = arith.addf %1122, %1130 : vector<4x256xf32>
    %c16_i32_233 = arith.constant 16 : i32
    %1132 = tpu.dynamic_rotate %1119 by %c16_i32_233 dim 1 : vector<4x256xf32>, i32 -> vector<4x256xf32>
    %cst_234 = arith.constant 0.000000e+00 : f32
    %1133 = vector.shape_cast %24 : vector<1x256xi1> to vector<1x256xi1>
    %1134 = vector.broadcast %1133 : vector<1x256xi1> to vector<4x256xi1>
    %1135 = vector.broadcast %cst_234 : f32 to vector<4x256xf32>
    %1136 = arith.select %1134, %1132, %1135 : vector<4x256xi1>, vector<4x256xf32>
    %1137 = vector.extract_strided_slice %776 {offsets = [0, 1], sizes = [4, 1], strides = [1, 1]} : vector<4x9xf32> to vector<4x1xf32>
    %1138 = vector.broadcast %1137 : vector<4x1xf32> to vector<4x256xf32>
    %1139 = arith.mulf %1138, %1136 : vector<4x256xf32>
    %1140 = arith.addf %1131, %1139 : vector<4x256xf32>
    %c15_i32_235 = arith.constant 15 : i32
    %1141 = tpu.dynamic_rotate %1119 by %c15_i32_235 dim 1 : vector<4x256xf32>, i32 -> vector<4x256xf32>
    %cst_236 = arith.constant 0.000000e+00 : f32
    %1142 = vector.shape_cast %28 : vector<1x256xi1> to vector<1x256xi1>
    %1143 = vector.broadcast %1142 : vector<1x256xi1> to vector<4x256xi1>
    %1144 = vector.broadcast %cst_236 : f32 to vector<4x256xf32>
    %1145 = arith.select %1143, %1141, %1144 : vector<4x256xi1>, vector<4x256xf32>
    %1146 = vector.extract_strided_slice %776 {offsets = [0, 2], sizes = [4, 1], strides = [1, 1]} : vector<4x9xf32> to vector<4x1xf32>
    %1147 = vector.broadcast %1146 : vector<4x1xf32> to vector<4x256xf32>
    %1148 = arith.mulf %1147, %1145 : vector<4x256xf32>
    %1149 = arith.addf %1140, %1148 : vector<4x256xf32>
    %c1_i32_237 = arith.constant 1 : i32
    %1150 = tpu.dynamic_rotate %1119 by %c1_i32_237 dim 1 : vector<4x256xf32>, i32 -> vector<4x256xf32>
    %cst_238 = arith.constant 0.000000e+00 : f32
    %1151 = vector.shape_cast %20 : vector<1x256xi1> to vector<1x256xi1>
    %1152 = vector.broadcast %1151 : vector<1x256xi1> to vector<4x256xi1>
    %1153 = vector.broadcast %cst_238 : f32 to vector<4x256xf32>
    %1154 = arith.select %1152, %1150, %1153 : vector<4x256xi1>, vector<4x256xf32>
    %1155 = vector.extract_strided_slice %776 {offsets = [0, 3], sizes = [4, 1], strides = [1, 1]} : vector<4x9xf32> to vector<4x1xf32>
    %1156 = vector.broadcast %1155 : vector<4x1xf32> to vector<4x256xf32>
    %1157 = arith.mulf %1156, %1154 : vector<4x256xf32>
    %1158 = arith.addf %1149, %1157 : vector<4x256xf32>
    %c255_i32_239 = arith.constant 255 : i32
    %1159 = tpu.dynamic_rotate %1119 by %c255_i32_239 dim 1 : vector<4x256xf32>, i32 -> vector<4x256xf32>
    %cst_240 = arith.constant 0.000000e+00 : f32
    %1160 = vector.shape_cast %22 : vector<1x256xi1> to vector<1x256xi1>
    %1161 = vector.broadcast %1160 : vector<1x256xi1> to vector<4x256xi1>
    %1162 = vector.broadcast %cst_240 : f32 to vector<4x256xf32>
    %1163 = arith.select %1161, %1159, %1162 : vector<4x256xi1>, vector<4x256xf32>
    %1164 = vector.extract_strided_slice %776 {offsets = [0, 5], sizes = [4, 1], strides = [1, 1]} : vector<4x9xf32> to vector<4x1xf32>
    %1165 = vector.broadcast %1164 : vector<4x1xf32> to vector<4x256xf32>
    %1166 = arith.mulf %1165, %1163 : vector<4x256xf32>
    %1167 = arith.addf %1158, %1166 : vector<4x256xf32>
    %c241_i32_241 = arith.constant 241 : i32
    %1168 = tpu.dynamic_rotate %1119 by %c241_i32_241 dim 1 : vector<4x256xf32>, i32 -> vector<4x256xf32>
    %cst_242 = arith.constant 0.000000e+00 : f32
    %1169 = vector.shape_cast %29 : vector<1x256xi1> to vector<1x256xi1>
    %1170 = vector.broadcast %1169 : vector<1x256xi1> to vector<4x256xi1>
    %1171 = vector.broadcast %cst_242 : f32 to vector<4x256xf32>
    %1172 = arith.select %1170, %1168, %1171 : vector<4x256xi1>, vector<4x256xf32>
    %1173 = vector.extract_strided_slice %776 {offsets = [0, 6], sizes = [4, 1], strides = [1, 1]} : vector<4x9xf32> to vector<4x1xf32>
    %1174 = vector.broadcast %1173 : vector<4x1xf32> to vector<4x256xf32>
    %1175 = arith.mulf %1174, %1172 : vector<4x256xf32>
    %1176 = arith.addf %1167, %1175 : vector<4x256xf32>
    %c240_i32_243 = arith.constant 240 : i32
    %1177 = tpu.dynamic_rotate %1119 by %c240_i32_243 dim 1 : vector<4x256xf32>, i32 -> vector<4x256xf32>
    %cst_244 = arith.constant 0.000000e+00 : f32
    %1178 = vector.shape_cast %26 : vector<1x256xi1> to vector<1x256xi1>
    %1179 = vector.broadcast %1178 : vector<1x256xi1> to vector<4x256xi1>
    %1180 = vector.broadcast %cst_244 : f32 to vector<4x256xf32>
    %1181 = arith.select %1179, %1177, %1180 : vector<4x256xi1>, vector<4x256xf32>
    %1182 = vector.extract_strided_slice %776 {offsets = [0, 7], sizes = [4, 1], strides = [1, 1]} : vector<4x9xf32> to vector<4x1xf32>
    %1183 = vector.broadcast %1182 : vector<4x1xf32> to vector<4x256xf32>
    %1184 = arith.mulf %1183, %1181 : vector<4x256xf32>
    %1185 = arith.addf %1176, %1184 : vector<4x256xf32>
    %c239_i32_245 = arith.constant 239 : i32
    %1186 = tpu.dynamic_rotate %1119 by %c239_i32_245 dim 1 : vector<4x256xf32>, i32 -> vector<4x256xf32>
    %cst_246 = arith.constant 0.000000e+00 : f32
    %1187 = vector.shape_cast %30 : vector<1x256xi1> to vector<1x256xi1>
    %1188 = vector.broadcast %1187 : vector<1x256xi1> to vector<4x256xi1>
    %1189 = vector.broadcast %cst_246 : f32 to vector<4x256xf32>
    %1190 = arith.select %1188, %1186, %1189 : vector<4x256xi1>, vector<4x256xf32>
    %1191 = vector.extract_strided_slice %776 {offsets = [0, 8], sizes = [4, 1], strides = [1, 1]} : vector<4x9xf32> to vector<4x1xf32>
    %1192 = vector.broadcast %1191 : vector<4x1xf32> to vector<4x256xf32>
    %1193 = arith.mulf %1192, %1190 : vector<4x256xf32>
    %1194 = arith.addf %1185, %1193 : vector<4x256xf32>
    %1195 = arith.addf %1004, %1194 : vector<4x256xf32>
    %1196 = arith.addf %1195, %762 : vector<4x256xf32>
    %cst_247 = arith.constant dense<0.000000e+00> : vector<256xf32>
    %1197 = vector.multi_reduction <add>, %1196, %cst_247 [0] : vector<4x256xf32> to vector<256xf32>
    %1198 = vector.shape_cast %1197 : vector<256xf32> to vector<1x256xf32>
    %cst_248 = arith.constant 4.000000e+00 : f32
    %1199 = vector.broadcast %cst_248 : f32 to vector<1x256xf32>
    %1200 = arith.divf %1198, %1199 : vector<1x256xf32>
    %1201 = vector.broadcast %1200 : vector<1x256xf32> to vector<4x256xf32>
    %1202 = arith.subf %1196, %1201 : vector<4x256xf32>
    %1203 = vector.broadcast %1200 : vector<1x256xf32> to vector<4x256xf32>
    %1204 = arith.subf %1196, %1203 : vector<4x256xf32>
    %1205 = arith.mulf %1202, %1204 : vector<4x256xf32>
    %cst_249 = arith.constant dense<0.000000e+00> : vector<256xf32>
    %1206 = vector.multi_reduction <add>, %1205, %cst_249 [0] : vector<4x256xf32> to vector<256xf32>
    %1207 = vector.shape_cast %1206 : vector<256xf32> to vector<1x256xf32>
    %cst_250 = arith.constant 4.000000e+00 : f32
    %1208 = vector.broadcast %cst_250 : f32 to vector<1x256xf32>
    %1209 = arith.divf %1207, %1208 : vector<1x256xf32>
    %1210 = vector.broadcast %1200 : vector<1x256xf32> to vector<4x256xf32>
    %1211 = arith.subf %1196, %1210 : vector<4x256xf32>
    %cst_251 = arith.constant 9.99999974E-6 : f32
    %1212 = vector.broadcast %cst_251 : f32 to vector<1x256xf32>
    %1213 = arith.addf %1209, %1212 : vector<1x256xf32>
    %1214 = math.rsqrt %1213 : vector<1x256xf32>
    %1215 = vector.broadcast %1214 : vector<1x256xf32> to vector<4x256xf32>
    %1216 = arith.mulf %1211, %1215 : vector<4x256xf32>
    %1217 = vector.broadcast %778 : vector<4x1xf32> to vector<4x256xf32>
    %1218 = arith.mulf %1216, %1217 : vector<4x256xf32>
    %1219 = vector.broadcast %780 : vector<4x1xf32> to vector<4x256xf32>
    %1220 = arith.addf %1218, %1219 : vector<4x256xf32>
    %1221 = vector.extract_strided_slice %786 {offsets = [0, 0], sizes = [16, 1], strides = [1, 1]} : vector<16x4xf32> to vector<16x1xf32>
    %1222 = vector.extract_strided_slice %1220 {offsets = [0, 0], sizes = [1, 256], strides = [1, 1]} : vector<4x256xf32> to vector<1x256xf32>
    %1223 = vector.broadcast %1221 : vector<16x1xf32> to vector<16x256xf32>
    %1224 = vector.broadcast %1222 : vector<1x256xf32> to vector<16x256xf32>
    %1225 = arith.mulf %1223, %1224 : vector<16x256xf32>
    %1226 = vector.extract_strided_slice %786 {offsets = [0, 1], sizes = [16, 1], strides = [1, 1]} : vector<16x4xf32> to vector<16x1xf32>
    %1227 = vector.extract_strided_slice %1220 {offsets = [1, 0], sizes = [1, 256], strides = [1, 1]} : vector<4x256xf32> to vector<1x256xf32>
    %1228 = vector.broadcast %1226 : vector<16x1xf32> to vector<16x256xf32>
    %1229 = vector.broadcast %1227 : vector<1x256xf32> to vector<16x256xf32>
    %1230 = arith.mulf %1228, %1229 : vector<16x256xf32>
    %1231 = arith.addf %1225, %1230 : vector<16x256xf32>
    %1232 = vector.extract_strided_slice %786 {offsets = [0, 2], sizes = [16, 1], strides = [1, 1]} : vector<16x4xf32> to vector<16x1xf32>
    %1233 = vector.extract_strided_slice %1220 {offsets = [2, 0], sizes = [1, 256], strides = [1, 1]} : vector<4x256xf32> to vector<1x256xf32>
    %1234 = vector.broadcast %1232 : vector<16x1xf32> to vector<16x256xf32>
    %1235 = vector.broadcast %1233 : vector<1x256xf32> to vector<16x256xf32>
    %1236 = arith.mulf %1234, %1235 : vector<16x256xf32>
    %1237 = arith.addf %1231, %1236 : vector<16x256xf32>
    %1238 = vector.extract_strided_slice %786 {offsets = [0, 3], sizes = [16, 1], strides = [1, 1]} : vector<16x4xf32> to vector<16x1xf32>
    %1239 = vector.extract_strided_slice %1220 {offsets = [3, 0], sizes = [1, 256], strides = [1, 1]} : vector<4x256xf32> to vector<1x256xf32>
    %1240 = vector.broadcast %1238 : vector<16x1xf32> to vector<16x256xf32>
    %1241 = vector.broadcast %1239 : vector<1x256xf32> to vector<16x256xf32>
    %1242 = arith.mulf %1240, %1241 : vector<16x256xf32>
    %1243 = arith.addf %1237, %1242 : vector<16x256xf32>
    %cst_252 = arith.constant 0.707106769 : f32
    %1244 = vector.broadcast %cst_252 : f32 to vector<16x256xf32>
    %1245 = arith.mulf %1243, %1244 : vector<16x256xf32>
    %1246 = math.absf %1245 : vector<16x256xf32>
    %cst_253 = arith.constant 0.327591091 : f32
    %1247 = vector.broadcast %cst_253 : f32 to vector<16x256xf32>
    %1248 = arith.mulf %1247, %1246 : vector<16x256xf32>
    %cst_254 = arith.constant 1.000000e+00 : f32
    %1249 = vector.broadcast %cst_254 : f32 to vector<16x256xf32>
    %1250 = arith.addf %1249, %1248 : vector<16x256xf32>
    %cst_255 = arith.constant 1.000000e+00 : f32
    %1251 = vector.broadcast %cst_255 : f32 to vector<16x256xf32>
    %1252 = arith.divf %1251, %1250 : vector<16x256xf32>
    %cst_256 = arith.constant 1.06140542 : f32
    %1253 = vector.broadcast %cst_256 : f32 to vector<16x256xf32>
    %1254 = arith.mulf %1253, %1252 : vector<16x256xf32>
    %cst_257 = arith.constant 1.45315206 : f32
    %1255 = vector.broadcast %cst_257 : f32 to vector<16x256xf32>
    %1256 = arith.subf %1254, %1255 : vector<16x256xf32>
    %1257 = arith.mulf %1256, %1252 : vector<16x256xf32>
    %cst_258 = arith.constant 1.42141378 : f32
    %1258 = vector.broadcast %cst_258 : f32 to vector<16x256xf32>
    %1259 = arith.addf %1257, %1258 : vector<16x256xf32>
    %1260 = arith.mulf %1259, %1252 : vector<16x256xf32>
    %cst_259 = arith.constant 0.284496725 : f32
    %1261 = vector.broadcast %cst_259 : f32 to vector<16x256xf32>
    %1262 = arith.subf %1260, %1261 : vector<16x256xf32>
    %1263 = arith.mulf %1262, %1252 : vector<16x256xf32>
    %cst_260 = arith.constant 0.254829586 : f32
    %1264 = vector.broadcast %cst_260 : f32 to vector<16x256xf32>
    %1265 = arith.addf %1263, %1264 : vector<16x256xf32>
    %1266 = arith.mulf %1265, %1252 : vector<16x256xf32>
    %cst_261 = arith.constant 0.000000e+00 : f32
    %1267 = vector.broadcast %cst_261 : f32 to vector<16x256xf32>
    %1268 = arith.subf %1267, %1246 : vector<16x256xf32>
    %1269 = arith.mulf %1268, %1246 : vector<16x256xf32>
    %1270 = math.exp %1269 : vector<16x256xf32>
    %1271 = arith.mulf %1266, %1270 : vector<16x256xf32>
    %cst_262 = arith.constant 1.000000e+00 : f32
    %1272 = vector.broadcast %cst_262 : f32 to vector<16x256xf32>
    %1273 = arith.subf %1272, %1271 : vector<16x256xf32>
    %cst_263 = arith.constant 0.000000e+00 : f32
    %1274 = vector.broadcast %cst_263 : f32 to vector<16x256xf32>
    %1275 = arith.cmpf oge, %1245, %1274 : vector<16x256xf32>
    %cst_264 = arith.constant 0.000000e+00 : f32
    %1276 = vector.broadcast %cst_264 : f32 to vector<16x256xf32>
    %1277 = arith.subf %1276, %1273 : vector<16x256xf32>
    %1278 = arith.select %1275, %1273, %1277 : vector<16x256xi1>, vector<16x256xf32>
    %cst_265 = arith.constant 5.000000e-01 : f32
    %1279 = vector.broadcast %cst_265 : f32 to vector<16x256xf32>
    %1280 = arith.mulf %1279, %1243 : vector<16x256xf32>
    %cst_266 = arith.constant 1.000000e+00 : f32
    %1281 = vector.broadcast %cst_266 : f32 to vector<16x256xf32>
    %1282 = arith.addf %1281, %1278 : vector<16x256xf32>
    %1283 = arith.mulf %1280, %1282 : vector<16x256xf32>
    %1284 = vector.extract_strided_slice %788 {offsets = [0, 4], sizes = [16, 1], strides = [1, 1]} : vector<16x9xf32> to vector<16x1xf32>
    %1285 = vector.broadcast %1284 : vector<16x1xf32> to vector<16x256xf32>
    %1286 = arith.mulf %1285, %1283 : vector<16x256xf32>
    %c17_i32_267 = arith.constant 17 : i32
    %1287 = tpu.dynamic_rotate %1283 by %c17_i32_267 dim 1 : vector<16x256xf32>, i32 -> vector<16x256xf32>
    %cst_268 = arith.constant 0.000000e+00 : f32
    %1288 = vector.shape_cast %27 : vector<1x256xi1> to vector<1x256xi1>
    %1289 = vector.broadcast %1288 : vector<1x256xi1> to vector<16x256xi1>
    %1290 = vector.broadcast %cst_268 : f32 to vector<16x256xf32>
    %1291 = arith.select %1289, %1287, %1290 : vector<16x256xi1>, vector<16x256xf32>
    %1292 = vector.extract_strided_slice %788 {offsets = [0, 0], sizes = [16, 1], strides = [1, 1]} : vector<16x9xf32> to vector<16x1xf32>
    %1293 = vector.broadcast %1292 : vector<16x1xf32> to vector<16x256xf32>
    %1294 = arith.mulf %1293, %1291 : vector<16x256xf32>
    %1295 = arith.addf %1286, %1294 : vector<16x256xf32>
    %c16_i32_269 = arith.constant 16 : i32
    %1296 = tpu.dynamic_rotate %1283 by %c16_i32_269 dim 1 : vector<16x256xf32>, i32 -> vector<16x256xf32>
    %cst_270 = arith.constant 0.000000e+00 : f32
    %1297 = vector.shape_cast %24 : vector<1x256xi1> to vector<1x256xi1>
    %1298 = vector.broadcast %1297 : vector<1x256xi1> to vector<16x256xi1>
    %1299 = vector.broadcast %cst_270 : f32 to vector<16x256xf32>
    %1300 = arith.select %1298, %1296, %1299 : vector<16x256xi1>, vector<16x256xf32>
    %1301 = vector.extract_strided_slice %788 {offsets = [0, 1], sizes = [16, 1], strides = [1, 1]} : vector<16x9xf32> to vector<16x1xf32>
    %1302 = vector.broadcast %1301 : vector<16x1xf32> to vector<16x256xf32>
    %1303 = arith.mulf %1302, %1300 : vector<16x256xf32>
    %1304 = arith.addf %1295, %1303 : vector<16x256xf32>
    %c15_i32_271 = arith.constant 15 : i32
    %1305 = tpu.dynamic_rotate %1283 by %c15_i32_271 dim 1 : vector<16x256xf32>, i32 -> vector<16x256xf32>
    %cst_272 = arith.constant 0.000000e+00 : f32
    %1306 = vector.shape_cast %28 : vector<1x256xi1> to vector<1x256xi1>
    %1307 = vector.broadcast %1306 : vector<1x256xi1> to vector<16x256xi1>
    %1308 = vector.broadcast %cst_272 : f32 to vector<16x256xf32>
    %1309 = arith.select %1307, %1305, %1308 : vector<16x256xi1>, vector<16x256xf32>
    %1310 = vector.extract_strided_slice %788 {offsets = [0, 2], sizes = [16, 1], strides = [1, 1]} : vector<16x9xf32> to vector<16x1xf32>
    %1311 = vector.broadcast %1310 : vector<16x1xf32> to vector<16x256xf32>
    %1312 = arith.mulf %1311, %1309 : vector<16x256xf32>
    %1313 = arith.addf %1304, %1312 : vector<16x256xf32>
    %c1_i32_273 = arith.constant 1 : i32
    %1314 = tpu.dynamic_rotate %1283 by %c1_i32_273 dim 1 : vector<16x256xf32>, i32 -> vector<16x256xf32>
    %cst_274 = arith.constant 0.000000e+00 : f32
    %1315 = vector.shape_cast %20 : vector<1x256xi1> to vector<1x256xi1>
    %1316 = vector.broadcast %1315 : vector<1x256xi1> to vector<16x256xi1>
    %1317 = vector.broadcast %cst_274 : f32 to vector<16x256xf32>
    %1318 = arith.select %1316, %1314, %1317 : vector<16x256xi1>, vector<16x256xf32>
    %1319 = vector.extract_strided_slice %788 {offsets = [0, 3], sizes = [16, 1], strides = [1, 1]} : vector<16x9xf32> to vector<16x1xf32>
    %1320 = vector.broadcast %1319 : vector<16x1xf32> to vector<16x256xf32>
    %1321 = arith.mulf %1320, %1318 : vector<16x256xf32>
    %1322 = arith.addf %1313, %1321 : vector<16x256xf32>
    %c255_i32_275 = arith.constant 255 : i32
    %1323 = tpu.dynamic_rotate %1283 by %c255_i32_275 dim 1 : vector<16x256xf32>, i32 -> vector<16x256xf32>
    %cst_276 = arith.constant 0.000000e+00 : f32
    %1324 = vector.shape_cast %22 : vector<1x256xi1> to vector<1x256xi1>
    %1325 = vector.broadcast %1324 : vector<1x256xi1> to vector<16x256xi1>
    %1326 = vector.broadcast %cst_276 : f32 to vector<16x256xf32>
    %1327 = arith.select %1325, %1323, %1326 : vector<16x256xi1>, vector<16x256xf32>
    %1328 = vector.extract_strided_slice %788 {offsets = [0, 5], sizes = [16, 1], strides = [1, 1]} : vector<16x9xf32> to vector<16x1xf32>
    %1329 = vector.broadcast %1328 : vector<16x1xf32> to vector<16x256xf32>
    %1330 = arith.mulf %1329, %1327 : vector<16x256xf32>
    %1331 = arith.addf %1322, %1330 : vector<16x256xf32>
    %c241_i32_277 = arith.constant 241 : i32
    %1332 = tpu.dynamic_rotate %1283 by %c241_i32_277 dim 1 : vector<16x256xf32>, i32 -> vector<16x256xf32>
    %cst_278 = arith.constant 0.000000e+00 : f32
    %1333 = vector.shape_cast %29 : vector<1x256xi1> to vector<1x256xi1>
    %1334 = vector.broadcast %1333 : vector<1x256xi1> to vector<16x256xi1>
    %1335 = vector.broadcast %cst_278 : f32 to vector<16x256xf32>
    %1336 = arith.select %1334, %1332, %1335 : vector<16x256xi1>, vector<16x256xf32>
    %1337 = vector.extract_strided_slice %788 {offsets = [0, 6], sizes = [16, 1], strides = [1, 1]} : vector<16x9xf32> to vector<16x1xf32>
    %1338 = vector.broadcast %1337 : vector<16x1xf32> to vector<16x256xf32>
    %1339 = arith.mulf %1338, %1336 : vector<16x256xf32>
    %1340 = arith.addf %1331, %1339 : vector<16x256xf32>
    %c240_i32_279 = arith.constant 240 : i32
    %1341 = tpu.dynamic_rotate %1283 by %c240_i32_279 dim 1 : vector<16x256xf32>, i32 -> vector<16x256xf32>
    %cst_280 = arith.constant 0.000000e+00 : f32
    %1342 = vector.shape_cast %26 : vector<1x256xi1> to vector<1x256xi1>
    %1343 = vector.broadcast %1342 : vector<1x256xi1> to vector<16x256xi1>
    %1344 = vector.broadcast %cst_280 : f32 to vector<16x256xf32>
    %1345 = arith.select %1343, %1341, %1344 : vector<16x256xi1>, vector<16x256xf32>
    %1346 = vector.extract_strided_slice %788 {offsets = [0, 7], sizes = [16, 1], strides = [1, 1]} : vector<16x9xf32> to vector<16x1xf32>
    %1347 = vector.broadcast %1346 : vector<16x1xf32> to vector<16x256xf32>
    %1348 = arith.mulf %1347, %1345 : vector<16x256xf32>
    %1349 = arith.addf %1340, %1348 : vector<16x256xf32>
    %c239_i32_281 = arith.constant 239 : i32
    %1350 = tpu.dynamic_rotate %1283 by %c239_i32_281 dim 1 : vector<16x256xf32>, i32 -> vector<16x256xf32>
    %cst_282 = arith.constant 0.000000e+00 : f32
    %1351 = vector.shape_cast %30 : vector<1x256xi1> to vector<1x256xi1>
    %1352 = vector.broadcast %1351 : vector<1x256xi1> to vector<16x256xi1>
    %1353 = vector.broadcast %cst_282 : f32 to vector<16x256xf32>
    %1354 = arith.select %1352, %1350, %1353 : vector<16x256xi1>, vector<16x256xf32>
    %1355 = vector.extract_strided_slice %788 {offsets = [0, 8], sizes = [16, 1], strides = [1, 1]} : vector<16x9xf32> to vector<16x1xf32>
    %1356 = vector.broadcast %1355 : vector<16x1xf32> to vector<16x256xf32>
    %1357 = arith.mulf %1356, %1354 : vector<16x256xf32>
    %1358 = arith.addf %1349, %1357 : vector<16x256xf32>
    %cst_283 = arith.constant 0.707106769 : f32
    %1359 = vector.broadcast %cst_283 : f32 to vector<16x256xf32>
    %1360 = arith.mulf %1358, %1359 : vector<16x256xf32>
    %1361 = math.absf %1360 : vector<16x256xf32>
    %cst_284 = arith.constant 0.327591091 : f32
    %1362 = vector.broadcast %cst_284 : f32 to vector<16x256xf32>
    %1363 = arith.mulf %1362, %1361 : vector<16x256xf32>
    %cst_285 = arith.constant 1.000000e+00 : f32
    %1364 = vector.broadcast %cst_285 : f32 to vector<16x256xf32>
    %1365 = arith.addf %1364, %1363 : vector<16x256xf32>
    %cst_286 = arith.constant 1.000000e+00 : f32
    %1366 = vector.broadcast %cst_286 : f32 to vector<16x256xf32>
    %1367 = arith.divf %1366, %1365 : vector<16x256xf32>
    %cst_287 = arith.constant 1.06140542 : f32
    %1368 = vector.broadcast %cst_287 : f32 to vector<16x256xf32>
    %1369 = arith.mulf %1368, %1367 : vector<16x256xf32>
    %cst_288 = arith.constant 1.45315206 : f32
    %1370 = vector.broadcast %cst_288 : f32 to vector<16x256xf32>
    %1371 = arith.subf %1369, %1370 : vector<16x256xf32>
    %1372 = arith.mulf %1371, %1367 : vector<16x256xf32>
    %cst_289 = arith.constant 1.42141378 : f32
    %1373 = vector.broadcast %cst_289 : f32 to vector<16x256xf32>
    %1374 = arith.addf %1372, %1373 : vector<16x256xf32>
    %1375 = arith.mulf %1374, %1367 : vector<16x256xf32>
    %cst_290 = arith.constant 0.284496725 : f32
    %1376 = vector.broadcast %cst_290 : f32 to vector<16x256xf32>
    %1377 = arith.subf %1375, %1376 : vector<16x256xf32>
    %1378 = arith.mulf %1377, %1367 : vector<16x256xf32>
    %cst_291 = arith.constant 0.254829586 : f32
    %1379 = vector.broadcast %cst_291 : f32 to vector<16x256xf32>
    %1380 = arith.addf %1378, %1379 : vector<16x256xf32>
    %1381 = arith.mulf %1380, %1367 : vector<16x256xf32>
    %cst_292 = arith.constant 0.000000e+00 : f32
    %1382 = vector.broadcast %cst_292 : f32 to vector<16x256xf32>
    %1383 = arith.subf %1382, %1361 : vector<16x256xf32>
    %1384 = arith.mulf %1383, %1361 : vector<16x256xf32>
    %1385 = math.exp %1384 : vector<16x256xf32>
    %1386 = arith.mulf %1381, %1385 : vector<16x256xf32>
    %cst_293 = arith.constant 1.000000e+00 : f32
    %1387 = vector.broadcast %cst_293 : f32 to vector<16x256xf32>
    %1388 = arith.subf %1387, %1386 : vector<16x256xf32>
    %cst_294 = arith.constant 0.000000e+00 : f32
    %1389 = vector.broadcast %cst_294 : f32 to vector<16x256xf32>
    %1390 = arith.cmpf oge, %1360, %1389 : vector<16x256xf32>
    %cst_295 = arith.constant 0.000000e+00 : f32
    %1391 = vector.broadcast %cst_295 : f32 to vector<16x256xf32>
    %1392 = arith.subf %1391, %1388 : vector<16x256xf32>
    %1393 = arith.select %1390, %1388, %1392 : vector<16x256xi1>, vector<16x256xf32>
    %cst_296 = arith.constant 5.000000e-01 : f32
    %1394 = vector.broadcast %cst_296 : f32 to vector<16x256xf32>
    %1395 = arith.mulf %1394, %1358 : vector<16x256xf32>
    %cst_297 = arith.constant 1.000000e+00 : f32
    %1396 = vector.broadcast %cst_297 : f32 to vector<16x256xf32>
    %1397 = arith.addf %1396, %1393 : vector<16x256xf32>
    %1398 = arith.mulf %1395, %1397 : vector<16x256xf32>
    %1399 = vector.extract_strided_slice %782 {offsets = [0, 0], sizes = [4, 1], strides = [1, 1]} : vector<4x16xf32> to vector<4x1xf32>
    %1400 = vector.extract_strided_slice %1398 {offsets = [0, 0], sizes = [1, 256], strides = [1, 1]} : vector<16x256xf32> to vector<1x256xf32>
    %1401 = vector.broadcast %1399 : vector<4x1xf32> to vector<4x256xf32>
    %1402 = vector.broadcast %1400 : vector<1x256xf32> to vector<4x256xf32>
    %1403 = arith.mulf %1401, %1402 : vector<4x256xf32>
    %1404 = vector.extract_strided_slice %782 {offsets = [0, 1], sizes = [4, 1], strides = [1, 1]} : vector<4x16xf32> to vector<4x1xf32>
    %1405 = vector.extract_strided_slice %1398 {offsets = [1, 0], sizes = [1, 256], strides = [1, 1]} : vector<16x256xf32> to vector<1x256xf32>
    %1406 = vector.broadcast %1404 : vector<4x1xf32> to vector<4x256xf32>
    %1407 = vector.broadcast %1405 : vector<1x256xf32> to vector<4x256xf32>
    %1408 = arith.mulf %1406, %1407 : vector<4x256xf32>
    %1409 = arith.addf %1403, %1408 : vector<4x256xf32>
    %1410 = vector.extract_strided_slice %782 {offsets = [0, 2], sizes = [4, 1], strides = [1, 1]} : vector<4x16xf32> to vector<4x1xf32>
    %1411 = vector.extract_strided_slice %1398 {offsets = [2, 0], sizes = [1, 256], strides = [1, 1]} : vector<16x256xf32> to vector<1x256xf32>
    %1412 = vector.broadcast %1410 : vector<4x1xf32> to vector<4x256xf32>
    %1413 = vector.broadcast %1411 : vector<1x256xf32> to vector<4x256xf32>
    %1414 = arith.mulf %1412, %1413 : vector<4x256xf32>
    %1415 = arith.addf %1409, %1414 : vector<4x256xf32>
    %1416 = vector.extract_strided_slice %782 {offsets = [0, 3], sizes = [4, 1], strides = [1, 1]} : vector<4x16xf32> to vector<4x1xf32>
    %1417 = vector.extract_strided_slice %1398 {offsets = [3, 0], sizes = [1, 256], strides = [1, 1]} : vector<16x256xf32> to vector<1x256xf32>
    %1418 = vector.broadcast %1416 : vector<4x1xf32> to vector<4x256xf32>
    %1419 = vector.broadcast %1417 : vector<1x256xf32> to vector<4x256xf32>
    %1420 = arith.mulf %1418, %1419 : vector<4x256xf32>
    %1421 = arith.addf %1415, %1420 : vector<4x256xf32>
    %1422 = vector.extract_strided_slice %782 {offsets = [0, 4], sizes = [4, 1], strides = [1, 1]} : vector<4x16xf32> to vector<4x1xf32>
    %1423 = vector.extract_strided_slice %1398 {offsets = [4, 0], sizes = [1, 256], strides = [1, 1]} : vector<16x256xf32> to vector<1x256xf32>
    %1424 = vector.broadcast %1422 : vector<4x1xf32> to vector<4x256xf32>
    %1425 = vector.broadcast %1423 : vector<1x256xf32> to vector<4x256xf32>
    %1426 = arith.mulf %1424, %1425 : vector<4x256xf32>
    %1427 = arith.addf %1421, %1426 : vector<4x256xf32>
    %1428 = vector.extract_strided_slice %782 {offsets = [0, 5], sizes = [4, 1], strides = [1, 1]} : vector<4x16xf32> to vector<4x1xf32>
    %1429 = vector.extract_strided_slice %1398 {offsets = [5, 0], sizes = [1, 256], strides = [1, 1]} : vector<16x256xf32> to vector<1x256xf32>
    %1430 = vector.broadcast %1428 : vector<4x1xf32> to vector<4x256xf32>
    %1431 = vector.broadcast %1429 : vector<1x256xf32> to vector<4x256xf32>
    %1432 = arith.mulf %1430, %1431 : vector<4x256xf32>
    %1433 = arith.addf %1427, %1432 : vector<4x256xf32>
    %1434 = vector.extract_strided_slice %782 {offsets = [0, 6], sizes = [4, 1], strides = [1, 1]} : vector<4x16xf32> to vector<4x1xf32>
    %1435 = vector.extract_strided_slice %1398 {offsets = [6, 0], sizes = [1, 256], strides = [1, 1]} : vector<16x256xf32> to vector<1x256xf32>
    %1436 = vector.broadcast %1434 : vector<4x1xf32> to vector<4x256xf32>
    %1437 = vector.broadcast %1435 : vector<1x256xf32> to vector<4x256xf32>
    %1438 = arith.mulf %1436, %1437 : vector<4x256xf32>
    %1439 = arith.addf %1433, %1438 : vector<4x256xf32>
    %1440 = vector.extract_strided_slice %782 {offsets = [0, 7], sizes = [4, 1], strides = [1, 1]} : vector<4x16xf32> to vector<4x1xf32>
    %1441 = vector.extract_strided_slice %1398 {offsets = [7, 0], sizes = [1, 256], strides = [1, 1]} : vector<16x256xf32> to vector<1x256xf32>
    %1442 = vector.broadcast %1440 : vector<4x1xf32> to vector<4x256xf32>
    %1443 = vector.broadcast %1441 : vector<1x256xf32> to vector<4x256xf32>
    %1444 = arith.mulf %1442, %1443 : vector<4x256xf32>
    %1445 = arith.addf %1439, %1444 : vector<4x256xf32>
    %1446 = vector.extract_strided_slice %782 {offsets = [0, 8], sizes = [4, 1], strides = [1, 1]} : vector<4x16xf32> to vector<4x1xf32>
    %1447 = vector.extract_strided_slice %1398 {offsets = [8, 0], sizes = [1, 256], strides = [1, 1]} : vector<16x256xf32> to vector<1x256xf32>
    %1448 = vector.broadcast %1446 : vector<4x1xf32> to vector<4x256xf32>
    %1449 = vector.broadcast %1447 : vector<1x256xf32> to vector<4x256xf32>
    %1450 = arith.mulf %1448, %1449 : vector<4x256xf32>
    %1451 = arith.addf %1445, %1450 : vector<4x256xf32>
    %1452 = vector.extract_strided_slice %782 {offsets = [0, 9], sizes = [4, 1], strides = [1, 1]} : vector<4x16xf32> to vector<4x1xf32>
    %1453 = vector.extract_strided_slice %1398 {offsets = [9, 0], sizes = [1, 256], strides = [1, 1]} : vector<16x256xf32> to vector<1x256xf32>
    %1454 = vector.broadcast %1452 : vector<4x1xf32> to vector<4x256xf32>
    %1455 = vector.broadcast %1453 : vector<1x256xf32> to vector<4x256xf32>
    %1456 = arith.mulf %1454, %1455 : vector<4x256xf32>
    %1457 = arith.addf %1451, %1456 : vector<4x256xf32>
    %1458 = vector.extract_strided_slice %782 {offsets = [0, 10], sizes = [4, 1], strides = [1, 1]} : vector<4x16xf32> to vector<4x1xf32>
    %1459 = vector.extract_strided_slice %1398 {offsets = [10, 0], sizes = [1, 256], strides = [1, 1]} : vector<16x256xf32> to vector<1x256xf32>
    %1460 = vector.broadcast %1458 : vector<4x1xf32> to vector<4x256xf32>
    %1461 = vector.broadcast %1459 : vector<1x256xf32> to vector<4x256xf32>
    %1462 = arith.mulf %1460, %1461 : vector<4x256xf32>
    %1463 = arith.addf %1457, %1462 : vector<4x256xf32>
    %1464 = vector.extract_strided_slice %782 {offsets = [0, 11], sizes = [4, 1], strides = [1, 1]} : vector<4x16xf32> to vector<4x1xf32>
    %1465 = vector.extract_strided_slice %1398 {offsets = [11, 0], sizes = [1, 256], strides = [1, 1]} : vector<16x256xf32> to vector<1x256xf32>
    %1466 = vector.broadcast %1464 : vector<4x1xf32> to vector<4x256xf32>
    %1467 = vector.broadcast %1465 : vector<1x256xf32> to vector<4x256xf32>
    %1468 = arith.mulf %1466, %1467 : vector<4x256xf32>
    %1469 = arith.addf %1463, %1468 : vector<4x256xf32>
    %1470 = vector.extract_strided_slice %782 {offsets = [0, 12], sizes = [4, 1], strides = [1, 1]} : vector<4x16xf32> to vector<4x1xf32>
    %1471 = vector.extract_strided_slice %1398 {offsets = [12, 0], sizes = [1, 256], strides = [1, 1]} : vector<16x256xf32> to vector<1x256xf32>
    %1472 = vector.broadcast %1470 : vector<4x1xf32> to vector<4x256xf32>
    %1473 = vector.broadcast %1471 : vector<1x256xf32> to vector<4x256xf32>
    %1474 = arith.mulf %1472, %1473 : vector<4x256xf32>
    %1475 = arith.addf %1469, %1474 : vector<4x256xf32>
    %1476 = vector.extract_strided_slice %782 {offsets = [0, 13], sizes = [4, 1], strides = [1, 1]} : vector<4x16xf32> to vector<4x1xf32>
    %1477 = vector.extract_strided_slice %1398 {offsets = [13, 0], sizes = [1, 256], strides = [1, 1]} : vector<16x256xf32> to vector<1x256xf32>
    %1478 = vector.broadcast %1476 : vector<4x1xf32> to vector<4x256xf32>
    %1479 = vector.broadcast %1477 : vector<1x256xf32> to vector<4x256xf32>
    %1480 = arith.mulf %1478, %1479 : vector<4x256xf32>
    %1481 = arith.addf %1475, %1480 : vector<4x256xf32>
    %1482 = vector.extract_strided_slice %782 {offsets = [0, 14], sizes = [4, 1], strides = [1, 1]} : vector<4x16xf32> to vector<4x1xf32>
    %1483 = vector.extract_strided_slice %1398 {offsets = [14, 0], sizes = [1, 256], strides = [1, 1]} : vector<16x256xf32> to vector<1x256xf32>
    %1484 = vector.broadcast %1482 : vector<4x1xf32> to vector<4x256xf32>
    %1485 = vector.broadcast %1483 : vector<1x256xf32> to vector<4x256xf32>
    %1486 = arith.mulf %1484, %1485 : vector<4x256xf32>
    %1487 = arith.addf %1481, %1486 : vector<4x256xf32>
    %1488 = vector.extract_strided_slice %782 {offsets = [0, 15], sizes = [4, 1], strides = [1, 1]} : vector<4x16xf32> to vector<4x1xf32>
    %1489 = vector.extract_strided_slice %1398 {offsets = [15, 0], sizes = [1, 256], strides = [1, 1]} : vector<16x256xf32> to vector<1x256xf32>
    %1490 = vector.broadcast %1488 : vector<4x1xf32> to vector<4x256xf32>
    %1491 = vector.broadcast %1489 : vector<1x256xf32> to vector<4x256xf32>
    %1492 = arith.mulf %1490, %1491 : vector<4x256xf32>
    %1493 = arith.addf %1487, %1492 : vector<4x256xf32>
    %1494 = arith.addf %1196, %1493 : vector<4x256xf32>
    %c0_298 = arith.constant 0 : index
    %c0_299 = arith.constant 0 : index
    %c0_300 = arith.constant 0 : index
    %1495 = vector.load %arg4[%c0_298, %c0_299, %c0_300] : memref<1x4x256xf32, #tpu.memory_space<vmem>>, vector<1x4x256xf32>
    %1496 = vector.shape_cast %1495 : vector<1x4x256xf32> to vector<4x256xf32>
    %1497 = vector.shape_cast %1494 : vector<4x256xf32> to vector<1x4x256xf32>
    tpu.vector_store %arg4[%c0_298, %c0_299, %c0_300], %1497 {strides = array<i32>} : memref<1x4x256xf32, #tpu.memory_space<vmem>>, vector<1x4x256xf32>,
    return
  }
  func.func @transform_0(%arg0: i32) -> (i32, i32, i32) {
    %c0_i32 = arith.constant 0 : i32
    %c0_i32_0 = arith.constant 0 : i32
    %c0_i32_1 = arith.constant 0 : i32
    return %arg0, %c0_i32, %c0_i32_0 : i32, i32, i32
  }
  func.func @transform_1(%arg0: i32) -> (i32, i32, i32) {
    %c0_i32 = arith.constant 0 : i32
    %c0_i32_0 = arith.constant 0 : i32
    %c0_i32_1 = arith.constant 0 : i32
    %c0_i32_2 = arith.constant 0 : i32
    return %c0_i32, %c0_i32_0, %c0_i32_1 : i32, i32, i32
  }
  func.func @transform_2(%arg0: i32) -> (i32, i32, i32) {
    %c0_i32 = arith.constant 0 : i32
    %c0_i32_0 = arith.constant 0 : i32
    %c0_i32_1 = arith.constant 0 : i32
    %c0_i32_2 = arith.constant 0 : i32
    return %c0_i32, %c0_i32_0, %c0_i32_1 : i32, i32, i32
  }
  func.func @transform_3(%arg0: i32) -> (i32, i32, i32) {
    %c0_i32 = arith.constant 0 : i32
    %c0_i32_0 = arith.constant 0 : i32
    %c0_i32_1 = arith.constant 0 : i32
    return %arg0, %c0_i32, %c0_i32_0 : i32, i32, i32
  }
}

</mosaic_0001>

<llo_original>
// kernel: spectral_ab.1
$region0: #{spectral_ab.1}
  #allocation0 [shape = 'u32[]', space=smem, size = 0x4, offset = 0x4, fixed_abs, tag = 'smem constant byte address 0x4 - core index']
  #allocation1 [shape = 'u32[144,128]{1,0:T(1,128)}', space=vmem, size = 0x12000, scoped, tag = 'internal scratch']
  %s0 = inlined_call_operand.vmem [shape: f32[2,4,256], index: 0, kind: input, shape index: {}]
  %s1 = inlined_call_operand.vmem [shape: f32[2,4,54], index: 1, kind: input, shape index: {}]
  %s2 = inlined_call_operand.vmem [shape: f32[2,16,13], index: 2, kind: input, shape index: {}]
  %s3 = inlined_call_operand.vmem [shape: f32[2,4,256], index: 3, kind: output, shape index: {}]
  %s4 = sld [smem:[#allocation0]]
  $region45: #{spectral_ab.1} parent=0
    _
  %s6 = ssub.s32 1, %s4
  %s7 = scalar_select 0, %s6, %s4
  loop: start=0, step=1, limit=4
  $region2: #{spectral_ab.1} parent=0 // loop_pre_header
    _
  $region3: #{spectral_ab.1} parent=0 // loop_header
    %s9 = sphi 0, %s13
    %p10 = scmp.ge.s32.totalorder %s9, 4
    %s19 = sphi 0, %s21
    %s22 = sphi 0, %s19
    %s23 = sphi 0, %s22
    %s39 = sphi 0, %s23
    %s43 = sphi 0, %s43
    %s45 = sphi 0, %s43
    %s46 = sphi 0, %s45
    %s60 = sphi 0, %s46
    %s64 = sphi 0, %s64
    %s66 = sphi 0, %s64
    %s67 = sphi 0, %s66
    %s81 = sphi 0, %s67
    %s87 = sphi 0, %s89
    %s90 = sphi 0, %s87
    %s91 = sphi 0, %s90
    %s107 = sphi 0, %s91
  $region4: #{spectral_ab.1} parent=0 // loop_header_branch
    %12 = sbr.rel (%p10) target = $region8
  $region5: #{spectral_ab.1} parent=0 // loop_body
    %s14 = ssub.s32 %s9, 1
    %s15 = ssub.s32 %s9, 2
    %s16 = sadd.s32 %s9, 1
    %s17 = ssub.s32 %s9, %s16
    %p18 = scmp.eq.s32.totalorder %s17, 0
    %s20 = sadd.s32 %s19, 1
    %s21 = scalar_select %p18, %s19, %s20
    %p24 = pneg %p18
    %p25 = scmp.eq.s32.totalorder %s9, 1
    %p26 = por %p24, %p25
    %p27 = scmp.ne.s32.totalorder %s19, %s22
    %p28 = scmp.eq.s32.totalorder %s9, 0
    %p29 = por %p27, %p28
    %p30 = scmp.ne.s32.totalorder %s19, %s22
    %p31 = scmp.eq.s32.totalorder %s14, 1
    %p32 = por %p30, %p31
    %p33 = scmp.ne.s32.totalorder %s22, %s23
    %p34 = scmp.eq.s32.totalorder %s14, 0
    %p35 = por %p33, %p34
    %p36 = scmp.ne.s32.totalorder %s22, %s23
    %p37 = scmp.eq.s32.totalorder %s15, 1
    %p38 = por %p36, %p37
    %p40 = scmp.ne.s32.totalorder %s23, %s39
    %p41 = scmp.eq.s32.totalorder %s15, 0
    %p42 = por %p40, %p41
    %s44 = sadd.s32 %s43, 1
    %p47 = scmp.eq.s32.totalorder %s9, 1
    %p48 = scmp.ne.s32.totalorder %s43, %s45
    %p49 = scmp.eq.s32.totalorder %s9, 0
    %p50 = por %p48, %p49
    %p51 = scmp.ne.s32.totalorder %s43, %s45
    %p52 = scmp.eq.s32.totalorder %s14, 1
    %p53 = por %p51, %p52
    %p54 = scmp.ne.s32.totalorder %s45, %s46
    %p55 = scmp.eq.s32.totalorder %s14, 0
    %p56 = por %p54, %p55
    %p57 = scmp.ne.s32.totalorder %s45, %s46
    %p58 = scmp.eq.s32.totalorder %s15, 1
    %p59 = por %p57, %p58
    %p61 = scmp.ne.s32.totalorder %s46, %s60
    %p62 = scmp.eq.s32.totalorder %s15, 0
    %p63 = por %p61, %p62
    %s65 = sadd.s32 %s64, 1
    %p68 = scmp.eq.s32.totalorder %s9, 1
    %p69 = scmp.ne.s32.totalorder %s64, %s66
    %p70 = scmp.eq.s32.totalorder %s9, 0
    %p71 = por %p69, %p70
    %p72 = scmp.ne.s32.totalorder %s64, %s66
    %p73 = scmp.eq.s32.totalorder %s14, 1
    %p74 = por %p72, %p73
    %p75 = scmp.ne.s32.totalorder %s66, %s67
    %p76 = scmp.eq.s32.totalorder %s14, 0
    %p77 = por %p75, %p76
    %p78 = scmp.ne.s32.totalorder %s66, %s67
    %p79 = scmp.eq.s32.totalorder %s15, 1
    %p80 = por %p78, %p79
    %p82 = scmp.ne.s32.totalorder %s67, %s81
    %p83 = scmp.eq.s32.totalorder %s15, 0
    %p84 = por %p82, %p83
    %s85 = ssub.s32 %s9, %s16
    %p86 = scmp.eq.s32.totalorder %s85, 0
    %s88 = sadd.s32 %s87, 1
    %s89 = scalar_select %p86, %s87, %s88
    %p92 = pneg %p86
    %p93 = scmp.eq.s32.totalorder %s9, 1
    %p94 = por %p92, %p93
    %p95 = scmp.ne.s32.totalorder %s87, %s90
    %p96 = scmp.eq.s32.totalorder %s9, 0
    %p97 = por %p95, %p96
    %p98 = scmp.ne.s32.totalorder %s87, %s90
    %p99 = scmp.eq.s32.totalorder %s14, 1
    %p100 = por %p98, %p99
    %p101 = scmp.ne.s32.totalorder %s90, %s91
    %p102 = scmp.eq.s32.totalorder %s14, 0
    %p103 = por %p101, %p102
    %p104 = scmp.ne.s32.totalorder %s90, %s91
    %p105 = scmp.eq.s32.totalorder %s15, 1
    %p106 = por %p104, %p105
    %p108 = scmp.ne.s32.totalorder %s91, %s107
    %p109 = scmp.eq.s32.totalorder %s15, 0
    %p110 = por %p108, %p109
    %p111 = scmp.le.s32.totalorder 1, %s9
    %p112 = scmp.lt.s32.totalorder %s9, 3
    %p113 = pnand %p111, %p112
    %p114 = pneg %p113
    // Predicated region
    $region9: #{spectral_ab.1} parent=5 // pred_check
      _
    $region10: #{spectral_ab.1} parent=5 // pred_check_branch
      %116 = sbr.rel (%p113) target = $region12
    $region11: #{spectral_ab.1} parent=5 // pred_region
      %s117 = ssub.s32 %s9, 1
      // Predicated region
      $region13: #{spectral_ab.1} parent=11 // pred_check
        %p118 = pneg %p56
      $region14: #{spectral_ab.1} parent=11 // pred_check_branch
        %120 = sbr.rel (%p118) target = $region16
      $region15: #{spectral_ab.1} parent=11 // pred_region
        _
      $region16: #{spectral_ab.1} parent=11 // pred_fallthru
        _
      // Predicated region
      $region17: #{spectral_ab.1} parent=11 // pred_check
        %p121 = pneg %p77
      $region18: #{spectral_ab.1} parent=11 // pred_check_branch
        %123 = sbr.rel (%p121) target = $region20
      $region19: #{spectral_ab.1} parent=11 // pred_region
        _
      $region20: #{spectral_ab.1} parent=11 // pred_fallthru
        _
    $region12: #{spectral_ab.1} parent=5 // pred_fallthru
      _
    %p124 = scmp.lt.s32.totalorder %s9, 2
    // Predicated region
    $region21: #{spectral_ab.1} parent=5 // pred_check
      %p125 = pneg %p124
    $region22: #{spectral_ab.1} parent=5 // pred_check_branch
      %127 = sbr.rel (%p125) target = $region24
    $region23: #{spectral_ab.1} parent=5 // pred_region
      // Predicated region
      $region25: #{spectral_ab.1} parent=23 // pred_check
        %p128 = pneg %p29
      $region26: #{spectral_ab.1} parent=23 // pred_check_branch
        %130 = sbr.rel (%p128) target = $region28
      $region27: #{spectral_ab.1} parent=23 // pred_region
        %p131 = scmp.lt.s32.totalorder %s9, 1
        %s132 = scalar_select %p131, %s9, 1
        %s133 = smul.addr %s132, 2
        %s134 = smul.addr %s133, 4
        %s135 = scalar_lea.vmem %s0, %s134
      $region28: #{spectral_ab.1} parent=23 // pred_fallthru
        _
    $region24: #{spectral_ab.1} parent=5 // pred_fallthru
      _
    %p136 = scmp.le.s32.totalorder 1, %s9
    %p137 = scmp.lt.s32.totalorder %s9, 3
    %p138 = pnand %p136, %p137
    %p139 = pneg %p138
    // Predicated region
    $region29: #{spectral_ab.1} parent=5 // pred_check
      _
    $region30: #{spectral_ab.1} parent=5 // pred_check_branch
      %141 = sbr.rel (%p138) target = $region32
    $region31: #{spectral_ab.1} parent=5 // pred_region
      %s142 = ssub.s32 %s9, 1
      %p143 = scmp.lt.s32.totalorder %s14, 1
      %s144 = scalar_select %p143, %s14, 1
      %s145 = smul.addr %s144, 2
      %s146 = smul.addr %s145, 4
      %s147 = scalar_lea.vmem %s0, %s146
      %p148 = pneg %p35
      %p149 = pneg %p32
      %p150 = pneg %p56
      %p151 = pneg %p53
      %p152 = pneg %p77
      %p153 = pneg %p74
      %p154 = pneg %p103
      %p155 = pneg %p100
      %p156 = scmp.lt.s32.totalorder %s14, 1
      %s157 = scalar_select %p156, %s14, 1
      %s158 = smul.addr %s157, 2
      %s159 = smul.addr %s158, 4
      %s160 = scalar_lea.vmem %s3, %s159
      %p161 = scmp.lt.s32.totalorder %s14, 1
      %s162 = scalar_select %p161, %s14, 1
      %s163 = smul.addr %s162, 2
      %s164 = smul.addr %s163, 4
      %s165 = scalar_lea.vmem %s0, %s164
      %p166 = scmp.lt.s32.totalorder %s14, 1
      %s167 = scalar_select %p166, %s14, 1
      %s168 = smul.addr %s167, 2
      %s169 = smul.addr %s168, 4
      %s170 = scalar_lea.vmem %s3, %s169
      %v171 = vld [vmem:[%s165] sm:$0xff]
      %v172 = vlaneseq
      %v173 = vand.u32 %v172, 127
      %v174 = vadd.s32 %v173, 128
      %vm175 = vcmp.lt.s32.totalorder %v173, 0
      %v176 = vsub.s32 0, %v173
      %v177 = vsel %vm175, %v176, %v173
      %v178 = vshrl.u32 %v177, 4
      %v179 = vand.u32 %v177, 15
      %v180 = vsub.s32 0, %v179
      %v181 = vsel %vm175, %v180, %v179
      %vm182 = vcmp.lt.s32.totalorder %v174, 0
      %v183 = vsub.s32 0, %v174
      %v184 = vsel %vm182, %v183, %v174
      %v185 = vshrl.u32 %v184, 4
      %v186 = vand.u32 %v184, 15
      %v187 = vsub.s32 0, %v186
      %v188 = vsel %vm182, %v187, %v186
      %vm189 = vcmp.ne.s32.totalorder %v181, 0
      %vm190 = vcmp.ne.s32.totalorder %v188, 0
      %vm191 = vcmp.lt.s32.totalorder %v181, 0
      %vm192 = vcmp.lt.s32.totalorder %v188, 0
      %vm193 = vmand %vm191, %vm189
      %vm194 = vmand %vm192, %vm190
      %v195 = vadd.s32 %v181, 16
      %v196 = vadd.s32 %v188, 16
      %v197 = vsel %vm193, %v195, %v181
      %v198 = vsel %vm194, %v196, %v188
      %vm199 = vcmp.ge.s32.totalorder %v197, 1
      %vm200 = vcmp.ge.s32.totalorder %v198, 1
      %vm201 = vcmp.le.s32.totalorder %v197, 14
      %vm202 = vcmp.le.s32.totalorder %v198, 14
      %vm203 = vcmp.ge.s32.totalorder %v173, 16
      %vm204 = vcmp.ge.s32.totalorder %v174, 16
      %vm205 = vcmp.lt.s32.totalorder %v173, 240
      %vm206 = vcmp.lt.s32.totalorder %v174, 240
      %vm207 = vmand %vm203, %vm199
      %vm208 = vmand %vm204, %vm200
      %vm209 = vmand %vm203, %vm201
      %vm210 = vmand %vm204, %vm202
      %vm211 = vmand %vm205, %vm199
      %vm212 = vmand %vm206, %vm200
      %vm213 = vmand %vm205, %vm201
      %vm214 = vmand %vm206, %vm202
      %v215 = vld [vmem:[%s1] sm:$0xf]
      %v216 = vld [vmem:[%s1] sm:$0x3]
      %v217 = vld [vmem:[%s2] sm:$0xff]
      %v218 = vld [vmem:[%s2 + $0x8] sm:$0xff]
      %220 = vset.pattern.permute.xlu0 0
      %221 = vperm.xlu0 %220, %v215
      %v222 = vpop.permute.xlu0 %221
      %v225 = vlaneseq
      %v226 = vshrl.u32 %v225, 7
      %v227 = vsub.s32 0, %v226
      %v228 = vrot.slane %v171, %v227
      %v229 = vlaneseq
      %v230 = vshrl.u32 %v229, 7
      %v231 = vsub.s32 4, %v230
      %v232 = vrot.slane %v171, %v231
      %v235 = vlaneseq
      %v236 = vshrl.u32 %v235, 7
      %v237 = vsub.s32 0, %v236
      %v238 = vrot.slane %v228, %v237
      %v239 = vlaneseq
      %v240 = vshrl.u32 %v239, 7
      %v241 = vsub.s32 0, %v240
      %v242 = vrot.slane %v232, %v241
      %v243 = vmul.f32 %v222, %v238
      %v244 = vmul.f32 %v222, %v242
      %245 = vset.pattern.permute.xlu0 1
      %246 = vperm.xlu0 %245, %v215
      %v247 = vpop.permute.xlu0 %246
      %v249 = vlaneseq
      %v250 = vshrl.u32 %v249, 7
      %v251 = vsub.s32 1, %v250
      %v252 = vrot.slane %v171, %v251
      %v253 = vlaneseq
      %v254 = vshrl.u32 %v253, 7
      %v255 = vsub.s32 5, %v254
      %v256 = vrot.slane %v171, %v255
      %v259 = vlaneseq
      %v260 = vshrl.u32 %v259, 7
      %v261 = vsub.s32 1, %v260
      %v262 = vrot.slane %v252, %v261
      %v263 = vlaneseq
      %v264 = vshrl.u32 %v263, 7
      %v265 = vsub.s32 1, %v264
      %v266 = vrot.slane %v256, %v265
      %v267 = vmul.f32 %v247, %v262
      %v268 = vmul.f32 %v247, %v266
      %v269 = vadd.f32 %v243, %v267
      %v270 = vadd.f32 %v244, %v268
      %271 = vset.pattern.permute.xlu0 2
      %272 = vperm.xlu0 %271, %v215
      %v273 = vpop.permute.xlu0 %272
      %v275 = vlaneseq
      %v276 = vshrl.u32 %v275, 7
      %v277 = vsub.s32 2, %v276
      %v278 = vrot.slane %v171, %v277
      %v279 = vlaneseq
      %v280 = vshrl.u32 %v279, 7
      %v281 = vsub.s32 6, %v280
      %v282 = vrot.slane %v171, %v281
      %v285 = vlaneseq
      %v286 = vshrl.u32 %v285, 7
      %v287 = vsub.s32 2, %v286
      %v288 = vrot.slane %v278, %v287
      %v289 = vlaneseq
      %v290 = vshrl.u32 %v289, 7
      %v291 = vsub.s32 2, %v290
      %v292 = vrot.slane %v282, %v291
      %v293 = vmul.f32 %v273, %v288
      %v294 = vmul.f32 %v273, %v292
      %v295 = vadd.f32 %v269, %v293
      %v296 = vadd.f32 %v270, %v294
      %297 = vset.pattern.permute.xlu0 3
      %298 = vperm.xlu0 %297, %v215
      %v299 = vpop.permute.xlu0 %298
      %v301 = vlaneseq
      %v302 = vshrl.u32 %v301, 7
      %v303 = vsub.s32 3, %v302
      %v304 = vrot.slane %v171, %v303
      %v305 = vlaneseq
      %v306 = vshrl.u32 %v305, 7
      %v307 = vsub.s32 7, %v306
      %v308 = vrot.slane %v171, %v307
      %v311 = vlaneseq
      %v312 = vshrl.u32 %v311, 7
      %v313 = vsub.s32 3, %v312
      %v314 = vrot.slane %v304, %v313
      %v315 = vlaneseq
      %v316 = vshrl.u32 %v315, 7
      %v317 = vsub.s32 3, %v316
      %v318 = vrot.slane %v308, %v317
      %v319 = vmul.f32 %v299, %v314
      %v320 = vmul.f32 %v299, %v318
      %v321 = vadd.f32 %v295, %v319
      %v322 = vadd.f32 %v296, %v320
      %323 = vset.pattern.permute.xlu0 4
      %324 = vperm.xlu0 %323, %v215
      %v325 = vpop.permute.xlu0 %324
      %v327 = vmul.f32 %v325, %v238
      %v328 = vmul.f32 %v325, %v242
      %329 = vset.pattern.permute.xlu0 5
      %330 = vperm.xlu0 %329, %v215
      %v331 = vpop.permute.xlu0 %330
      %v333 = vmul.f32 %v331, %v262
      %v334 = vmul.f32 %v331, %v266
      %v335 = vadd.f32 %v327, %v333
      %v336 = vadd.f32 %v328, %v334
      %337 = vset.pattern.permute.xlu0 6
      %338 = vperm.xlu0 %337, %v215
      %v339 = vpop.permute.xlu0 %338
      %v341 = vmul.f32 %v339, %v288
      %v342 = vmul.f32 %v339, %v292
      %v343 = vadd.f32 %v335, %v341
      %v344 = vadd.f32 %v336, %v342
      %345 = vset.pattern.permute.xlu0 7
      %346 = vperm.xlu0 %345, %v215
      %v347 = vpop.permute.xlu0 %346
      %v349 = vmul.f32 %v347, %v314
      %v350 = vmul.f32 %v347, %v318
      %v351 = vadd.f32 %v343, %v349
      %v352 = vadd.f32 %v344, %v350
      %353 = vset.pattern.permute.xlu0 8
      %354 = vperm.xlu0 %353, %v215
      %v355 = vpop.permute.xlu0 %354
      %v357 = vmul.f32 %v355, %v238
      %v358 = vmul.f32 %v355, %v242
      %359 = vset.pattern.permute.xlu0 9
      %360 = vperm.xlu0 %359, %v215
      %v361 = vpop.permute.xlu0 %360
      %v363 = vmul.f32 %v361, %v262
      %v364 = vmul.f32 %v361, %v266
      %v365 = vadd.f32 %v357, %v363
      %v366 = vadd.f32 %v358, %v364
      %367 = vset.pattern.permute.xlu0 10
      %368 = vperm.xlu0 %367, %v215
      %v369 = vpop.permute.xlu0 %368
      %v371 = vmul.f32 %v369, %v288
      %v372 = vmul.f32 %v369, %v292
      %v373 = vadd.f32 %v365, %v371
      %v374 = vadd.f32 %v366, %v372
      %375 = vset.pattern.permute.xlu0 11
      %376 = vperm.xlu0 %375, %v215
      %v377 = vpop.permute.xlu0 %376
      %v379 = vmul.f32 %v377, %v314
      %v380 = vmul.f32 %v377, %v318
      %v381 = vadd.f32 %v373, %v379
      %v382 = vadd.f32 %v374, %v380
      %v383 = vmul.f32 %v321, %v321
      %v384 = vmul.f32 %v322, %v322
      %vm385 = vcmask 1043456
      %v386 = vsel %vm385, %v383, 0.0
      %v387 = vsel %vm385, %v384, 0.0
      %v388 = vadd.f32 %v386, %v387
      %389 = vadd.xlane.f32.xlu0 %v388
      %v390 = vpop.xlane.xlu0 %389
      %v391 = vmax.f32 %v390, 1e-24
      %v392 = vrsqrt.pop %v391
      %v393 = vmul.f32 %v321, %v392
      %v394 = vmul.f32 %v322, %v392
      %v395 = vmul.f32 %v351, %v351
      %v396 = vmul.f32 %v352, %v352
      %v397 = vsel %vm385, %v395, 0.0
      %v398 = vsel %vm385, %v396, 0.0
      %v399 = vadd.f32 %v397, %v398
      %400 = vadd.xlane.f32.xlu0 %v399
      %v401 = vpop.xlane.xlu0 %400
      %v402 = vmax.f32 %v401, 1e-24
      %v403 = vrsqrt.pop %v402
      %v404 = vmul.f32 %v351, %v403
      %v405 = vmul.f32 %v352, %v403
      %v406 = vlaneseq
      %v407 = vshrl.u32 %v406, 7
      %v408 = vsub.s32 0, %v407
      %v409 = vrot.slane %v404, %v408
      %v410 = vlaneseq
      %v411 = vshrl.u32 %v410, 7
      %v412 = vsub.s32 0, %v411
      %v413 = vrot.slane %v405, %v412
      %v414 = vmul.f32 %v409, %v393
      %v415 = vmul.f32 %v413, %v394
      %vm416 = vcmask 1041408
      %v417 = vsel %vm416, %v414, 0.0
      %v418 = vsel %vm416, %v415, 0.0
      %v419 = vadd.f32 %v417, %v418
      %420 = vadd.xlane.f32.xlu0 %v419
      %v421 = vpop.xlane.xlu0 %420
      %v422 = vlaneseq
      %v423 = vshrl.u32 %v422, 7
      %v424 = vsub.s32 0, %v423
      %v425 = vrot.slane %v216, %v424
      %v426 = vmul.f32 %v421, %v425
      %vm427 = vcmask 435624
      %v428 = vsel %vm427, %v426, -inf
      %v429 = vrot.slane %v428, 4
      %v430 = vmax.f32 %v428, %v429
      %v431 = vrot.slane %v430, 2
      %v432 = vmax.f32 %v430, %v431
      %v433 = vrot.slane %v432, 1
      %v434 = vmax.f32 %v432, %v433
      %v435 = vsub.f32 %v426, %v434
      %v436 = vmul.f32 %v435, 1.442695
      %v437 = vpow.pop %v436
      %v438 = vsel %vm427, %v437, 0.0
      %v439 = vrot.slane %v438, 4
      %v440 = vadd.f32 %v438, %v439
      %v441 = vrot.slane %v440, 2
      %v442 = vadd.f32 %v440, %v441
      %v443 = vrot.slane %v442, 1
      %v444 = vadd.f32 %v442, %v443
      %v445 = vrcp.pop %v444
      %v446 = vmul.f32 %v437, %v445
      %448 = vset.pattern.permute.xlu0 53
      %449 = vperm.xlu0 %448, %v446
      %v450 = vpop.permute.xlu0 %449
      %v452 = vmul.f32 %v450, %v381
      %v453 = vmul.f32 %v450, %v382
      %v456 = vrot.slane %v452, 1
      %v457 = vrot.slane %v453, 1
      %v460 = vadd.f32 %v452, %v456
      %v461 = vadd.f32 %v453, %v457
      %462 = vset.pattern.permute.xlu0 12
      %463 = vperm.xlu0 %462, %v215
      %v464 = vpop.permute.xlu0 %463
      %v466 = vlaneseq
      %v467 = vshrl.u32 %v466, 7
      %v468 = vsub.s32 0, %v467
      %v469 = vrot.slane %v460, %v468
      %v470 = vlaneseq
      %v471 = vshrl.u32 %v470, 7
      %v472 = vsub.s32 0, %v471
      %v473 = vrot.slane %v461, %v472
      %v474 = vmul.f32 %v464, %v469
      %v475 = vmul.f32 %v464, %v473
      %v476 = vadd.f32 %v474, 0.0
      %v477 = vadd.f32 %v475, 0.0
      %v478 = vlaneseq
      %v479 = vshrl.u32 %v478, 7
      %v480 = vsub.s32 1, %v479
      %v481 = vrot.slane %v404, %v480
      %v482 = vlaneseq
      %v483 = vshrl.u32 %v482, 7
      %v484 = vsub.s32 1, %v483
      %v485 = vrot.slane %v405, %v484
      %v486 = vmul.f32 %v481, %v393
      %v487 = vmul.f32 %v485, %v394
      %v488 = vsel %vm416, %v486, 0.0
      %v489 = vsel %vm416, %v487, 0.0
      %v490 = vadd.f32 %v488, %v489
      %491 = vadd.xlane.f32.xlu0 %v490
      %v492 = vpop.xlane.xlu0 %491
      %v493 = vmul.f32 %v492, %v425
      %v494 = vsel %vm427, %v493, -inf
      %v495 = vrot.slane %v494, 4
      %v496 = vmax.f32 %v494, %v495
      %v497 = vrot.slane %v496, 2
      %v498 = vmax.f32 %v496, %v497
      %v499 = vrot.slane %v498, 1
      %v500 = vmax.f32 %v498, %v499
      %v501 = vsub.f32 %v493, %v500
      %v502 = vmul.f32 %v501, 1.442695
      %v503 = vpow.pop %v502
      %v504 = vsel %vm427, %v503, 0.0
      %v505 = vrot.slane %v504, 4
      %v506 = vadd.f32 %v504, %v505
      %v507 = vrot.slane %v506, 2
      %v508 = vadd.f32 %v506, %v507
      %v509 = vrot.slane %v508, 1
      %v510 = vadd.f32 %v508, %v509
      %v511 = vrcp.pop %v510
      %v512 = vmul.f32 %v503, %v511
      %514 = vset.pattern.permute.xlu0 53
      %515 = vperm.xlu0 %514, %v512
      %v516 = vpop.permute.xlu0 %515
      %v518 = vmul.f32 %v516, %v381
      %v519 = vmul.f32 %v516, %v382
      %v522 = vrot.slane %v518, 1
      %v523 = vrot.slane %v519, 1
      %v526 = vadd.f32 %v518, %v522
      %v527 = vadd.f32 %v519, %v523
      %528 = vset.pattern.permute.xlu0 13
      %529 = vperm.xlu0 %528, %v215
      %v530 = vpop.permute.xlu0 %529
      %v532 = vlaneseq
      %v533 = vshrl.u32 %v532, 7
      %v534 = vsub.s32 0, %v533
      %v535 = vrot.slane %v526, %v534
      %v536 = vlaneseq
      %v537 = vshrl.u32 %v536, 7
      %v538 = vsub.s32 0, %v537
      %v539 = vrot.slane %v527, %v538
      %v540 = vmul.f32 %v530, %v535
      %v541 = vmul.f32 %v530, %v539
      %v542 = vadd.f32 %v476, %v540
      %v543 = vadd.f32 %v477, %v541
      %v544 = vlaneseq
      %v545 = vshrl.u32 %v544, 7
      %v546 = vsub.s32 2, %v545
      %v547 = vrot.slane %v404, %v546
      %v548 = vlaneseq
      %v549 = vshrl.u32 %v548, 7
      %v550 = vsub.s32 2, %v549
      %v551 = vrot.slane %v405, %v550
      %v552 = vmul.f32 %v547, %v393
      %v553 = vmul.f32 %v551, %v394
      %vm554 = vcmask 1043458
      %v555 = vsel %vm554, %v552, 0.0
      %v556 = vsel %vm554, %v553, 0.0
      %v557 = vadd.f32 %v555, %v556
      %558 = vadd.xlane.f32.xlu0 %v557
      %v559 = vpop.xlane.xlu0 %558
      %v560 = vlaneseq
      %v561 = vshrl.u32 %v560, 7
      %v562 = vsub.s32 1, %v561
      %v563 = vrot.slane %v216, %v562
      %v564 = vmul.f32 %v559, %v563
      %vm565 = vcmask 437674
      %v566 = vsel %vm565, %v564, -inf
      %v567 = vrot.slane %v566, 4
      %v568 = vmax.f32 %v566, %v567
      %v569 = vrot.slane %v568, 2
      %v570 = vmax.f32 %v568, %v569
      %v571 = vrot.slane %v570, 1
      %v572 = vmax.f32 %v570, %v571
      %v573 = vsub.f32 %v564, %v572
      %v574 = vmul.f32 %v573, 1.442695
      %v575 = vpow.pop %v574
      %v577 = vrot.slane %v575, 2
      %v579 = vsel %vm427, %v577, 0.0
      %v580 = vrot.slane %v579, 4
      %v581 = vadd.f32 %v579, %v580
      %v582 = vrot.slane %v581, 2
      %v583 = vadd.f32 %v581, %v582
      %v584 = vrot.slane %v583, 1
      %v585 = vadd.f32 %v583, %v584
      %v586 = vrcp.pop %v585
      %v587 = vmul.f32 %v575, %v586
      %589 = vset.pattern.permute.xlu0 53
      %590 = vperm.xlu0 %589, %v587
      %v591 = vpop.permute.xlu0 %590
      %v593 = vmul.f32 %v591, %v381
      %v594 = vmul.f32 %v591, %v382
      %v597 = vrot.slane %v593, 1
      %v598 = vrot.slane %v594, 1
      %v601 = vadd.f32 %v593, %v597
      %v602 = vadd.f32 %v594, %v598
      %603 = vset.pattern.permute.xlu0 14
      %604 = vperm.xlu0 %603, %v215
      %v605 = vpop.permute.xlu0 %604
      %v607 = vlaneseq
      %v608 = vshrl.u32 %v607, 7
      %v609 = vsub.s32 2, %v608
      %v610 = vrot.slane %v601, %v609
      %v611 = vlaneseq
      %v612 = vshrl.u32 %v611, 7
      %v613 = vsub.s32 2, %v612
      %v614 = vrot.slane %v602, %v613
      %v615 = vmul.f32 %v605, %v610
      %v616 = vmul.f32 %v605, %v614
      %v617 = vadd.f32 %v542, %v615
      %v618 = vadd.f32 %v543, %v616
      %v619 = vlaneseq
      %v620 = vshrl.u32 %v619, 7
      %v621 = vsub.s32 3, %v620
      %v622 = vrot.slane %v404, %v621
      %v623 = vlaneseq
      %v624 = vshrl.u32 %v623, 7
      %v625 = vsub.s32 3, %v624
      %v626 = vrot.slane %v405, %v625
      %v627 = vmul.f32 %v622, %v393
      %v628 = vmul.f32 %v626, %v394
      %v629 = vsel %vm554, %v627, 0.0
      %v630 = vsel %vm554, %v628, 0.0
      %v631 = vadd.f32 %v629, %v630
      %632 = vadd.xlane.f32.xlu0 %v631
      %v633 = vpop.xlane.xlu0 %632
      %v634 = vmul.f32 %v633, %v563
      %v635 = vsel %vm565, %v634, -inf
      %v636 = vrot.slane %v635, 4
      %v637 = vmax.f32 %v635, %v636
      %v638 = vrot.slane %v637, 2
      %v639 = vmax.f32 %v637, %v638
      %v640 = vrot.slane %v639, 1
      %v641 = vmax.f32 %v639, %v640
      %v642 = vsub.f32 %v634, %v641
      %v643 = vmul.f32 %v642, 1.442695
      %v644 = vpow.pop %v643
      %v646 = vrot.slane %v644, 2
      %v648 = vsel %vm427, %v646, 0.0
      %v649 = vrot.slane %v648, 4
      %v650 = vadd.f32 %v648, %v649
      %v651 = vrot.slane %v650, 2
      %v652 = vadd.f32 %v650, %v651
      %v653 = vrot.slane %v652, 1
      %v654 = vadd.f32 %v652, %v653
      %v655 = vrcp.pop %v654
      %v656 = vmul.f32 %v644, %v655
      %658 = vset.pattern.permute.xlu0 53
      %659 = vperm.xlu0 %658, %v656
      %v660 = vpop.permute.xlu0 %659
      %v662 = vmul.f32 %v660, %v381
      %v663 = vmul.f32 %v660, %v382
      %v666 = vrot.slane %v662, 1
      %v667 = vrot.slane %v663, 1
      %v670 = vadd.f32 %v662, %v666
      %v671 = vadd.f32 %v663, %v667
      %672 = vset.pattern.permute.xlu0 15
      %673 = vperm.xlu0 %672, %v215
      %v674 = vpop.permute.xlu0 %673
      %v676 = vlaneseq
      %v677 = vshrl.u32 %v676, 7
      %v678 = vsub.s32 2, %v677
      %v679 = vrot.slane %v670, %v678
      %v680 = vlaneseq
      %v681 = vshrl.u32 %v680, 7
      %v682 = vsub.s32 2, %v681
      %v683 = vrot.slane %v671, %v682
      %v684 = vmul.f32 %v674, %v679
      %v685 = vmul.f32 %v674, %v683
      %v686 = vadd.f32 %v617, %v684
      %v687 = vadd.f32 %v618, %v685
      %688 = vset.pattern.permute.xlu0 16
      %689 = vperm.xlu0 %688, %v215
      %v690 = vpop.permute.xlu0 %689
      %v692 = vadd.f32 %v686, %v690
      %v693 = vadd.f32 %v687, %v690
      %694 = vset.pattern.permute.xlu0 21
      %695 = vperm.xlu0 %694, %v215
      %v696 = vpop.permute.xlu0 %695
      %v698 = vmul.f32 %v696, %v381
      %v699 = vmul.f32 %v696, %v382
      %700 = vrot.lane.b32.xlu0 %v381, 17
      %v701 = vpop.permute.xlu0 %700
      %702 = vrot.lane.b32.xlu0 %v382, 17
      %v703 = vpop.permute.xlu0 %702
      %vm704 = vcmp.lt.s32.totalorder %v173, 17
      %v705 = vsel %vm704, %v701, %v703
      %v706 = vsel %vm704, %v703, %v701
      %v707 = vsel %vm207, 1, 0
      %v708 = vsel %vm208, 1, 0
      %vm709 = vcmp.eq.s32.totalorder %v707, 1
      %vm710 = vcmp.eq.s32.totalorder %v708, 1
      %v711 = vsel %vm709, %v706, 0.0
      %v712 = vsel %vm710, %v705, 0.0
      %713 = vset.pattern.permute.xlu0 17
      %714 = vperm.xlu0 %713, %v215
      %v715 = vpop.permute.xlu0 %714
      %v717 = vmul.f32 %v715, %v711
      %v718 = vmul.f32 %v715, %v712
      %v719 = vadd.f32 %v698, %v717
      %v720 = vadd.f32 %v699, %v718
      %721 = vrot.lane.b32.xlu0 %v381, 16
      %v722 = vpop.permute.xlu0 %721
      %723 = vrot.lane.b32.xlu0 %v382, 16
      %v724 = vpop.permute.xlu0 %723
      %vm725 = vcmp.lt.s32.totalorder %v173, 16
      %v726 = vsel %vm725, %v722, %v724
      %v727 = vsel %vm725, %v724, %v722
      %v728 = vsel %vm203, 1, 0
      %v729 = vsel %vm204, 1, 0
      %vm730 = vcmp.eq.s32.totalorder %v728, 1
      %vm731 = vcmp.eq.s32.totalorder %v729, 1
      %v732 = vsel %vm730, %v727, 0.0
      %v733 = vsel %vm731, %v726, 0.0
      %734 = vset.pattern.permute.xlu0 18
      %735 = vperm.xlu0 %734, %v215
      %v736 = vpop.permute.xlu0 %735
      %v738 = vmul.f32 %v736, %v732
      %v739 = vmul.f32 %v736, %v733
      %v740 = vadd.f32 %v719, %v738
      %v741 = vadd.f32 %v720, %v739
      %742 = vrot.lane.b32.xlu0 %v381, 15
      %v743 = vpop.permute.xlu0 %742
      %744 = vrot.lane.b32.xlu0 %v382, 15
      %v745 = vpop.permute.xlu0 %744
      %vm746 = vcmp.lt.s32.totalorder %v173, 15
      %v747 = vsel %vm746, %v743, %v745
      %v748 = vsel %vm746, %v745, %v743
      %v749 = vsel %vm209, 1, 0
      %v750 = vsel %vm210, 1, 0
      %vm751 = vcmp.eq.s32.totalorder %v749, 1
      %vm752 = vcmp.eq.s32.totalorder %v750, 1
      %v753 = vsel %vm751, %v748, 0.0
      %v754 = vsel %vm752, %v747, 0.0
      %755 = vset.pattern.permute.xlu0 19
      %756 = vperm.xlu0 %755, %v215
      %v757 = vpop.permute.xlu0 %756
      %v759 = vmul.f32 %v757, %v753
      %v760 = vmul.f32 %v757, %v754
      %v761 = vadd.f32 %v740, %v759
      %v762 = vadd.f32 %v741, %v760
      %763 = vrot.lane.b32.xlu0 %v381, 1
      %v764 = vpop.permute.xlu0 %763
      %765 = vrot.lane.b32.xlu0 %v382, 1
      %v766 = vpop.permute.xlu0 %765
      %vm767 = vcmp.lt.s32.totalorder %v173, 1
      %v768 = vsel %vm767, %v764, %v766
      %v769 = vsel %vm767, %v766, %v764
      %v770 = vsel %vm199, 1, 0
      %v771 = vsel %vm200, 1, 0
      %vm772 = vcmp.eq.s32.totalorder %v770, 1
      %vm773 = vcmp.eq.s32.totalorder %v771, 1
      %v774 = vsel %vm772, %v769, 0.0
      %v775 = vsel %vm773, %v768, 0.0
      %776 = vset.pattern.permute.xlu0 20
      %777 = vperm.xlu0 %776, %v215
      %v778 = vpop.permute.xlu0 %777
      %v780 = vmul.f32 %v778, %v774
      %v781 = vmul.f32 %v778, %v775
      %v782 = vadd.f32 %v761, %v780
      %v783 = vadd.f32 %v762, %v781
      %784 = vrot.lane.b32.xlu0 %v381, 127
      %v785 = vpop.permute.xlu0 %784
      %786 = vrot.lane.b32.xlu0 %v382, 127
      %v787 = vpop.permute.xlu0 %786
      %vm788 = vcmp.lt.s32.totalorder %v173, 127
      %v789 = vsel %vm788, %v785, %v787
      %v790 = vsel %vm788, %v787, %v785
      %v791 = vsel %vm201, 1, 0
      %v792 = vsel %vm202, 1, 0
      %vm793 = vcmp.eq.s32.totalorder %v791, 1
      %vm794 = vcmp.eq.s32.totalorder %v792, 1
      %v795 = vsel %vm793, %v789, 0.0
      %v796 = vsel %vm794, %v790, 0.0
      %797 = vset.pattern.permute.xlu0 22
      %798 = vperm.xlu0 %797, %v215
      %v799 = vpop.permute.xlu0 %798
      %v801 = vmul.f32 %v799, %v795
      %v802 = vmul.f32 %v799, %v796
      %v803 = vadd.f32 %v782, %v801
      %v804 = vadd.f32 %v783, %v802
      %805 = vrot.lane.b32.xlu0 %v381, 113
      %v806 = vpop.permute.xlu0 %805
      %807 = vrot.lane.b32.xlu0 %v382, 113
      %v808 = vpop.permute.xlu0 %807
      %vm809 = vcmp.lt.s32.totalorder %v173, 113
      %v810 = vsel %vm809, %v806, %v808
      %v811 = vsel %vm809, %v808, %v806
      %v812 = vsel %vm211, 1, 0
      %v813 = vsel %vm212, 1, 0
      %vm814 = vcmp.eq.s32.totalorder %v812, 1
      %vm815 = vcmp.eq.s32.totalorder %v813, 1
      %v816 = vsel %vm814, %v810, 0.0
      %v817 = vsel %vm815, %v811, 0.0
      %818 = vset.pattern.permute.xlu0 23
      %819 = vperm.xlu0 %818, %v215
      %v820 = vpop.permute.xlu0 %819
      %v822 = vmul.f32 %v820, %v816
      %v823 = vmul.f32 %v820, %v817
      %v824 = vadd.f32 %v803, %v822
      %v825 = vadd.f32 %v804, %v823
      %826 = vrot.lane.b32.xlu0 %v381, 112
      %v827 = vpop.permute.xlu0 %826
      %828 = vrot.lane.b32.xlu0 %v382, 112
      %v829 = vpop.permute.xlu0 %828
      %vm830 = vcmp.lt.s32.totalorder %v173, 112
      %v831 = vsel %vm830, %v827, %v829
      %v832 = vsel %vm830, %v829, %v827
      %v833 = vsel %vm205, 1, 0
      %v834 = vsel %vm206, 1, 0
      %vm835 = vcmp.eq.s32.totalorder %v833, 1
      %vm836 = vcmp.eq.s32.totalorder %v834, 1
      %v837 = vsel %vm835, %v831, 0.0
      %v838 = vsel %vm836, %v832, 0.0
      %839 = vset.pattern.permute.xlu0 24
      %840 = vperm.xlu0 %839, %v215
      %v841 = vpop.permute.xlu0 %840
      %v843 = vmul.f32 %v841, %v837
      %v844 = vmul.f32 %v841, %v838
      %v845 = vadd.f32 %v824, %v843
      %v846 = vadd.f32 %v825, %v844
      %847 = vrot.lane.b32.xlu0 %v381, 111
      %v848 = vpop.permute.xlu0 %847
      %849 = vrot.lane.b32.xlu0 %v382, 111
      %v850 = vpop.permute.xlu0 %849
      %vm851 = vcmp.lt.s32.totalorder %v173, 111
      %v852 = vsel %vm851, %v848, %v850
      %v853 = vsel %vm851, %v850, %v848
      %v854 = vsel %vm213, 1, 0
      %v855 = vsel %vm214, 1, 0
      %vm856 = vcmp.eq.s32.totalorder %v854, 1
      %vm857 = vcmp.eq.s32.totalorder %v855, 1
      %v858 = vsel %vm856, %v852, 0.0
      %v859 = vsel %vm857, %v853, 0.0
      %860 = vset.pattern.permute.xlu0 25
      %861 = vperm.xlu0 %860, %v215
      %v862 = vpop.permute.xlu0 %861
      %v864 = vmul.f32 %v862, %v858
      %v865 = vmul.f32 %v862, %v859
      %v866 = vadd.f32 %v845, %v864
      %v867 = vadd.f32 %v846, %v865
      %v868 = vmul.f32 %v866, 0.70710677
      %v869 = vmul.f32 %v867, 0.70710677
      %v870 = vand.u32 2147483647, %v868
      %v871 = vand.u32 2147483647, %v869
      %v872 = vmul.f32 %v870, 0.3275911
      %v873 = vmul.f32 %v871, 0.3275911
      %v874 = vadd.f32 %v872, 1.0
      %v875 = vadd.f32 %v873, 1.0
      %v876 = vrcp.pop %v874
      %v877 = vmul.f32 1.0, %v876
      %v878 = vrcp.pop %v875
      %v879 = vmul.f32 1.0, %v878
      %v880 = vmul.f32 %v877, 1.0614054
      %v881 = vmul.f32 %v879, 1.0614054
      %v882 = vsub.f32 %v880, 1.4531521
      %v883 = vsub.f32 %v881, 1.4531521
      %v884 = vmul.f32 %v882, %v877
      %v885 = vmul.f32 %v883, %v879
      %v886 = vadd.f32 %v884, 1.4214138
      %v887 = vadd.f32 %v885, 1.4214138
      %v888 = vmul.f32 %v886, %v877
      %v889 = vmul.f32 %v887, %v879
      %v890 = vsub.f32 %v888, 0.28449672
      %v891 = vsub.f32 %v889, 0.28449672
      %v892 = vmul.f32 %v890, %v877
      %v893 = vmul.f32 %v891, %v879
      %v894 = vadd.f32 %v892, 0.2548296
      %v895 = vadd.f32 %v893, 0.2548296
      %v896 = vmul.f32 %v894, %v877
      %v897 = vmul.f32 %v895, %v879
      %v898 = vsub.f32 0.0, %v870
      %v899 = vsub.f32 0.0, %v871
      %v900 = vmul.f32 %v898, %v870
      %v901 = vmul.f32 %v899, %v871
      %v902 = vmul.f32 %v900, 1.442695
      %v903 = vpow.pop %v902
      %v904 = vmul.f32 %v901, 1.442695
      %v905 = vpow.pop %v904
      %v906 = vmul.f32 %v896, %v903
      %v907 = vmul.f32 %v897, %v905
      %v908 = vsub.f32 1.0, %v906
      %v909 = vsub.f32 1.0, %v907
      %vm910 = vcmp.ge.f32.partialorder %v868, 0.0
      %vm911 = vcmp.ge.f32.partialorder %v869, 0.0
      %v912 = vsub.f32 0.0, %v908
      %v913 = vsub.f32 0.0, %v909
      %v914 = vsel %vm910, %v908, %v912
      %v915 = vsel %vm911, %v909, %v913
      %v916 = vmul.f32 %v866, 0.5
      %v917 = vmul.f32 %v867, 0.5
      %v918 = vadd.f32 %v914, 1.0
      %v919 = vadd.f32 %v915, 1.0
      %v920 = vmul.f32 %v916, %v918
      %v921 = vmul.f32 %v917, %v919
      %922 = vset.pattern.permute.xlu0 30
      %923 = vperm.xlu0 %922, %v215
      %v924 = vpop.permute.xlu0 %923
      %v926 = vmul.f32 %v924, %v920
      %v927 = vmul.f32 %v924, %v921
      %928 = vrot.lane.b32.xlu0 %v920, 17
      %v929 = vpop.permute.xlu0 %928
      %930 = vrot.lane.b32.xlu0 %v921, 17
      %v931 = vpop.permute.xlu0 %930
      %v932 = vsel %vm704, %v929, %v931
      %v933 = vsel %vm704, %v931, %v929
      %v934 = vsel %vm709, %v933, 0.0
      %v935 = vsel %vm710, %v932, 0.0
      %936 = vset.pattern.permute.xlu0 26
      %937 = vperm.xlu0 %936, %v215
      %v938 = vpop.permute.xlu0 %937
      %v940 = vmul.f32 %v938, %v934
      %v941 = vmul.f32 %v938, %v935
      %v942 = vadd.f32 %v926, %v940
      %v943 = vadd.f32 %v927, %v941
      %944 = vrot.lane.b32.xlu0 %v920, 16
      %v945 = vpop.permute.xlu0 %944
      %946 = vrot.lane.b32.xlu0 %v921, 16
      %v947 = vpop.permute.xlu0 %946
      %v948 = vsel %vm725, %v945, %v947
      %v949 = vsel %vm725, %v947, %v945
      %v950 = vsel %vm730, %v949, 0.0
      %v951 = vsel %vm731, %v948, 0.0
      %952 = vset.pattern.permute.xlu0 27
      %953 = vperm.xlu0 %952, %v215
      %v954 = vpop.permute.xlu0 %953
      %v956 = vmul.f32 %v954, %v950
      %v957 = vmul.f32 %v954, %v951
      %v958 = vadd.f32 %v942, %v956
      %v959 = vadd.f32 %v943, %v957
      %960 = vrot.lane.b32.xlu0 %v920, 15
      %v961 = vpop.permute.xlu0 %960
      %962 = vrot.lane.b32.xlu0 %v921, 15
      %v963 = vpop.permute.xlu0 %962
      %v964 = vsel %vm746, %v961, %v963
      %v965 = vsel %vm746, %v963, %v961
      %v966 = vsel %vm751, %v965, 0.0
      %v967 = vsel %vm752, %v964, 0.0
      %968 = vset.pattern.permute.xlu0 28
      %969 = vperm.xlu0 %968, %v215
      %v970 = vpop.permute.xlu0 %969
      %v972 = vmul.f32 %v970, %v966
      %v973 = vmul.f32 %v970, %v967
      %v974 = vadd.f32 %v958, %v972
      %v975 = vadd.f32 %v959, %v973
      %976 = vrot.lane.b32.xlu0 %v920, 1
      %v977 = vpop.permute.xlu0 %976
      %978 = vrot.lane.b32.xlu0 %v921, 1
      %v979 = vpop.permute.xlu0 %978
      %v980 = vsel %vm767, %v977, %v979
      %v981 = vsel %vm767, %v979, %v977
      %v982 = vsel %vm772, %v981, 0.0
      %v983 = vsel %vm773, %v980, 0.0
      %984 = vset.pattern.permute.xlu0 29
      %985 = vperm.xlu0 %984, %v215
      %v986 = vpop.permute.xlu0 %985
      %v988 = vmul.f32 %v986, %v982
      %v989 = vmul.f32 %v986, %v983
      %v990 = vadd.f32 %v974, %v988
      %v991 = vadd.f32 %v975, %v989
      %992 = vrot.lane.b32.xlu0 %v920, 127
      %v993 = vpop.permute.xlu0 %992
      %994 = vrot.lane.b32.xlu0 %v921, 127
      %v995 = vpop.permute.xlu0 %994
      %v996 = vsel %vm788, %v993, %v995
      %v997 = vsel %vm788, %v995, %v993
      %v998 = vsel %vm793, %v996, 0.0
      %v999 = vsel %vm794, %v997, 0.0
      %1000 = vset.pattern.permute.xlu0 31
      %1001 = vperm.xlu0 %1000, %v215
      %v1002 = vpop.permute.xlu0 %1001
      %v1004 = vmul.f32 %v1002, %v998
      %v1005 = vmul.f32 %v1002, %v999
      %v1006 = vadd.f32 %v990, %v1004
      %v1007 = vadd.f32 %v991, %v1005
      %1008 = vrot.lane.b32.xlu0 %v920, 113
      %v1009 = vpop.permute.xlu0 %1008
      %1010 = vrot.lane.b32.xlu0 %v921, 113
      %v1011 = vpop.permute.xlu0 %1010
      %v1012 = vsel %vm809, %v1009, %v1011
      %v1013 = vsel %vm809, %v1011, %v1009
      %v1014 = vsel %vm814, %v1012, 0.0
      %v1015 = vsel %vm815, %v1013, 0.0
      %1016 = vset.pattern.permute.xlu0 32
      %1017 = vperm.xlu0 %1016, %v215
      %v1018 = vpop.permute.xlu0 %1017
      %v1020 = vmul.f32 %v1018, %v1014
      %v1021 = vmul.f32 %v1018, %v1015
      %v1022 = vadd.f32 %v1006, %v1020
      %v1023 = vadd.f32 %v1007, %v1021
      %1024 = vrot.lane.b32.xlu0 %v920, 112
      %v1025 = vpop.permute.xlu0 %1024
      %1026 = vrot.lane.b32.xlu0 %v921, 112
      %v1027 = vpop.permute.xlu0 %1026
      %v1028 = vsel %vm830, %v1025, %v1027
      %v1029 = vsel %vm830, %v1027, %v1025
      %v1030 = vsel %vm835, %v1028, 0.0
      %v1031 = vsel %vm836, %v1029, 0.0
      %1032 = vset.pattern.permute.xlu0 33
      %1033 = vperm.xlu0 %1032, %v215
      %v1034 = vpop.permute.xlu0 %1033
      %v1036 = vmul.f32 %v1034, %v1030
      %v1037 = vmul.f32 %v1034, %v1031
      %v1038 = vadd.f32 %v1022, %v1036
      %v1039 = vadd.f32 %v1023, %v1037
      %1040 = vrot.lane.b32.xlu0 %v920, 111
      %v1041 = vpop.permute.xlu0 %1040
      %1042 = vrot.lane.b32.xlu0 %v921, 111
      %v1043 = vpop.permute.xlu0 %1042
      %v1044 = vsel %vm851, %v1041, %v1043
      %v1045 = vsel %vm851, %v1043, %v1041
      %v1046 = vsel %vm856, %v1044, 0.0
      %v1047 = vsel %vm857, %v1045, 0.0
      %1048 = vset.pattern.permute.xlu0 34
      %1049 = vperm.xlu0 %1048, %v215
      %v1050 = vpop.permute.xlu0 %1049
      %v1052 = vmul.f32 %v1050, %v1046
      %v1053 = vmul.f32 %v1050, %v1047
      %v1054 = vadd.f32 %v1038, %v1052
      %v1055 = vadd.f32 %v1039, %v1053
      %v1056 = vadd.f32 %v692, %v1054
      %v1057 = vadd.f32 %v693, %v1055
      %v1058 = vcombine.high %v171, %v171
      %v1060 = vadd.f32 %v1056, %v171
      %v1061 = vadd.f32 %v1057, %v1058
      %v1062 = vsel %vm385, %v1060, 0.0
      %v1063 = vrot.slane %v1062, 4
      %v1064 = vadd.f32 %v1062, %v1063
      %v1065 = vrot.slane %v1064, 2
      %v1066 = vadd.f32 %v1064, %v1065
      %v1067 = vrot.slane %v1066, 1
      %v1068 = vadd.f32 %v1066, %v1067
      %v1069 = vsel %vm385, %v1061, 0.0
      %v1070 = vrot.slane %v1069, 4
      %v1071 = vadd.f32 %v1069, %v1070
      %v1072 = vrot.slane %v1071, 2
      %v1073 = vadd.f32 %v1071, %v1072
      %v1074 = vrot.slane %v1073, 1
      %v1075 = vadd.f32 %v1073, %v1074
      %v1076 = vrcp.pop 4.0
      %v1077 = vmul.f32 %v1068, %v1076
      %v1078 = vmul.f32 %v1075, %v1076
      %v1079 = vsub.f32 %v1060, %v1077
      %v1080 = vsub.f32 %v1061, %v1078
      %v1081 = vmul.f32 %v1079, %v1079
      %v1082 = vmul.f32 %v1080, %v1080
      %v1083 = vsel %vm385, %v1081, 0.0
      %v1084 = vrot.slane %v1083, 4
      %v1085 = vadd.f32 %v1083, %v1084
      %v1086 = vrot.slane %v1085, 2
      %v1087 = vadd.f32 %v1085, %v1086
      %v1088 = vrot.slane %v1087, 1
      %v1089 = vadd.f32 %v1087, %v1088
      %v1090 = vsel %vm385, %v1082, 0.0
      %v1091 = vrot.slane %v1090, 4
      %v1092 = vadd.f32 %v1090, %v1091
      %v1093 = vrot.slane %v1092, 2
      %v1094 = vadd.f32 %v1092, %v1093
      %v1095 = vrot.slane %v1094, 1
      %v1096 = vadd.f32 %v1094, %v1095
      %v1097 = vmul.f32 %v1089, %v1076
      %v1098 = vmul.f32 %v1096, %v1076
      %v1099 = vadd.f32 %v1097, 1e-05
      %v1100 = vadd.f32 %v1098, 1e-05
      %v1101 = vrsqrt.pop %v1099
      %v1102 = vrsqrt.pop %v1100
      %v1103 = vmul.f32 %v1079, %v1101
      %v1104 = vmul.f32 %v1080, %v1102
      %1105 = vset.pattern.permute.xlu0 35
      %1106 = vperm.xlu0 %1105, %v215
      %v1107 = vpop.permute.xlu0 %1106
      %v1109 = vmul.f32 %v1103, %v1107
      %v1110 = vmul.f32 %v1104, %v1107
      %1111 = vset.pattern.permute.xlu0 36
      %1112 = vperm.xlu0 %1111, %v215
      %v1113 = vpop.permute.xlu0 %1112
      %v1115 = vadd.f32 %v1109, %v1113
      %v1116 = vadd.f32 %v1110, %v1113
      %1118 = vset.pattern.permute.xlu0 0
      %1119 = vperm.xlu0 %1118, %v217
      %v1120 = vpop.permute.xlu0 %1119
      %1123 = vset.pattern.permute.xlu0 0
      %1124 = vperm.xlu0 %1123, %v218
      %v1125 = vpop.permute.xlu0 %1124
      %v1127 = vlaneseq
      %v1128 = vshrl.u32 %v1127, 7
      %v1129 = vsub.s32 0, %v1128
      %v1130 = vrot.slane %v1115, %v1129
      %v1131 = vlaneseq
      %v1132 = vshrl.u32 %v1131, 7
      %v1133 = vsub.s32 0, %v1132
      %v1134 = vrot.slane %v1116, %v1133
      %v1135 = vmul.f32 %v1120, %v1130
      %v1136 = vmul.f32 %v1120, %v1134
      %v1137 = vmul.f32 %v1125, %v1130
      %v1138 = vmul.f32 %v1125, %v1134
      %1139 = vset.pattern.permute.xlu0 1
      %1140 = vperm.xlu0 %1139, %v217
      %v1141 = vpop.permute.xlu0 %1140
      %1143 = vset.pattern.permute.xlu0 1
      %1144 = vperm.xlu0 %1143, %v218
      %v1145 = vpop.permute.xlu0 %1144
      %v1147 = vlaneseq
      %v1148 = vshrl.u32 %v1147, 7
      %v1149 = vsub.s32 1, %v1148
      %v1150 = vrot.slane %v1115, %v1149
      %v1151 = vlaneseq
      %v1152 = vshrl.u32 %v1151, 7
      %v1153 = vsub.s32 1, %v1152
      %v1154 = vrot.slane %v1116, %v1153
      %v1155 = vmul.f32 %v1141, %v1150
      %v1156 = vmul.f32 %v1141, %v1154
      %v1157 = vmul.f32 %v1145, %v1150
      %v1158 = vmul.f32 %v1145, %v1154
      %v1159 = vadd.f32 %v1135, %v1155
      %v1160 = vadd.f32 %v1136, %v1156
      %v1161 = vadd.f32 %v1137, %v1157
      %v1162 = vadd.f32 %v1138, %v1158
      %1163 = vset.pattern.permute.xlu0 2
      %1164 = vperm.xlu0 %1163, %v217
      %v1165 = vpop.permute.xlu0 %1164
      %1167 = vset.pattern.permute.xlu0 2
      %1168 = vperm.xlu0 %1167, %v218
      %v1169 = vpop.permute.xlu0 %1168
      %v1171 = vlaneseq
      %v1172 = vshrl.u32 %v1171, 7
      %v1173 = vsub.s32 2, %v1172
      %v1174 = vrot.slane %v1115, %v1173
      %v1175 = vlaneseq
      %v1176 = vshrl.u32 %v1175, 7
      %v1177 = vsub.s32 2, %v1176
      %v1178 = vrot.slane %v1116, %v1177
      %v1179 = vmul.f32 %v1165, %v1174
      %v1180 = vmul.f32 %v1165, %v1178
      %v1181 = vmul.f32 %v1169, %v1174
      %v1182 = vmul.f32 %v1169, %v1178
      %v1183 = vadd.f32 %v1159, %v1179
      %v1184 = vadd.f32 %v1160, %v1180
      %v1185 = vadd.f32 %v1161, %v1181
      %v1186 = vadd.f32 %v1162, %v1182
      %1187 = vset.pattern.permute.xlu0 3
      %1188 = vperm.xlu0 %1187, %v217
      %v1189 = vpop.permute.xlu0 %1188
      %1191 = vset.pattern.permute.xlu0 3
      %1192 = vperm.xlu0 %1191, %v218
      %v1193 = vpop.permute.xlu0 %1192
      %v1195 = vlaneseq
      %v1196 = vshrl.u32 %v1195, 7
      %v1197 = vsub.s32 3, %v1196
      %v1198 = vrot.slane %v1115, %v1197
      %v1199 = vlaneseq
      %v1200 = vshrl.u32 %v1199, 7
      %v1201 = vsub.s32 3, %v1200
      %v1202 = vrot.slane %v1116, %v1201
      %v1203 = vmul.f32 %v1189, %v1198
      %v1204 = vmul.f32 %v1189, %v1202
      %v1205 = vmul.f32 %v1193, %v1198
      %v1206 = vmul.f32 %v1193, %v1202
      %v1207 = vadd.f32 %v1183, %v1203
      %v1208 = vadd.f32 %v1184, %v1204
      %v1209 = vadd.f32 %v1185, %v1205
      %v1210 = vadd.f32 %v1186, %v1206
      %v1211 = vmul.f32 %v1207, 0.70710677
      %v1212 = vmul.f32 %v1208, 0.70710677
      %v1213 = vmul.f32 %v1209, 0.70710677
      %v1214 = vmul.f32 %v1210, 0.70710677
      %v1215 = vand.u32 2147483647, %v1211
      %v1216 = vand.u32 2147483647, %v1212
      %v1217 = vand.u32 2147483647, %v1213
      %v1218 = vand.u32 2147483647, %v1214
      %v1219 = vmul.f32 %v1215, 0.3275911
      %v1220 = vmul.f32 %v1216, 0.3275911
      %v1221 = vmul.f32 %v1217, 0.3275911
      %v1222 = vmul.f32 %v1218, 0.3275911
      %v1223 = vadd.f32 %v1219, 1.0
      %v1224 = vadd.f32 %v1220, 1.0
      %v1225 = vadd.f32 %v1221, 1.0
      %v1226 = vadd.f32 %v1222, 1.0
      %v1227 = vrcp.pop %v1223
      %v1228 = vmul.f32 1.0, %v1227
      %v1229 = vrcp.pop %v1224
      %v1230 = vmul.f32 1.0, %v1229
      %v1231 = vrcp.pop %v1225
      %v1232 = vmul.f32 1.0, %v1231
      %v1233 = vrcp.pop %v1226
      %v1234 = vmul.f32 1.0, %v1233
      %v1235 = vmul.f32 %v1228, 1.0614054
      %v1236 = vmul.f32 %v1230, 1.0614054
      %v1237 = vmul.f32 %v1232, 1.0614054
      %v1238 = vmul.f32 %v1234, 1.0614054
      %v1239 = vsub.f32 %v1235, 1.4531521
      %v1240 = vsub.f32 %v1236, 1.4531521
      %v1241 = vsub.f32 %v1237, 1.4531521
      %v1242 = vsub.f32 %v1238, 1.4531521
      %v1243 = vmul.f32 %v1239, %v1228
      %v1244 = vmul.f32 %v1240, %v1230
      %v1245 = vmul.f32 %v1241, %v1232
      %v1246 = vmul.f32 %v1242, %v1234
      %v1247 = vadd.f32 %v1243, 1.4214138
      %v1248 = vadd.f32 %v1244, 1.4214138
      %v1249 = vadd.f32 %v1245, 1.4214138
      %v1250 = vadd.f32 %v1246, 1.4214138
      %v1251 = vmul.f32 %v1247, %v1228
      %v1252 = vmul.f32 %v1248, %v1230
      %v1253 = vmul.f32 %v1249, %v1232
      %v1254 = vmul.f32 %v1250, %v1234
      %v1255 = vsub.f32 %v1251, 0.28449672
      %v1256 = vsub.f32 %v1252, 0.28449672
      %v1257 = vsub.f32 %v1253, 0.28449672
      %v1258 = vsub.f32 %v1254, 0.28449672
      %v1259 = vmul.f32 %v1255, %v1228
      %v1260 = vmul.f32 %v1256, %v1230
      %v1261 = vmul.f32 %v1257, %v1232
      %v1262 = vmul.f32 %v1258, %v1234
      %v1263 = vadd.f32 %v1259, 0.2548296
      %v1264 = vadd.f32 %v1260, 0.2548296
      %v1265 = vadd.f32 %v1261, 0.2548296
      %v1266 = vadd.f32 %v1262, 0.2548296
      %v1267 = vmul.f32 %v1263, %v1228
      %v1268 = vmul.f32 %v1264, %v1230
      %v1269 = vmul.f32 %v1265, %v1232
      %v1270 = vmul.f32 %v1266, %v1234
      %v1271 = vsub.f32 0.0, %v1215
      %v1272 = vsub.f32 0.0, %v1216
      %v1273 = vsub.f32 0.0, %v1217
      %v1274 = vsub.f32 0.0, %v1218
      %v1275 = vmul.f32 %v1271, %v1215
      %v1276 = vmul.f32 %v1272, %v1216
      %v1277 = vmul.f32 %v1273, %v1217
      %v1278 = vmul.f32 %v1274, %v1218
      %v1279 = vmul.f32 %v1275, 1.442695
      %v1280 = vpow.pop %v1279
      %v1281 = vmul.f32 %v1276, 1.442695
      %v1282 = vpow.pop %v1281
      %v1283 = vmul.f32 %v1277, 1.442695
      %v1284 = vpow.pop %v1283
      %v1285 = vmul.f32 %v1278, 1.442695
      %v1286 = vpow.pop %v1285
      %v1287 = vmul.f32 %v1267, %v1280
      %v1288 = vmul.f32 %v1268, %v1282
      %v1289 = vmul.f32 %v1269, %v1284
      %v1290 = vmul.f32 %v1270, %v1286
      %v1291 = vsub.f32 1.0, %v1287
      %v1292 = vsub.f32 1.0, %v1288
      %v1293 = vsub.f32 1.0, %v1289
      %v1294 = vsub.f32 1.0, %v1290
      %vm1295 = vcmp.ge.f32.partialorder %v1211, 0.0
      %vm1296 = vcmp.ge.f32.partialorder %v1212, 0.0
      %vm1297 = vcmp.ge.f32.partialorder %v1213, 0.0
      %vm1298 = vcmp.ge.f32.partialorder %v1214, 0.0
      %v1299 = vsub.f32 0.0, %v1291
      %v1300 = vsub.f32 0.0, %v1292
      %v1301 = vsub.f32 0.0, %v1293
      %v1302 = vsub.f32 0.0, %v1294
      %v1303 = vsel %vm1295, %v1291, %v1299
      %v1304 = vsel %vm1296, %v1292, %v1300
      %v1305 = vsel %vm1297, %v1293, %v1301
      %v1306 = vsel %vm1298, %v1294, %v1302
      %v1307 = vmul.f32 %v1207, 0.5
      %v1308 = vmul.f32 %v1208, 0.5
      %v1309 = vmul.f32 %v1209, 0.5
      %v1310 = vmul.f32 %v1210, 0.5
      %v1311 = vadd.f32 %v1303, 1.0
      %v1312 = vadd.f32 %v1304, 1.0
      %v1313 = vadd.f32 %v1305, 1.0
      %v1314 = vadd.f32 %v1306, 1.0
      %v1315 = vmul.f32 %v1307, %v1311
      %v1316 = vmul.f32 %v1308, %v1312
      %v1317 = vmul.f32 %v1309, %v1313
      %v1318 = vmul.f32 %v1310, %v1314
      %1319 = vset.pattern.permute.xlu0 8
      %1320 = vperm.xlu0 %1319, %v217
      %v1321 = vpop.permute.xlu0 %1320
      %1323 = vset.pattern.permute.xlu0 8
      %1324 = vperm.xlu0 %1323, %v218
      %v1325 = vpop.permute.xlu0 %1324
      %v1327 = vmul.f32 %v1321, %v1315
      %v1328 = vmul.f32 %v1321, %v1316
      %v1329 = vmul.f32 %v1325, %v1317
      %v1330 = vmul.f32 %v1325, %v1318
      %1331 = vrot.lane.b32.xlu0 %v1315, 17
      %v1332 = vpop.permute.xlu0 %1331
      %1333 = vrot.lane.b32.xlu0 %v1317, 17
      %v1334 = vpop.permute.xlu0 %1333
      %1335 = vrot.lane.b32.xlu0 %v1316, 17
      %v1336 = vpop.permute.xlu0 %1335
      %1337 = vrot.lane.b32.xlu0 %v1318, 17
      %v1338 = vpop.permute.xlu0 %1337
      %v1339 = vsel %vm704, %v1332, %v1336
      %v1340 = vsel %vm704, %v1334, %v1338
      %v1341 = vsel %vm704, %v1336, %v1332
      %v1342 = vsel %vm704, %v1338, %v1334
      %v1343 = vsel %vm709, %v1341, 0.0
      %v1344 = vsel %vm710, %v1339, 0.0
      %v1345 = vsel %vm709, %v1342, 0.0
      %v1346 = vsel %vm710, %v1340, 0.0
      %1347 = vset.pattern.permute.xlu0 4
      %1348 = vperm.xlu0 %1347, %v217
      %v1349 = vpop.permute.xlu0 %1348
      %1351 = vset.pattern.permute.xlu0 4
      %1352 = vperm.xlu0 %1351, %v218
      %v1353 = vpop.permute.xlu0 %1352
      %v1355 = vmul.f32 %v1349, %v1343
      %v1356 = vmul.f32 %v1349, %v1344
      %v1357 = vmul.f32 %v1353, %v1345
      %v1358 = vmul.f32 %v1353, %v1346
      %v1359 = vadd.f32 %v1327, %v1355
      %v1360 = vadd.f32 %v1328, %v1356
      %v1361 = vadd.f32 %v1329, %v1357
      %v1362 = vadd.f32 %v1330, %v1358
      %1363 = vrot.lane.b32.xlu0 %v1315, 16
      %v1364 = vpop.permute.xlu0 %1363
      %1365 = vrot.lane.b32.xlu0 %v1317, 16
      %v1366 = vpop.permute.xlu0 %1365
      %1367 = vrot.lane.b32.xlu0 %v1316, 16
      %v1368 = vpop.permute.xlu0 %1367
      %1369 = vrot.lane.b32.xlu0 %v1318, 16
      %v1370 = vpop.permute.xlu0 %1369
      %v1371 = vsel %vm725, %v1364, %v1368
      %v1372 = vsel %vm725, %v1366, %v1370
      %v1373 = vsel %vm725, %v1368, %v1364
      %v1374 = vsel %vm725, %v1370, %v1366
      %v1375 = vsel %vm730, %v1373, 0.0
      %v1376 = vsel %vm731, %v1371, 0.0
      %v1377 = vsel %vm730, %v1374, 0.0
      %v1378 = vsel %vm731, %v1372, 0.0
      %1379 = vset.pattern.permute.xlu0 5
      %1380 = vperm.xlu0 %1379, %v217
      %v1381 = vpop.permute.xlu0 %1380
      %1383 = vset.pattern.permute.xlu0 5
      %1384 = vperm.xlu0 %1383, %v218
      %v1385 = vpop.permute.xlu0 %1384
      %v1387 = vmul.f32 %v1381, %v1375
      %v1388 = vmul.f32 %v1381, %v1376
      %v1389 = vmul.f32 %v1385, %v1377
      %v1390 = vmul.f32 %v1385, %v1378
      %v1391 = vadd.f32 %v1359, %v1387
      %v1392 = vadd.f32 %v1360, %v1388
      %v1393 = vadd.f32 %v1361, %v1389
      %v1394 = vadd.f32 %v1362, %v1390
      %1395 = vrot.lane.b32.xlu0 %v1315, 15
      %v1396 = vpop.permute.xlu0 %1395
      %1397 = vrot.lane.b32.xlu0 %v1317, 15
      %v1398 = vpop.permute.xlu0 %1397
      %1399 = vrot.lane.b32.xlu0 %v1316, 15
      %v1400 = vpop.permute.xlu0 %1399
      %1401 = vrot.lane.b32.xlu0 %v1318, 15
      %v1402 = vpop.permute.xlu0 %1401
      %v1403 = vsel %vm746, %v1396, %v1400
      %v1404 = vsel %vm746, %v1398, %v1402
      %v1405 = vsel %vm746, %v1400, %v1396
      %v1406 = vsel %vm746, %v1402, %v1398
      %v1407 = vsel %vm751, %v1405, 0.0
      %v1408 = vsel %vm752, %v1403, 0.0
      %v1409 = vsel %vm751, %v1406, 0.0
      %v1410 = vsel %vm752, %v1404, 0.0
      %1411 = vset.pattern.permute.xlu0 6
      %1412 = vperm.xlu0 %1411, %v217
      %v1413 = vpop.permute.xlu0 %1412
      %1415 = vset.pattern.permute.xlu0 6
      %1416 = vperm.xlu0 %1415, %v218
      %v1417 = vpop.permute.xlu0 %1416
      %v1419 = vmul.f32 %v1413, %v1407
      %v1420 = vmul.f32 %v1413, %v1408
      %v1421 = vmul.f32 %v1417, %v1409
      %v1422 = vmul.f32 %v1417, %v1410
      %v1423 = vadd.f32 %v1391, %v1419
      %v1424 = vadd.f32 %v1392, %v1420
      %v1425 = vadd.f32 %v1393, %v1421
      %v1426 = vadd.f32 %v1394, %v1422
      %1427 = vrot.lane.b32.xlu0 %v1315, 1
      %v1428 = vpop.permute.xlu0 %1427
      %1429 = vrot.lane.b32.xlu0 %v1317, 1
      %v1430 = vpop.permute.xlu0 %1429
      %1431 = vrot.lane.b32.xlu0 %v1316, 1
      %v1432 = vpop.permute.xlu0 %1431
      %1433 = vrot.lane.b32.xlu0 %v1318, 1
      %v1434 = vpop.permute.xlu0 %1433
      %v1435 = vsel %vm767, %v1428, %v1432
      %v1436 = vsel %vm767, %v1430, %v1434
      %v1437 = vsel %vm767, %v1432, %v1428
      %v1438 = vsel %vm767, %v1434, %v1430
      %v1439 = vsel %vm772, %v1437, 0.0
      %v1440 = vsel %vm773, %v1435, 0.0
      %v1441 = vsel %vm772, %v1438, 0.0
      %v1442 = vsel %vm773, %v1436, 0.0
      %1443 = vset.pattern.permute.xlu0 7
      %1444 = vperm.xlu0 %1443, %v217
      %v1445 = vpop.permute.xlu0 %1444
      %1447 = vset.pattern.permute.xlu0 7
      %1448 = vperm.xlu0 %1447, %v218
      %v1449 = vpop.permute.xlu0 %1448
      %v1451 = vmul.f32 %v1445, %v1439
      %v1452 = vmul.f32 %v1445, %v1440
      %v1453 = vmul.f32 %v1449, %v1441
      %v1454 = vmul.f32 %v1449, %v1442
      %v1455 = vadd.f32 %v1423, %v1451
      %v1456 = vadd.f32 %v1424, %v1452
      %v1457 = vadd.f32 %v1425, %v1453
      %v1458 = vadd.f32 %v1426, %v1454
      %1459 = vrot.lane.b32.xlu0 %v1315, 127
      %v1460 = vpop.permute.xlu0 %1459
      %1461 = vrot.lane.b32.xlu0 %v1317, 127
      %v1462 = vpop.permute.xlu0 %1461
      %1463 = vrot.lane.b32.xlu0 %v1316, 127
      %v1464 = vpop.permute.xlu0 %1463
      %1465 = vrot.lane.b32.xlu0 %v1318, 127
      %v1466 = vpop.permute.xlu0 %1465
      %v1467 = vsel %vm788, %v1460, %v1464
      %v1468 = vsel %vm788, %v1462, %v1466
      %v1469 = vsel %vm788, %v1464, %v1460
      %v1470 = vsel %vm788, %v1466, %v1462
      %v1471 = vsel %vm793, %v1467, 0.0
      %v1472 = vsel %vm794, %v1469, 0.0
      %v1473 = vsel %vm793, %v1468, 0.0
      %v1474 = vsel %vm794, %v1470, 0.0
      %1475 = vset.pattern.permute.xlu0 9
      %1476 = vperm.xlu0 %1475, %v217
      %v1477 = vpop.permute.xlu0 %1476
      %1479 = vset.pattern.permute.xlu0 9
      %1480 = vperm.xlu0 %1479, %v218
      %v1481 = vpop.permute.xlu0 %1480
      %v1483 = vmul.f32 %v1477, %v1471
      %v1484 = vmul.f32 %v1477, %v1472
      %v1485 = vmul.f32 %v1481, %v1473
      %v1486 = vmul.f32 %v1481, %v1474
      %v1487 = vadd.f32 %v1455, %v1483
      %v1488 = vadd.f32 %v1456, %v1484
      %v1489 = vadd.f32 %v1457, %v1485
      %v1490 = vadd.f32 %v1458, %v1486
      %1491 = vrot.lane.b32.xlu0 %v1315, 113
      %v1492 = vpop.permute.xlu0 %1491
      %1493 = vrot.lane.b32.xlu0 %v1317, 113
      %v1494 = vpop.permute.xlu0 %1493
      %1495 = vrot.lane.b32.xlu0 %v1316, 113
      %v1496 = vpop.permute.xlu0 %1495
      %1497 = vrot.lane.b32.xlu0 %v1318, 113
      %v1498 = vpop.permute.xlu0 %1497
      %v1499 = vsel %vm809, %v1492, %v1496
      %v1500 = vsel %vm809, %v1494, %v1498
      %v1501 = vsel %vm809, %v1496, %v1492
      %v1502 = vsel %vm809, %v1498, %v1494
      %v1503 = vsel %vm814, %v1499, 0.0
      %v1504 = vsel %vm815, %v1501, 0.0
      %v1505 = vsel %vm814, %v1500, 0.0
      %v1506 = vsel %vm815, %v1502, 0.0
      %1507 = vset.pattern.permute.xlu0 10
      %1508 = vperm.xlu0 %1507, %v217
      %v1509 = vpop.permute.xlu0 %1508
      %1511 = vset.pattern.permute.xlu0 10
      %1512 = vperm.xlu0 %1511, %v218
      %v1513 = vpop.permute.xlu0 %1512
      %v1515 = vmul.f32 %v1509, %v1503
      %v1516 = vmul.f32 %v1509, %v1504
      %v1517 = vmul.f32 %v1513, %v1505
      %v1518 = vmul.f32 %v1513, %v1506
      %v1519 = vadd.f32 %v1487, %v1515
      %v1520 = vadd.f32 %v1488, %v1516
      %v1521 = vadd.f32 %v1489, %v1517
      %v1522 = vadd.f32 %v1490, %v1518
      %1523 = vrot.lane.b32.xlu0 %v1315, 112
      %v1524 = vpop.permute.xlu0 %1523
      %1525 = vrot.lane.b32.xlu0 %v1317, 112
      %v1526 = vpop.permute.xlu0 %1525
      %1527 = vrot.lane.b32.xlu0 %v1316, 112
      %v1528 = vpop.permute.xlu0 %1527
      %1529 = vrot.lane.b32.xlu0 %v1318, 112
      %v1530 = vpop.permute.xlu0 %1529
      %v1531 = vsel %vm830, %v1524, %v1528
      %v1532 = vsel %vm830, %v1526, %v1530
      %v1533 = vsel %vm830, %v1528, %v1524
      %v1534 = vsel %vm830, %v1530, %v1526
      %v1535 = vsel %vm835, %v1531, 0.0
      %v1536 = vsel %vm836, %v1533, 0.0
      %v1537 = vsel %vm835, %v1532, 0.0
      %v1538 = vsel %vm836, %v1534, 0.0
      %1539 = vset.pattern.permute.xlu0 11
      %1540 = vperm.xlu0 %1539, %v217
      %v1541 = vpop.permute.xlu0 %1540
      %1543 = vset.pattern.permute.xlu0 11
      %1544 = vperm.xlu0 %1543, %v218
      %v1545 = vpop.permute.xlu0 %1544
      %v1547 = vmul.f32 %v1541, %v1535
      %v1548 = vmul.f32 %v1541, %v1536
      %v1549 = vmul.f32 %v1545, %v1537
      %v1550 = vmul.f32 %v1545, %v1538
      %v1551 = vadd.f32 %v1519, %v1547
      %v1552 = vadd.f32 %v1520, %v1548
      %v1553 = vadd.f32 %v1521, %v1549
      %v1554 = vadd.f32 %v1522, %v1550
      %1555 = vrot.lane.b32.xlu0 %v1315, 111
      %v1556 = vpop.permute.xlu0 %1555
      %1557 = vrot.lane.b32.xlu0 %v1317, 111
      %v1558 = vpop.permute.xlu0 %1557
      %1559 = vrot.lane.b32.xlu0 %v1316, 111
      %v1560 = vpop.permute.xlu0 %1559
      %1561 = vrot.lane.b32.xlu0 %v1318, 111
      %v1562 = vpop.permute.xlu0 %1561
      %v1563 = vsel %vm851, %v1556, %v1560
      %v1564 = vsel %vm851, %v1558, %v1562
      %v1565 = vsel %vm851, %v1560, %v1556
      %v1566 = vsel %vm851, %v1562, %v1558
      %v1567 = vsel %vm856, %v1563, 0.0
      %v1568 = vsel %vm857, %v1565, 0.0
      %v1569 = vsel %vm856, %v1564, 0.0
      %v1570 = vsel %vm857, %v1566, 0.0
      %1571 = vset.pattern.permute.xlu0 12
      %1572 = vperm.xlu0 %1571, %v217
      %v1573 = vpop.permute.xlu0 %1572
      %1575 = vset.pattern.permute.xlu0 12
      %1576 = vperm.xlu0 %1575, %v218
      %v1577 = vpop.permute.xlu0 %1576
      %v1579 = vmul.f32 %v1573, %v1567
      %v1580 = vmul.f32 %v1573, %v1568
      %v1581 = vmul.f32 %v1577, %v1569
      %v1582 = vmul.f32 %v1577, %v1570
      %v1583 = vadd.f32 %v1551, %v1579
      %v1584 = vadd.f32 %v1552, %v1580
      %v1585 = vadd.f32 %v1553, %v1581
      %v1586 = vadd.f32 %v1554, %v1582
      %v1587 = vmul.f32 %v1583, 0.70710677
      %v1588 = vmul.f32 %v1584, 0.70710677
      %v1589 = vmul.f32 %v1585, 0.70710677
      %v1590 = vmul.f32 %v1586, 0.70710677
      %v1591 = vand.u32 2147483647, %v1587
      %v1592 = vand.u32 2147483647, %v1588
      %v1593 = vand.u32 2147483647, %v1589
      %v1594 = vand.u32 2147483647, %v1590
      %v1595 = vmul.f32 %v1591, 0.3275911
      %v1596 = vmul.f32 %v1592, 0.3275911
      %v1597 = vmul.f32 %v1593, 0.3275911
      %v1598 = vmul.f32 %v1594, 0.3275911
      %v1599 = vadd.f32 %v1595, 1.0
      %v1600 = vadd.f32 %v1596, 1.0
      %v1601 = vadd.f32 %v1597, 1.0
      %v1602 = vadd.f32 %v1598, 1.0
      %v1603 = vrcp.pop %v1599
      %v1604 = vmul.f32 1.0, %v1603
      %v1605 = vrcp.pop %v1600
      %v1606 = vmul.f32 1.0, %v1605
      %v1607 = vrcp.pop %v1601
      %v1608 = vmul.f32 1.0, %v1607
      %v1609 = vrcp.pop %v1602
      %v1610 = vmul.f32 1.0, %v1609
      %v1611 = vmul.f32 %v1604, 1.0614054
      %v1612 = vmul.f32 %v1606, 1.0614054
      %v1613 = vmul.f32 %v1608, 1.0614054
      %v1614 = vmul.f32 %v1610, 1.0614054
      %v1615 = vsub.f32 %v1611, 1.4531521
      %v1616 = vsub.f32 %v1612, 1.4531521
      %v1617 = vsub.f32 %v1613, 1.4531521
      %v1618 = vsub.f32 %v1614, 1.4531521
      %v1619 = vmul.f32 %v1615, %v1604
      %v1620 = vmul.f32 %v1616, %v1606
      %v1621 = vmul.f32 %v1617, %v1608
      %v1622 = vmul.f32 %v1618, %v1610
      %v1623 = vadd.f32 %v1619, 1.4214138
      %v1624 = vadd.f32 %v1620, 1.4214138
      %v1625 = vadd.f32 %v1621, 1.4214138
      %v1626 = vadd.f32 %v1622, 1.4214138
      %v1627 = vmul.f32 %v1623, %v1604
      %v1628 = vmul.f32 %v1624, %v1606
      %v1629 = vmul.f32 %v1625, %v1608
      %v1630 = vmul.f32 %v1626, %v1610
      %v1631 = vsub.f32 %v1627, 0.28449672
      %v1632 = vsub.f32 %v1628, 0.28449672
      %v1633 = vsub.f32 %v1629, 0.28449672
      %v1634 = vsub.f32 %v1630, 0.28449672
      %v1635 = vmul.f32 %v1631, %v1604
      %v1636 = vmul.f32 %v1632, %v1606
      %v1637 = vmul.f32 %v1633, %v1608
      %v1638 = vmul.f32 %v1634, %v1610
      %v1639 = vadd.f32 %v1635, 0.2548296
      %v1640 = vadd.f32 %v1636, 0.2548296
      %v1641 = vadd.f32 %v1637, 0.2548296
      %v1642 = vadd.f32 %v1638, 0.2548296
      %v1643 = vmul.f32 %v1639, %v1604
      %v1644 = vmul.f32 %v1640, %v1606
      %v1645 = vmul.f32 %v1641, %v1608
      %v1646 = vmul.f32 %v1642, %v1610
      %v1647 = vsub.f32 0.0, %v1591
      %v1648 = vsub.f32 0.0, %v1592
      %v1649 = vsub.f32 0.0, %v1593
      %v1650 = vsub.f32 0.0, %v1594
      %v1651 = vmul.f32 %v1647, %v1591
      %v1652 = vmul.f32 %v1648, %v1592
      %v1653 = vmul.f32 %v1649, %v1593
      %v1654 = vmul.f32 %v1650, %v1594
      %v1655 = vmul.f32 %v1651, 1.442695
      %v1656 = vpow.pop %v1655
      %v1657 = vmul.f32 %v1652, 1.442695
      %v1658 = vpow.pop %v1657
      %v1659 = vmul.f32 %v1653, 1.442695
      %v1660 = vpow.pop %v1659
      %v1661 = vmul.f32 %v1654, 1.442695
      %v1662 = vpow.pop %v1661
      %v1663 = vmul.f32 %v1643, %v1656
      %v1664 = vmul.f32 %v1644, %v1658
      %v1665 = vmul.f32 %v1645, %v1660
      %v1666 = vmul.f32 %v1646, %v1662
      %v1667 = vsub.f32 1.0, %v1663
      %v1668 = vsub.f32 1.0, %v1664
      %v1669 = vsub.f32 1.0, %v1665
      %v1670 = vsub.f32 1.0, %v1666
      %vm1671 = vcmp.ge.f32.partialorder %v1587, 0.0
      %vm1672 = vcmp.ge.f32.partialorder %v1588, 0.0
      %vm1673 = vcmp.ge.f32.partialorder %v1589, 0.0
      %vm1674 = vcmp.ge.f32.partialorder %v1590, 0.0
      %v1675 = vsub.f32 0.0, %v1667
      %v1676 = vsub.f32 0.0, %v1668
      %v1677 = vsub.f32 0.0, %v1669
      %v1678 = vsub.f32 0.0, %v1670
      %v1679 = vsel %vm1671, %v1667, %v1675
      %v1680 = vsel %vm1672, %v1668, %v1676
      %v1681 = vsel %vm1673, %v1669, %v1677
      %v1682 = vsel %vm1674, %v1670, %v1678
      %v1683 = vmul.f32 %v1583, 0.5
      %v1684 = vmul.f32 %v1584, 0.5
      %v1685 = vmul.f32 %v1585, 0.5
      %v1686 = vmul.f32 %v1586, 0.5
      %v1687 = vadd.f32 %v1679, 1.0
      %v1688 = vadd.f32 %v1680, 1.0
      %v1689 = vadd.f32 %v1681, 1.0
      %v1690 = vadd.f32 %v1682, 1.0
      %v1691 = vmul.f32 %v1683, %v1687
      %v1692 = vmul.f32 %v1684, %v1688
      %v1693 = vmul.f32 %v1685, %v1689
      %v1694 = vmul.f32 %v1686, %v1690
      %1695 = vset.pattern.permute.xlu0 37
      %1696 = vperm.xlu0 %1695, %v215
      %v1697 = vpop.permute.xlu0 %1696
      %v1699 = vlaneseq
      %v1700 = vshrl.u32 %v1699, 7
      %v1701 = vsub.s32 0, %v1700
      %v1702 = vrot.slane %v1691, %v1701
      %v1703 = vlaneseq
      %v1704 = vshrl.u32 %v1703, 7
      %v1705 = vsub.s32 0, %v1704
      %v1706 = vrot.slane %v1692, %v1705
      %v1707 = vmul.f32 %v1697, %v1702
      %v1708 = vmul.f32 %v1697, %v1706
      %1709 = vset.pattern.permute.xlu0 38
      %1710 = vperm.xlu0 %1709, %v215
      %v1711 = vpop.permute.xlu0 %1710
      %v1713 = vlaneseq
      %v1714 = vshrl.u32 %v1713, 7
      %v1715 = vsub.s32 1, %v1714
      %v1716 = vrot.slane %v1691, %v1715
      %v1717 = vlaneseq
      %v1718 = vshrl.u32 %v1717, 7
      %v1719 = vsub.s32 1, %v1718
      %v1720 = vrot.slane %v1692, %v1719
      %v1721 = vmul.f32 %v1711, %v1716
      %v1722 = vmul.f32 %v1711, %v1720
      %v1723 = vadd.f32 %v1707, %v1721
      %v1724 = vadd.f32 %v1708, %v1722
      %1725 = vset.pattern.permute.xlu0 39
      %1726 = vperm.xlu0 %1725, %v215
      %v1727 = vpop.permute.xlu0 %1726
      %v1729 = vlaneseq
      %v1730 = vshrl.u32 %v1729, 7
      %v1731 = vsub.s32 2, %v1730
      %v1732 = vrot.slane %v1691, %v1731
      %v1733 = vlaneseq
      %v1734 = vshrl.u32 %v1733, 7
      %v1735 = vsub.s32 2, %v1734
      %v1736 = vrot.slane %v1692, %v1735
      %v1737 = vmul.f32 %v1727, %v1732
      %v1738 = vmul.f32 %v1727, %v1736
      %v1739 = vadd.f32 %v1723, %v1737
      %v1740 = vadd.f32 %v1724, %v1738
      %1741 = vset.pattern.permute.xlu0 40
      %1742 = vperm.xlu0 %1741, %v215
      %v1743 = vpop.permute.xlu0 %1742
      %v1745 = vlaneseq
      %v1746 = vshrl.u32 %v1745, 7
      %v1747 = vsub.s32 3, %v1746
      %v1748 = vrot.slane %v1691, %v1747
      %v1749 = vlaneseq
      %v1750 = vshrl.u32 %v1749, 7
      %v1751 = vsub.s32 3, %v1750
      %v1752 = vrot.slane %v1692, %v1751
      %v1753 = vmul.f32 %v1743, %v1748
      %v1754 = vmul.f32 %v1743, %v1752
      %v1755 = vadd.f32 %v1739, %v1753
      %v1756 = vadd.f32 %v1740, %v1754
      %1757 = vset.pattern.permute.xlu0 41
      %1758 = vperm.xlu0 %1757, %v215
      %v1759 = vpop.permute.xlu0 %1758
      %v1761 = vlaneseq
      %v1762 = vshrl.u32 %v1761, 7
      %v1763 = vsub.s32 4, %v1762
      %v1764 = vrot.slane %v1691, %v1763
      %v1765 = vlaneseq
      %v1766 = vshrl.u32 %v1765, 7
      %v1767 = vsub.s32 4, %v1766
      %v1768 = vrot.slane %v1692, %v1767
      %v1769 = vmul.f32 %v1759, %v1764
      %v1770 = vmul.f32 %v1759, %v1768
      %v1771 = vadd.f32 %v1755, %v1769
      %v1772 = vadd.f32 %v1756, %v1770
      %1773 = vset.pattern.permute.xlu0 42
      %1774 = vperm.xlu0 %1773, %v215
      %v1775 = vpop.permute.xlu0 %1774
      %v1777 = vlaneseq
      %v1778 = vshrl.u32 %v1777, 7
      %v1779 = vsub.s32 5, %v1778
      %v1780 = vrot.slane %v1691, %v1779
      %v1781 = vlaneseq
      %v1782 = vshrl.u32 %v1781, 7
      %v1783 = vsub.s32 5, %v1782
      %v1784 = vrot.slane %v1692, %v1783
      %v1785 = vmul.f32 %v1775, %v1780
      %v1786 = vmul.f32 %v1775, %v1784
      %v1787 = vadd.f32 %v1771, %v1785
      %v1788 = vadd.f32 %v1772, %v1786
      %1789 = vset.pattern.permute.xlu0 43
      %1790 = vperm.xlu0 %1789, %v215
      %v1791 = vpop.permute.xlu0 %1790
      %v1793 = vlaneseq
      %v1794 = vshrl.u32 %v1793, 7
      %v1795 = vsub.s32 6, %v1794
      %v1796 = vrot.slane %v1691, %v1795
      %v1797 = vlaneseq
      %v1798 = vshrl.u32 %v1797, 7
      %v1799 = vsub.s32 6, %v1798
      %v1800 = vrot.slane %v1692, %v1799
      %v1801 = vmul.f32 %v1791, %v1796
      %v1802 = vmul.f32 %v1791, %v1800
      %v1803 = vadd.f32 %v1787, %v1801
      %v1804 = vadd.f32 %v1788, %v1802
      %1805 = vset.pattern.permute.xlu0 44
      %1806 = vperm.xlu0 %1805, %v215
      %v1807 = vpop.permute.xlu0 %1806
      %v1809 = vlaneseq
      %v1810 = vshrl.u32 %v1809, 7
      %v1811 = vsub.s32 7, %v1810
      %v1812 = vrot.slane %v1691, %v1811
      %v1813 = vlaneseq
      %v1814 = vshrl.u32 %v1813, 7
      %v1815 = vsub.s32 7, %v1814
      %v1816 = vrot.slane %v1692, %v1815
      %v1817 = vmul.f32 %v1807, %v1812
      %v1818 = vmul.f32 %v1807, %v1816
      %v1819 = vadd.f32 %v1803, %v1817
      %v1820 = vadd.f32 %v1804, %v1818
      %1821 = vset.pattern.permute.xlu0 45
      %1822 = vperm.xlu0 %1821, %v215
      %v1823 = vpop.permute.xlu0 %1822
      %v1825 = vlaneseq
      %v1826 = vshrl.u32 %v1825, 7
      %v1827 = vsub.s32 0, %v1826
      %v1828 = vrot.slane %v1693, %v1827
      %v1829 = vlaneseq
      %v1830 = vshrl.u32 %v1829, 7
      %v1831 = vsub.s32 0, %v1830
      %v1832 = vrot.slane %v1694, %v1831
      %v1833 = vmul.f32 %v1823, %v1828
      %v1834 = vmul.f32 %v1823, %v1832
      %v1835 = vadd.f32 %v1819, %v1833
      %v1836 = vadd.f32 %v1820, %v1834
      %1837 = vset.pattern.permute.xlu0 46
      %1838 = vperm.xlu0 %1837, %v215
      %v1839 = vpop.permute.xlu0 %1838
      %v1841 = vlaneseq
      %v1842 = vshrl.u32 %v1841, 7
      %v1843 = vsub.s32 1, %v1842
      %v1844 = vrot.slane %v1693, %v1843
      %v1845 = vlaneseq
      %v1846 = vshrl.u32 %v1845, 7
      %v1847 = vsub.s32 1, %v1846
      %v1848 = vrot.slane %v1694, %v1847
      %v1849 = vmul.f32 %v1839, %v1844
      %v1850 = vmul.f32 %v1839, %v1848
      %v1851 = vadd.f32 %v1835, %v1849
      %v1852 = vadd.f32 %v1836, %v1850
      %1853 = vset.pattern.permute.xlu0 47
      %1854 = vperm.xlu0 %1853, %v215
      %v1855 = vpop.permute.xlu0 %1854
      %v1857 = vlaneseq
      %v1858 = vshrl.u32 %v1857, 7
      %v1859 = vsub.s32 2, %v1858
      %v1860 = vrot.slane %v1693, %v1859
      %v1861 = vlaneseq
      %v1862 = vshrl.u32 %v1861, 7
      %v1863 = vsub.s32 2, %v1862
      %v1864 = vrot.slane %v1694, %v1863
      %v1865 = vmul.f32 %v1855, %v1860
      %v1866 = vmul.f32 %v1855, %v1864
      %v1867 = vadd.f32 %v1851, %v1865
      %v1868 = vadd.f32 %v1852, %v1866
      %1869 = vset.pattern.permute.xlu0 48
      %1870 = vperm.xlu0 %1869, %v215
      %v1871 = vpop.permute.xlu0 %1870
      %v1873 = vlaneseq
      %v1874 = vshrl.u32 %v1873, 7
      %v1875 = vsub.s32 3, %v1874
      %v1876 = vrot.slane %v1693, %v1875
      %v1877 = vlaneseq
      %v1878 = vshrl.u32 %v1877, 7
      %v1879 = vsub.s32 3, %v1878
      %v1880 = vrot.slane %v1694, %v1879
      %v1881 = vmul.f32 %v1871, %v1876
      %v1882 = vmul.f32 %v1871, %v1880
      %v1883 = vadd.f32 %v1867, %v1881
      %v1884 = vadd.f32 %v1868, %v1882
      %1885 = vset.pattern.permute.xlu0 49
      %1886 = vperm.xlu0 %1885, %v215
      %v1887 = vpop.permute.xlu0 %1886
      %v1889 = vlaneseq
      %v1890 = vshrl.u32 %v1889, 7
      %v1891 = vsub.s32 4, %v1890
      %v1892 = vrot.slane %v1693, %v1891
      %v1893 = vlaneseq
      %v1894 = vshrl.u32 %v1893, 7
      %v1895 = vsub.s32 4, %v1894
      %v1896 = vrot.slane %v1694, %v1895
      %v1897 = vmul.f32 %v1887, %v1892
      %v1898 = vmul.f32 %v1887, %v1896
      %v1899 = vadd.f32 %v1883, %v1897
      %v1900 = vadd.f32 %v1884, %v1898
      %1901 = vset.pattern.permute.xlu0 50
      %1902 = vperm.xlu0 %1901, %v215
      %v1903 = vpop.permute.xlu0 %1902
      %v1905 = vlaneseq
      %v1906 = vshrl.u32 %v1905, 7
      %v1907 = vsub.s32 5, %v1906
      %v1908 = vrot.slane %v1693, %v1907
      %v1909 = vlaneseq
      %v1910 = vshrl.u32 %v1909, 7
      %v1911 = vsub.s32 5, %v1910
      %v1912 = vrot.slane %v1694, %v1911
      %v1913 = vmul.f32 %v1903, %v1908
      %v1914 = vmul.f32 %v1903, %v1912
      %v1915 = vadd.f32 %v1899, %v1913
      %v1916 = vadd.f32 %v1900, %v1914
      %1917 = vset.pattern.permute.xlu0 51
      %1918 = vperm.xlu0 %1917, %v215
      %v1919 = vpop.permute.xlu0 %1918
      %v1921 = vlaneseq
      %v1922 = vshrl.u32 %v1921, 7
      %v1923 = vsub.s32 6, %v1922
      %v1924 = vrot.slane %v1693, %v1923
      %v1925 = vlaneseq
      %v1926 = vshrl.u32 %v1925, 7
      %v1927 = vsub.s32 6, %v1926
      %v1928 = vrot.slane %v1694, %v1927
      %v1929 = vmul.f32 %v1919, %v1924
      %v1930 = vmul.f32 %v1919, %v1928
      %v1931 = vadd.f32 %v1915, %v1929
      %v1932 = vadd.f32 %v1916, %v1930
      %1933 = vset.pattern.permute.xlu0 52
      %1934 = vperm.xlu0 %1933, %v215
      %v1935 = vpop.permute.xlu0 %1934
      %v1937 = vlaneseq
      %v1938 = vshrl.u32 %v1937, 7
      %v1939 = vsub.s32 7, %v1938
      %v1940 = vrot.slane %v1693, %v1939
      %v1941 = vlaneseq
      %v1942 = vshrl.u32 %v1941, 7
      %v1943 = vsub.s32 7, %v1942
      %v1944 = vrot.slane %v1694, %v1943
      %v1945 = vmul.f32 %v1935, %v1940
      %v1946 = vmul.f32 %v1935, %v1944
      %v1947 = vadd.f32 %v1931, %v1945
      %v1948 = vadd.f32 %v1932, %v1946
      %v1949 = vadd.f32 %v1060, %v1947
      %v1950 = vadd.f32 %v1061, %v1948
      %s1951 = scalar_lea.vmem %s1, 4
      %v1952 = vld [vmem:[%s1951] sm:$0xf]
      %v1953 = vld [vmem:[%s1951] sm:$0x3]
      %s1954 = scalar_lea.vmem %s2, 16
      %v1955 = vld [vmem:[%s1954] sm:$0xff]
      %v1956 = vld [vmem:[%s1954 + $0x8] sm:$0xff]
      %1958 = vset.pattern.permute.xlu0 0
      %1959 = vperm.xlu0 %1958, %v1952
      %v1960 = vpop.permute.xlu0 %1959
      %v1962 = vlaneseq
      %v1963 = vshrl.u32 %v1962, 7
      %v1964 = vsub.s32 0, %v1963
      %v1965 = vrot.slane %v1949, %v1964
      %v1966 = vlaneseq
      %v1967 = vshrl.u32 %v1966, 7
      %v1968 = vsub.s32 0, %v1967
      %v1969 = vrot.slane %v1950, %v1968
      %v1970 = vmul.f32 %v1960, %v1965
      %v1971 = vmul.f32 %v1960, %v1969
      %1972 = vset.pattern.permute.xlu0 1
      %1973 = vperm.xlu0 %1972, %v1952
      %v1974 = vpop.permute.xlu0 %1973
      %v1976 = vlaneseq
      %v1977 = vshrl.u32 %v1976, 7
      %v1978 = vsub.s32 1, %v1977
      %v1979 = vrot.slane %v1949, %v1978
      %v1980 = vlaneseq
      %v1981 = vshrl.u32 %v1980, 7
      %v1982 = vsub.s32 1, %v1981
      %v1983 = vrot.slane %v1950, %v1982
      %v1984 = vmul.f32 %v1974, %v1979
      %v1985 = vmul.f32 %v1974, %v1983
      %v1986 = vadd.f32 %v1970, %v1984
      %v1987 = vadd.f32 %v1971, %v1985
      %1988 = vset.pattern.permute.xlu0 2
      %1989 = vperm.xlu0 %1988, %v1952
      %v1990 = vpop.permute.xlu0 %1989
      %v1992 = vlaneseq
      %v1993 = vshrl.u32 %v1992, 7
      %v1994 = vsub.s32 2, %v1993
      %v1995 = vrot.slane %v1949, %v1994
      %v1996 = vlaneseq
      %v1997 = vshrl.u32 %v1996, 7
      %v1998 = vsub.s32 2, %v1997
      %v1999 = vrot.slane %v1950, %v1998
      %v2000 = vmul.f32 %v1990, %v1995
      %v2001 = vmul.f32 %v1990, %v1999
      %v2002 = vadd.f32 %v1986, %v2000
      %v2003 = vadd.f32 %v1987, %v2001
      %2004 = vset.pattern.permute.xlu0 3
      %2005 = vperm.xlu0 %2004, %v1952
      %v2006 = vpop.permute.xlu0 %2005
      %v2008 = vlaneseq
      %v2009 = vshrl.u32 %v2008, 7
      %v2010 = vsub.s32 3, %v2009
      %v2011 = vrot.slane %v1949, %v2010
      %v2012 = vlaneseq
      %v2013 = vshrl.u32 %v2012, 7
      %v2014 = vsub.s32 3, %v2013
      %v2015 = vrot.slane %v1950, %v2014
      %v2016 = vmul.f32 %v2006, %v2011
      %v2017 = vmul.f32 %v2006, %v2015
      %v2018 = vadd.f32 %v2002, %v2016
      %v2019 = vadd.f32 %v2003, %v2017
      %2020 = vset.pattern.permute.xlu0 4
      %2021 = vperm.xlu0 %2020, %v1952
      %v2022 = vpop.permute.xlu0 %2021
      %v2024 = vmul.f32 %v2022, %v1965
      %v2025 = vmul.f32 %v2022, %v1969
      %2026 = vset.pattern.permute.xlu0 5
      %2027 = vperm.xlu0 %2026, %v1952
      %v2028 = vpop.permute.xlu0 %2027
      %v2030 = vmul.f32 %v2028, %v1979
      %v2031 = vmul.f32 %v2028, %v1983
      %v2032 = vadd.f32 %v2024, %v2030
      %v2033 = vadd.f32 %v2025, %v2031
      %2034 = vset.pattern.permute.xlu0 6
      %2035 = vperm.xlu0 %2034, %v1952
      %v2036 = vpop.permute.xlu0 %2035
      %v2038 = vmul.f32 %v2036, %v1995
      %v2039 = vmul.f32 %v2036, %v1999
      %v2040 = vadd.f32 %v2032, %v2038
      %v2041 = vadd.f32 %v2033, %v2039
      %2042 = vset.pattern.permute.xlu0 7
      %2043 = vperm.xlu0 %2042, %v1952
      %v2044 = vpop.permute.xlu0 %2043
      %v2046 = vmul.f32 %v2044, %v2011
      %v2047 = vmul.f32 %v2044, %v2015
      %v2048 = vadd.f32 %v2040, %v2046
      %v2049 = vadd.f32 %v2041, %v2047
      %2050 = vset.pattern.permute.xlu0 8
      %2051 = vperm.xlu0 %2050, %v1952
      %v2052 = vpop.permute.xlu0 %2051
      %v2054 = vmul.f32 %v2052, %v1965
      %v2055 = vmul.f32 %v2052, %v1969
      %2056 = vset.pattern.permute.xlu0 9
      %2057 = vperm.xlu0 %2056, %v1952
      %v2058 = vpop.permute.xlu0 %2057
      %v2060 = vmul.f32 %v2058, %v1979
      %v2061 = vmul.f32 %v2058, %v1983
      %v2062 = vadd.f32 %v2054, %v2060
      %v2063 = vadd.f32 %v2055, %v2061
      %2064 = vset.pattern.permute.xlu0 10
      %2065 = vperm.xlu0 %2064, %v1952
      %v2066 = vpop.permute.xlu0 %2065
      %v2068 = vmul.f32 %v2066, %v1995
      %v2069 = vmul.f32 %v2066, %v1999
      %v2070 = vadd.f32 %v2062, %v2068
      %v2071 = vadd.f32 %v2063, %v2069
      %2072 = vset.pattern.permute.xlu0 11
      %2073 = vperm.xlu0 %2072, %v1952
      %v2074 = vpop.permute.xlu0 %2073
      %v2076 = vmul.f32 %v2074, %v2011
      %v2077 = vmul.f32 %v2074, %v2015
      %v2078 = vadd.f32 %v2070, %v2076
      %v2079 = vadd.f32 %v2071, %v2077
      %v2080 = vmul.f32 %v2018, %v2018
      %v2081 = vmul.f32 %v2019, %v2019
      %v2082 = vsel %vm385, %v2080, 0.0
      %v2083 = vsel %vm385, %v2081, 0.0
      %v2084 = vadd.f32 %v2082, %v2083
      %2085 = vadd.xlane.f32.xlu0 %v2084
      %v2086 = vpop.xlane.xlu0 %2085
      %v2087 = vmax.f32 %v2086, 1e-24
      %v2088 = vrsqrt.pop %v2087
      %v2089 = vmul.f32 %v2018, %v2088
      %v2090 = vmul.f32 %v2019, %v2088
      %v2091 = vmul.f32 %v2048, %v2048
      %v2092 = vmul.f32 %v2049, %v2049
      %v2093 = vsel %vm385, %v2091, 0.0
      %v2094 = vsel %vm385, %v2092, 0.0
      %v2095 = vadd.f32 %v2093, %v2094
      %2096 = vadd.xlane.f32.xlu0 %v2095
      %v2097 = vpop.xlane.xlu0 %2096
      %v2098 = vmax.f32 %v2097, 1e-24
      %v2099 = vrsqrt.pop %v2098
      %v2100 = vmul.f32 %v2048, %v2099
      %v2101 = vmul.f32 %v2049, %v2099
      %v2102 = vlaneseq
      %v2103 = vshrl.u32 %v2102, 7
      %v2104 = vsub.s32 0, %v2103
      %v2105 = vrot.slane %v2100, %v2104
      %v2106 = vlaneseq
      %v2107 = vshrl.u32 %v2106, 7
      %v2108 = vsub.s32 0, %v2107
      %v2109 = vrot.slane %v2101, %v2108
      %v2110 = vmul.f32 %v2105, %v2089
      %v2111 = vmul.f32 %v2109, %v2090
      %v2112 = vsel %vm416, %v2110, 0.0
      %v2113 = vsel %vm416, %v2111, 0.0
      %v2114 = vadd.f32 %v2112, %v2113
      %2115 = vadd.xlane.f32.xlu0 %v2114
      %v2116 = vpop.xlane.xlu0 %2115
      %v2117 = vlaneseq
      %v2118 = vshrl.u32 %v2117, 7
      %v2119 = vsub.s32 0, %v2118
      %v2120 = vrot.slane %v1953, %v2119
      %v2121 = vmul.f32 %v2116, %v2120
      %v2122 = vsel %vm427, %v2121, -inf
      %v2123 = vrot.slane %v2122, 4
      %v2124 = vmax.f32 %v2122, %v2123
      %v2125 = vrot.slane %v2124, 2
      %v2126 = vmax.f32 %v2124, %v2125
      %v2127 = vrot.slane %v2126, 1
      %v2128 = vmax.f32 %v2126, %v2127
      %v2129 = vsub.f32 %v2121, %v2128
      %v2130 = vmul.f32 %v2129, 1.442695
      %v2131 = vpow.pop %v2130
      %v2132 = vsel %vm427, %v2131, 0.0
      %v2133 = vrot.slane %v2132, 4
      %v2134 = vadd.f32 %v2132, %v2133
      %v2135 = vrot.slane %v2134, 2
      %v2136 = vadd.f32 %v2134, %v2135
      %v2137 = vrot.slane %v2136, 1
      %v2138 = vadd.f32 %v2136, %v2137
      %v2139 = vrcp.pop %v2138
      %v2140 = vmul.f32 %v2131, %v2139
      %2142 = vset.pattern.permute.xlu0 53
      %2143 = vperm.xlu0 %2142, %v2140
      %v2144 = vpop.permute.xlu0 %2143
      %v2146 = vmul.f32 %v2144, %v2078
      %v2147 = vmul.f32 %v2144, %v2079
      %v2150 = vrot.slane %v2146, 1
      %v2151 = vrot.slane %v2147, 1
      %v2154 = vadd.f32 %v2146, %v2150
      %v2155 = vadd.f32 %v2147, %v2151
      %2156 = vset.pattern.permute.xlu0 12
      %2157 = vperm.xlu0 %2156, %v1952
      %v2158 = vpop.permute.xlu0 %2157
      %v2160 = vlaneseq
      %v2161 = vshrl.u32 %v2160, 7
      %v2162 = vsub.s32 0, %v2161
      %v2163 = vrot.slane %v2154, %v2162
      %v2164 = vlaneseq
      %v2165 = vshrl.u32 %v2164, 7
      %v2166 = vsub.s32 0, %v2165
      %v2167 = vrot.slane %v2155, %v2166
      %v2168 = vmul.f32 %v2158, %v2163
      %v2169 = vmul.f32 %v2158, %v2167
      %v2170 = vadd.f32 %v2168, 0.0
      %v2171 = vadd.f32 %v2169, 0.0
      %v2172 = vlaneseq
      %v2173 = vshrl.u32 %v2172, 7
      %v2174 = vsub.s32 1, %v2173
      %v2175 = vrot.slane %v2100, %v2174
      %v2176 = vlaneseq
      %v2177 = vshrl.u32 %v2176, 7
      %v2178 = vsub.s32 1, %v2177
      %v2179 = vrot.slane %v2101, %v2178
      %v2180 = vmul.f32 %v2175, %v2089
      %v2181 = vmul.f32 %v2179, %v2090
      %v2182 = vsel %vm416, %v2180, 0.0
      %v2183 = vsel %vm416, %v2181, 0.0
      %v2184 = vadd.f32 %v2182, %v2183
      %2185 = vadd.xlane.f32.xlu0 %v2184
      %v2186 = vpop.xlane.xlu0 %2185
      %v2187 = vmul.f32 %v2186, %v2120
      %v2188 = vsel %vm427, %v2187, -inf
      %v2189 = vrot.slane %v2188, 4
      %v2190 = vmax.f32 %v2188, %v2189
      %v2191 = vrot.slane %v2190, 2
      %v2192 = vmax.f32 %v2190, %v2191
      %v2193 = vrot.slane %v2192, 1
      %v2194 = vmax.f32 %v2192, %v2193
      %v2195 = vsub.f32 %v2187, %v2194
      %v2196 = vmul.f32 %v2195, 1.442695
      %v2197 = vpow.pop %v2196
      %v2198 = vsel %vm427, %v2197, 0.0
      %v2199 = vrot.slane %v2198, 4
      %v2200 = vadd.f32 %v2198, %v2199
      %v2201 = vrot.slane %v2200, 2
      %v2202 = vadd.f32 %v2200, %v2201
      %v2203 = vrot.slane %v2202, 1
      %v2204 = vadd.f32 %v2202, %v2203
      %v2205 = vrcp.pop %v2204
      %v2206 = vmul.f32 %v2197, %v2205
      %2208 = vset.pattern.permute.xlu0 53
      %2209 = vperm.xlu0 %2208, %v2206
      %v2210 = vpop.permute.xlu0 %2209
      %v2212 = vmul.f32 %v2210, %v2078
      %v2213 = vmul.f32 %v2210, %v2079
      %v2216 = vrot.slane %v2212, 1
      %v2217 = vrot.slane %v2213, 1
      %v2220 = vadd.f32 %v2212, %v2216
      %v2221 = vadd.f32 %v2213, %v2217
      %2222 = vset.pattern.permute.xlu0 13
      %2223 = vperm.xlu0 %2222, %v1952
      %v2224 = vpop.permute.xlu0 %2223
      %v2226 = vlaneseq
      %v2227 = vshrl.u32 %v2226, 7
      %v2228 = vsub.s32 0, %v2227
      %v2229 = vrot.slane %v2220, %v2228
      %v2230 = vlaneseq
      %v2231 = vshrl.u32 %v2230, 7
      %v2232 = vsub.s32 0, %v2231
      %v2233 = vrot.slane %v2221, %v2232
      %v2234 = vmul.f32 %v2224, %v2229
      %v2235 = vmul.f32 %v2224, %v2233
      %v2236 = vadd.f32 %v2170, %v2234
      %v2237 = vadd.f32 %v2171, %v2235
      %v2238 = vlaneseq
      %v2239 = vshrl.u32 %v2238, 7
      %v2240 = vsub.s32 2, %v2239
      %v2241 = vrot.slane %v2100, %v2240
      %v2242 = vlaneseq
      %v2243 = vshrl.u32 %v2242, 7
      %v2244 = vsub.s32 2, %v2243
      %v2245 = vrot.slane %v2101, %v2244
      %v2246 = vmul.f32 %v2241, %v2089
      %v2247 = vmul.f32 %v2245, %v2090
      %v2248 = vsel %vm554, %v2246, 0.0
      %v2249 = vsel %vm554, %v2247, 0.0
      %v2250 = vadd.f32 %v2248, %v2249
      %2251 = vadd.xlane.f32.xlu0 %v2250
      %v2252 = vpop.xlane.xlu0 %2251
      %v2253 = vlaneseq
      %v2254 = vshrl.u32 %v2253, 7
      %v2255 = vsub.s32 1, %v2254
      %v2256 = vrot.slane %v1953, %v2255
      %v2257 = vmul.f32 %v2252, %v2256
      %v2258 = vsel %vm565, %v2257, -inf
      %v2259 = vrot.slane %v2258, 4
      %v2260 = vmax.f32 %v2258, %v2259
      %v2261 = vrot.slane %v2260, 2
      %v2262 = vmax.f32 %v2260, %v2261
      %v2263 = vrot.slane %v2262, 1
      %v2264 = vmax.f32 %v2262, %v2263
      %v2265 = vsub.f32 %v2257, %v2264
      %v2266 = vmul.f32 %v2265, 1.442695
      %v2267 = vpow.pop %v2266
      %v2269 = vrot.slane %v2267, 2
      %v2271 = vsel %vm427, %v2269, 0.0
      %v2272 = vrot.slane %v2271, 4
      %v2273 = vadd.f32 %v2271, %v2272
      %v2274 = vrot.slane %v2273, 2
      %v2275 = vadd.f32 %v2273, %v2274
      %v2276 = vrot.slane %v2275, 1
      %v2277 = vadd.f32 %v2275, %v2276
      %v2278 = vrcp.pop %v2277
      %v2279 = vmul.f32 %v2267, %v2278
      %2281 = vset.pattern.permute.xlu0 53
      %2282 = vperm.xlu0 %2281, %v2279
      %v2283 = vpop.permute.xlu0 %2282
      %v2285 = vmul.f32 %v2283, %v2078
      %v2286 = vmul.f32 %v2283, %v2079
      %v2289 = vrot.slane %v2285, 1
      %v2290 = vrot.slane %v2286, 1
      %v2293 = vadd.f32 %v2285, %v2289
      %v2294 = vadd.f32 %v2286, %v2290
      %2295 = vset.pattern.permute.xlu0 14
      %2296 = vperm.xlu0 %2295, %v1952
      %v2297 = vpop.permute.xlu0 %2296
      %v2299 = vlaneseq
      %v2300 = vshrl.u32 %v2299, 7
      %v2301 = vsub.s32 2, %v2300
      %v2302 = vrot.slane %v2293, %v2301
      %v2303 = vlaneseq
      %v2304 = vshrl.u32 %v2303, 7
      %v2305 = vsub.s32 2, %v2304
      %v2306 = vrot.slane %v2294, %v2305
      %v2307 = vmul.f32 %v2297, %v2302
      %v2308 = vmul.f32 %v2297, %v2306
      %v2309 = vadd.f32 %v2236, %v2307
      %v2310 = vadd.f32 %v2237, %v2308
      %v2311 = vlaneseq
      %v2312 = vshrl.u32 %v2311, 7
      %v2313 = vsub.s32 3, %v2312
      %v2314 = vrot.slane %v2100, %v2313
      %v2315 = vlaneseq
      %v2316 = vshrl.u32 %v2315, 7
      %v2317 = vsub.s32 3, %v2316
      %v2318 = vrot.slane %v2101, %v2317
      %v2319 = vmul.f32 %v2314, %v2089
      %v2320 = vmul.f32 %v2318, %v2090
      %v2321 = vsel %vm554, %v2319, 0.0
      %v2322 = vsel %vm554, %v2320, 0.0
      %v2323 = vadd.f32 %v2321, %v2322
      %2324 = vadd.xlane.f32.xlu0 %v2323
      %v2325 = vpop.xlane.xlu0 %2324
      %v2326 = vmul.f32 %v2325, %v2256
      %v2327 = vsel %vm565, %v2326, -inf
      %v2328 = vrot.slane %v2327, 4
      %v2329 = vmax.f32 %v2327, %v2328
      %v2330 = vrot.slane %v2329, 2
      %v2331 = vmax.f32 %v2329, %v2330
      %v2332 = vrot.slane %v2331, 1
      %v2333 = vmax.f32 %v2331, %v2332
      %v2334 = vsub.f32 %v2326, %v2333
      %v2335 = vmul.f32 %v2334, 1.442695
      %v2336 = vpow.pop %v2335
      %v2338 = vrot.slane %v2336, 2
      %v2340 = vsel %vm427, %v2338, 0.0
      %v2341 = vrot.slane %v2340, 4
      %v2342 = vadd.f32 %v2340, %v2341
      %v2343 = vrot.slane %v2342, 2
      %v2344 = vadd.f32 %v2342, %v2343
      %v2345 = vrot.slane %v2344, 1
      %v2346 = vadd.f32 %v2344, %v2345
      %v2347 = vrcp.pop %v2346
      %v2348 = vmul.f32 %v2336, %v2347
      %2350 = vset.pattern.permute.xlu0 53
      %2351 = vperm.xlu0 %2350, %v2348
      %v2352 = vpop.permute.xlu0 %2351
      %v2354 = vmul.f32 %v2352, %v2078
      %v2355 = vmul.f32 %v2352, %v2079
      %v2358 = vrot.slane %v2354, 1
      %v2359 = vrot.slane %v2355, 1
      %v2362 = vadd.f32 %v2354, %v2358
      %v2363 = vadd.f32 %v2355, %v2359
      %2364 = vset.pattern.permute.xlu0 15
      %2365 = vperm.xlu0 %2364, %v1952
      %v2366 = vpop.permute.xlu0 %2365
      %v2368 = vlaneseq
      %v2369 = vshrl.u32 %v2368, 7
      %v2370 = vsub.s32 2, %v2369
      %v2371 = vrot.slane %v2362, %v2370
      %v2372 = vlaneseq
      %v2373 = vshrl.u32 %v2372, 7
      %v2374 = vsub.s32 2, %v2373
      %v2375 = vrot.slane %v2363, %v2374
      %v2376 = vmul.f32 %v2366, %v2371
      %v2377 = vmul.f32 %v2366, %v2375
      %v2378 = vadd.f32 %v2309, %v2376
      %v2379 = vadd.f32 %v2310, %v2377
      %2380 = vset.pattern.permute.xlu0 16
      %2381 = vperm.xlu0 %2380, %v1952
      %v2382 = vpop.permute.xlu0 %2381
      %v2384 = vadd.f32 %v2378, %v2382
      %v2385 = vadd.f32 %v2379, %v2382
      %2386 = vset.pattern.permute.xlu0 21
      %2387 = vperm.xlu0 %2386, %v1952
      %v2388 = vpop.permute.xlu0 %2387
      %v2390 = vmul.f32 %v2388, %v2078
      %v2391 = vmul.f32 %v2388, %v2079
      %2392 = vrot.lane.b32.xlu0 %v2078, 17
      %v2393 = vpop.permute.xlu0 %2392
      %2394 = vrot.lane.b32.xlu0 %v2079, 17
      %v2395 = vpop.permute.xlu0 %2394
      %v2396 = vsel %vm704, %v2393, %v2395
      %v2397 = vsel %vm704, %v2395, %v2393
      %v2398 = vsel %vm709, %v2397, 0.0
      %v2399 = vsel %vm710, %v2396, 0.0
      %2400 = vset.pattern.permute.xlu0 17
      %2401 = vperm.xlu0 %2400, %v1952
      %v2402 = vpop.permute.xlu0 %2401
      %v2404 = vmul.f32 %v2402, %v2398
      %v2405 = vmul.f32 %v2402, %v2399
      %v2406 = vadd.f32 %v2390, %v2404
      %v2407 = vadd.f32 %v2391, %v2405
      %2408 = vrot.lane.b32.xlu0 %v2078, 16
      %v2409 = vpop.permute.xlu0 %2408
      %2410 = vrot.lane.b32.xlu0 %v2079, 16
      %v2411 = vpop.permute.xlu0 %2410
      %v2412 = vsel %vm725, %v2409, %v2411
      %v2413 = vsel %vm725, %v2411, %v2409
      %v2414 = vsel %vm730, %v2413, 0.0
      %v2415 = vsel %vm731, %v2412, 0.0
      %2416 = vset.pattern.permute.xlu0 18
      %2417 = vperm.xlu0 %2416, %v1952
      %v2418 = vpop.permute.xlu0 %2417
      %v2420 = vmul.f32 %v2418, %v2414
      %v2421 = vmul.f32 %v2418, %v2415
      %v2422 = vadd.f32 %v2406, %v2420
      %v2423 = vadd.f32 %v2407, %v2421
      %2424 = vrot.lane.b32.xlu0 %v2078, 15
      %v2425 = vpop.permute.xlu0 %2424
      %2426 = vrot.lane.b32.xlu0 %v2079, 15
      %v2427 = vpop.permute.xlu0 %2426
      %v2428 = vsel %vm746, %v2425, %v2427
      %v2429 = vsel %vm746, %v2427, %v2425
      %v2430 = vsel %vm751, %v2429, 0.0
      %v2431 = vsel %vm752, %v2428, 0.0
      %2432 = vset.pattern.permute.xlu0 19
      %2433 = vperm.xlu0 %2432, %v1952
      %v2434 = vpop.permute.xlu0 %2433
      %v2436 = vmul.f32 %v2434, %v2430
      %v2437 = vmul.f32 %v2434, %v2431
      %v2438 = vadd.f32 %v2422, %v2436
      %v2439 = vadd.f32 %v2423, %v2437
      %2440 = vrot.lane.b32.xlu0 %v2078, 1
      %v2441 = vpop.permute.xlu0 %2440
      %2442 = vrot.lane.b32.xlu0 %v2079, 1
      %v2443 = vpop.permute.xlu0 %2442
      %v2444 = vsel %vm767, %v2441, %v2443
      %v2445 = vsel %vm767, %v2443, %v2441
      %v2446 = vsel %vm772, %v2445, 0.0
      %v2447 = vsel %vm773, %v2444, 0.0
      %2448 = vset.pattern.permute.xlu0 20
      %2449 = vperm.xlu0 %2448, %v1952
      %v2450 = vpop.permute.xlu0 %2449
      %v2452 = vmul.f32 %v2450, %v2446
      %v2453 = vmul.f32 %v2450, %v2447
      %v2454 = vadd.f32 %v2438, %v2452
      %v2455 = vadd.f32 %v2439, %v2453
      %2456 = vrot.lane.b32.xlu0 %v2078, 127
      %v2457 = vpop.permute.xlu0 %2456
      %2458 = vrot.lane.b32.xlu0 %v2079, 127
      %v2459 = vpop.permute.xlu0 %2458
      %v2460 = vsel %vm788, %v2457, %v2459
      %v2461 = vsel %vm788, %v2459, %v2457
      %v2462 = vsel %vm793, %v2460, 0.0
      %v2463 = vsel %vm794, %v2461, 0.0
      %2464 = vset.pattern.permute.xlu0 22
      %2465 = vperm.xlu0 %2464, %v1952
      %v2466 = vpop.permute.xlu0 %2465
      %v2468 = vmul.f32 %v2466, %v2462
      %v2469 = vmul.f32 %v2466, %v2463
      %v2470 = vadd.f32 %v2454, %v2468
      %v2471 = vadd.f32 %v2455, %v2469
      %2472 = vrot.lane.b32.xlu0 %v2078, 113
      %v2473 = vpop.permute.xlu0 %2472
      %2474 = vrot.lane.b32.xlu0 %v2079, 113
      %v2475 = vpop.permute.xlu0 %2474
      %v2476 = vsel %vm809, %v2473, %v2475
      %v2477 = vsel %vm809, %v2475, %v2473
      %v2478 = vsel %vm814, %v2476, 0.0
      %v2479 = vsel %vm815, %v2477, 0.0
      %2480 = vset.pattern.permute.xlu0 23
      %2481 = vperm.xlu0 %2480, %v1952
      %v2482 = vpop.permute.xlu0 %2481
      %v2484 = vmul.f32 %v2482, %v2478
      %v2485 = vmul.f32 %v2482, %v2479
      %v2486 = vadd.f32 %v2470, %v2484
      %v2487 = vadd.f32 %v2471, %v2485
      %2488 = vrot.lane.b32.xlu0 %v2078, 112
      %v2489 = vpop.permute.xlu0 %2488
      %2490 = vrot.lane.b32.xlu0 %v2079, 112
      %v2491 = vpop.permute.xlu0 %2490
      %v2492 = vsel %vm830, %v2489, %v2491
      %v2493 = vsel %vm830, %v2491, %v2489
      %v2494 = vsel %vm835, %v2492, 0.0
      %v2495 = vsel %vm836, %v2493, 0.0
      %2496 = vset.pattern.permute.xlu0 24
      %2497 = vperm.xlu0 %2496, %v1952
      %v2498 = vpop.permute.xlu0 %2497
      %v2500 = vmul.f32 %v2498, %v2494
      %v2501 = vmul.f32 %v2498, %v2495
      %v2502 = vadd.f32 %v2486, %v2500
      %v2503 = vadd.f32 %v2487, %v2501
      %2504 = vrot.lane.b32.xlu0 %v2078, 111
      %v2505 = vpop.permute.xlu0 %2504
      %2506 = vrot.lane.b32.xlu0 %v2079, 111
      %v2507 = vpop.permute.xlu0 %2506
      %v2508 = vsel %vm851, %v2505, %v2507
      %v2509 = vsel %vm851, %v2507, %v2505
      %v2510 = vsel %vm856, %v2508, 0.0
      %v2511 = vsel %vm857, %v2509, 0.0
      %2512 = vset.pattern.permute.xlu0 25
      %2513 = vperm.xlu0 %2512, %v1952
      %v2514 = vpop.permute.xlu0 %2513
      %v2516 = vmul.f32 %v2514, %v2510
      %v2517 = vmul.f32 %v2514, %v2511
      %v2518 = vadd.f32 %v2502, %v2516
      %v2519 = vadd.f32 %v2503, %v2517
      %v2520 = vmul.f32 %v2518, 0.70710677
      %v2521 = vmul.f32 %v2519, 0.70710677
      %v2522 = vand.u32 2147483647, %v2520
      %v2523 = vand.u32 2147483647, %v2521
      %v2524 = vmul.f32 %v2522, 0.3275911
      %v2525 = vmul.f32 %v2523, 0.3275911
      %v2526 = vadd.f32 %v2524, 1.0
      %v2527 = vadd.f32 %v2525, 1.0
      %v2528 = vrcp.pop %v2526
      %v2529 = vmul.f32 1.0, %v2528
      %v2530 = vrcp.pop %v2527
      %v2531 = vmul.f32 1.0, %v2530
      %v2532 = vmul.f32 %v2529, 1.0614054
      %v2533 = vmul.f32 %v2531, 1.0614054
      %v2534 = vsub.f32 %v2532, 1.4531521
      %v2535 = vsub.f32 %v2533, 1.4531521
      %v2536 = vmul.f32 %v2534, %v2529
      %v2537 = vmul.f32 %v2535, %v2531
      %v2538 = vadd.f32 %v2536, 1.4214138
      %v2539 = vadd.f32 %v2537, 1.4214138
      %v2540 = vmul.f32 %v2538, %v2529
      %v2541 = vmul.f32 %v2539, %v2531
      %v2542 = vsub.f32 %v2540, 0.28449672
      %v2543 = vsub.f32 %v2541, 0.28449672
      %v2544 = vmul.f32 %v2542, %v2529
      %v2545 = vmul.f32 %v2543, %v2531
      %v2546 = vadd.f32 %v2544, 0.2548296
      %v2547 = vadd.f32 %v2545, 0.2548296
      %v2548 = vmul.f32 %v2546, %v2529
      %v2549 = vmul.f32 %v2547, %v2531
      %v2550 = vsub.f32 0.0, %v2522
      %v2551 = vsub.f32 0.0, %v2523
      %v2552 = vmul.f32 %v2550, %v2522
      %v2553 = vmul.f32 %v2551, %v2523
      %v2554 = vmul.f32 %v2552, 1.442695
      %v2555 = vpow.pop %v2554
      %v2556 = vmul.f32 %v2553, 1.442695
      %v2557 = vpow.pop %v2556
      %v2558 = vmul.f32 %v2548, %v2555
      %v2559 = vmul.f32 %v2549, %v2557
      %v2560 = vsub.f32 1.0, %v2558
      %v2561 = vsub.f32 1.0, %v2559
      %vm2562 = vcmp.ge.f32.partialorder %v2520, 0.0
      %vm2563 = vcmp.ge.f32.partialorder %v2521, 0.0
      %v2564 = vsub.f32 0.0, %v2560
      %v2565 = vsub.f32 0.0, %v2561
      %v2566 = vsel %vm2562, %v2560, %v2564
      %v2567 = vsel %vm2563, %v2561, %v2565
      %v2568 = vmul.f32 %v2518, 0.5
      %v2569 = vmul.f32 %v2519, 0.5
      %v2570 = vadd.f32 %v2566, 1.0
      %v2571 = vadd.f32 %v2567, 1.0
      %v2572 = vmul.f32 %v2568, %v2570
      %v2573 = vmul.f32 %v2569, %v2571
      %2574 = vset.pattern.permute.xlu0 30
      %2575 = vperm.xlu0 %2574, %v1952
      %v2576 = vpop.permute.xlu0 %2575
      %v2578 = vmul.f32 %v2576, %v2572
      %v2579 = vmul.f32 %v2576, %v2573
      %2580 = vrot.lane.b32.xlu0 %v2572, 17
      %v2581 = vpop.permute.xlu0 %2580
      %2582 = vrot.lane.b32.xlu0 %v2573, 17
      %v2583 = vpop.permute.xlu0 %2582
      %v2584 = vsel %vm704, %v2581, %v2583
      %v2585 = vsel %vm704, %v2583, %v2581
      %v2586 = vsel %vm709, %v2585, 0.0
      %v2587 = vsel %vm710, %v2584, 0.0
      %2588 = vset.pattern.permute.xlu0 26
      %2589 = vperm.xlu0 %2588, %v1952
      %v2590 = vpop.permute.xlu0 %2589
      %v2592 = vmul.f32 %v2590, %v2586
      %v2593 = vmul.f32 %v2590, %v2587
      %v2594 = vadd.f32 %v2578, %v2592
      %v2595 = vadd.f32 %v2579, %v2593
      %2596 = vrot.lane.b32.xlu0 %v2572, 16
      %v2597 = vpop.permute.xlu0 %2596
      %2598 = vrot.lane.b32.xlu0 %v2573, 16
      %v2599 = vpop.permute.xlu0 %2598
      %v2600 = vsel %vm725, %v2597, %v2599
      %v2601 = vsel %vm725, %v2599, %v2597
      %v2602 = vsel %vm730, %v2601, 0.0
      %v2603 = vsel %vm731, %v2600, 0.0
      %2604 = vset.pattern.permute.xlu0 27
      %2605 = vperm.xlu0 %2604, %v1952
      %v2606 = vpop.permute.xlu0 %2605
      %v2608 = vmul.f32 %v2606, %v2602
      %v2609 = vmul.f32 %v2606, %v2603
      %v2610 = vadd.f32 %v2594, %v2608
      %v2611 = vadd.f32 %v2595, %v2609
      %2612 = vrot.lane.b32.xlu0 %v2572, 15
      %v2613 = vpop.permute.xlu0 %2612
      %2614 = vrot.lane.b32.xlu0 %v2573, 15
      %v2615 = vpop.permute.xlu0 %2614
      %v2616 = vsel %vm746, %v2613, %v2615
      %v2617 = vsel %vm746, %v2615, %v2613
      %v2618 = vsel %vm751, %v2617, 0.0
      %v2619 = vsel %vm752, %v2616, 0.0
      %2620 = vset.pattern.permute.xlu0 28
      %2621 = vperm.xlu0 %2620, %v1952
      %v2622 = vpop.permute.xlu0 %2621
      %v2624 = vmul.f32 %v2622, %v2618
      %v2625 = vmul.f32 %v2622, %v2619
      %v2626 = vadd.f32 %v2610, %v2624
      %v2627 = vadd.f32 %v2611, %v2625
      %2628 = vrot.lane.b32.xlu0 %v2572, 1
      %v2629 = vpop.permute.xlu0 %2628
      %2630 = vrot.lane.b32.xlu0 %v2573, 1
      %v2631 = vpop.permute.xlu0 %2630
      %v2632 = vsel %vm767, %v2629, %v2631
      %v2633 = vsel %vm767, %v2631, %v2629
      %v2634 = vsel %vm772, %v2633, 0.0
      %v2635 = vsel %vm773, %v2632, 0.0
      %2636 = vset.pattern.permute.xlu0 29
      %2637 = vperm.xlu0 %2636, %v1952
      %v2638 = vpop.permute.xlu0 %2637
      %v2640 = vmul.f32 %v2638, %v2634
      %v2641 = vmul.f32 %v2638, %v2635
      %v2642 = vadd.f32 %v2626, %v2640
      %v2643 = vadd.f32 %v2627, %v2641
      %2644 = vrot.lane.b32.xlu0 %v2572, 127
      %v2645 = vpop.permute.xlu0 %2644
      %2646 = vrot.lane.b32.xlu0 %v2573, 127
      %v2647 = vpop.permute.xlu0 %2646
      %v2648 = vsel %vm788, %v2645, %v2647
      %v2649 = vsel %vm788, %v2647, %v2645
      %v2650 = vsel %vm793, %v2648, 0.0
      %v2651 = vsel %vm794, %v2649, 0.0
      %2652 = vset.pattern.permute.xlu0 31
      %2653 = vperm.xlu0 %2652, %v1952
      %v2654 = vpop.permute.xlu0 %2653
      %v2656 = vmul.f32 %v2654, %v2650
      %v2657 = vmul.f32 %v2654, %v2651
      %v2658 = vadd.f32 %v2642, %v2656
      %v2659 = vadd.f32 %v2643, %v2657
      %2660 = vrot.lane.b32.xlu0 %v2572, 113
      %v2661 = vpop.permute.xlu0 %2660
      %2662 = vrot.lane.b32.xlu0 %v2573, 113
      %v2663 = vpop.permute.xlu0 %2662
      %v2664 = vsel %vm809, %v2661, %v2663
      %v2665 = vsel %vm809, %v2663, %v2661
      %v2666 = vsel %vm814, %v2664, 0.0
      %v2667 = vsel %vm815, %v2665, 0.0
      %2668 = vset.pattern.permute.xlu0 32
      %2669 = vperm.xlu0 %2668, %v1952
      %v2670 = vpop.permute.xlu0 %2669
      %v2672 = vmul.f32 %v2670, %v2666
      %v2673 = vmul.f32 %v2670, %v2667
      %v2674 = vadd.f32 %v2658, %v2672
      %v2675 = vadd.f32 %v2659, %v2673
      %2676 = vrot.lane.b32.xlu0 %v2572, 112
      %v2677 = vpop.permute.xlu0 %2676
      %2678 = vrot.lane.b32.xlu0 %v2573, 112
      %v2679 = vpop.permute.xlu0 %2678
      %v2680 = vsel %vm830, %v2677, %v2679
      %v2681 = vsel %vm830, %v2679, %v2677
      %v2682 = vsel %vm835, %v2680, 0.0
      %v2683 = vsel %vm836, %v2681, 0.0
      %2684 = vset.pattern.permute.xlu0 33
      %2685 = vperm.xlu0 %2684, %v1952
      %v2686 = vpop.permute.xlu0 %2685
      %v2688 = vmul.f32 %v2686, %v2682
      %v2689 = vmul.f32 %v2686, %v2683
      %v2690 = vadd.f32 %v2674, %v2688
      %v2691 = vadd.f32 %v2675, %v2689
      %2692 = vrot.lane.b32.xlu0 %v2572, 111
      %v2693 = vpop.permute.xlu0 %2692
      %2694 = vrot.lane.b32.xlu0 %v2573, 111
      %v2695 = vpop.permute.xlu0 %2694
      %v2696 = vsel %vm851, %v2693, %v2695
      %v2697 = vsel %vm851, %v2695, %v2693
      %v2698 = vsel %vm856, %v2696, 0.0
      %v2699 = vsel %vm857, %v2697, 0.0
      %2700 = vset.pattern.permute.xlu0 34
      %2701 = vperm.xlu0 %2700, %v1952
      %v2702 = vpop.permute.xlu0 %2701
      %v2704 = vmul.f32 %v2702, %v2698
      %v2705 = vmul.f32 %v2702, %v2699
      %v2706 = vadd.f32 %v2690, %v2704
      %v2707 = vadd.f32 %v2691, %v2705
      %v2708 = vadd.f32 %v2384, %v2706
      %v2709 = vadd.f32 %v2385, %v2707
      %v2710 = vadd.f32 %v2708, %v1949
      %v2711 = vadd.f32 %v2709, %v1950
      %v2712 = vsel %vm385, %v2710, 0.0
      %v2713 = vrot.slane %v2712, 4
      %v2714 = vadd.f32 %v2712, %v2713
      %v2715 = vrot.slane %v2714, 2
      %v2716 = vadd.f32 %v2714, %v2715
      %v2717 = vrot.slane %v2716, 1
      %v2718 = vadd.f32 %v2716, %v2717
      %v2719 = vsel %vm385, %v2711, 0.0
      %v2720 = vrot.slane %v2719, 4
      %v2721 = vadd.f32 %v2719, %v2720
      %v2722 = vrot.slane %v2721, 2
      %v2723 = vadd.f32 %v2721, %v2722
      %v2724 = vrot.slane %v2723, 1
      %v2725 = vadd.f32 %v2723, %v2724
      %v2726 = vmul.f32 %v2718, %v1076
      %v2727 = vmul.f32 %v2725, %v1076
      %v2728 = vsub.f32 %v2710, %v2726
      %v2729 = vsub.f32 %v2711, %v2727
      %v2730 = vmul.f32 %v2728, %v2728
      %v2731 = vmul.f32 %v2729, %v2729
      %v2732 = vsel %vm385, %v2730, 0.0
      %v2733 = vrot.slane %v2732, 4
      %v2734 = vadd.f32 %v2732, %v2733
      %v2735 = vrot.slane %v2734, 2
      %v2736 = vadd.f32 %v2734, %v2735
      %v2737 = vrot.slane %v2736, 1
      %v2738 = vadd.f32 %v2736, %v2737
      %v2739 = vsel %vm385, %v2731, 0.0
      %v2740 = vrot.slane %v2739, 4
      %v2741 = vadd.f32 %v2739, %v2740
      %v2742 = vrot.slane %v2741, 2
      %v2743 = vadd.f32 %v2741, %v2742
      %v2744 = vrot.slane %v2743, 1
      %v2745 = vadd.f32 %v2743, %v2744
      %v2746 = vmul.f32 %v2738, %v1076
      %v2747 = vmul.f32 %v2745, %v1076
      %v2748 = vadd.f32 %v2746, 1e-05
      %v2749 = vadd.f32 %v2747, 1e-05
      %v2750 = vrsqrt.pop %v2748
      %v2751 = vrsqrt.pop %v2749
      %v2752 = vmul.f32 %v2728, %v2750
      %v2753 = vmul.f32 %v2729, %v2751
      %2754 = vset.pattern.permute.xlu0 35
      %2755 = vperm.xlu0 %2754, %v1952
      %v2756 = vpop.permute.xlu0 %2755
      %v2758 = vmul.f32 %v2752, %v2756
      %v2759 = vmul.f32 %v2753, %v2756
      %2760 = vset.pattern.permute.xlu0 36
      %2761 = vperm.xlu0 %2760, %v1952
      %v2762 = vpop.permute.xlu0 %2761
      %v2764 = vadd.f32 %v2758, %v2762
      %v2765 = vadd.f32 %v2759, %v2762
      %2767 = vset.pattern.permute.xlu0 0
      %2768 = vperm.xlu0 %2767, %v1955
      %v2769 = vpop.permute.xlu0 %2768
      %2772 = vset.pattern.permute.xlu0 0
      %2773 = vperm.xlu0 %2772, %v1956
      %v2774 = vpop.permute.xlu0 %2773
      %v2776 = vlaneseq
      %v2777 = vshrl.u32 %v2776, 7
      %v2778 = vsub.s32 0, %v2777
      %v2779 = vrot.slane %v2764, %v2778
      %v2780 = vlaneseq
      %v2781 = vshrl.u32 %v2780, 7
      %v2782 = vsub.s32 0, %v2781
      %v2783 = vrot.slane %v2765, %v2782
      %v2784 = vmul.f32 %v2769, %v2779
      %v2785 = vmul.f32 %v2769, %v2783
      %v2786 = vmul.f32 %v2774, %v2779
      %v2787 = vmul.f32 %v2774, %v2783
      %2788 = vset.pattern.permute.xlu0 1
      %2789 = vperm.xlu0 %2788, %v1955
      %v2790 = vpop.permute.xlu0 %2789
      %2792 = vset.pattern.permute.xlu0 1
      %2793 = vperm.xlu0 %2792, %v1956
      %v2794 = vpop.permute.xlu0 %2793
      %v2796 = vlaneseq
      %v2797 = vshrl.u32 %v2796, 7
      %v2798 = vsub.s32 1, %v2797
      %v2799 = vrot.slane %v2764, %v2798
      %v2800 = vlaneseq
      %v2801 = vshrl.u32 %v2800, 7
      %v2802 = vsub.s32 1, %v2801
      %v2803 = vrot.slane %v2765, %v2802
      %v2804 = vmul.f32 %v2790, %v2799
      %v2805 = vmul.f32 %v2790, %v2803
      %v2806 = vmul.f32 %v2794, %v2799
      %v2807 = vmul.f32 %v2794, %v2803
      %v2808 = vadd.f32 %v2784, %v2804
      %v2809 = vadd.f32 %v2785, %v2805
      %v2810 = vadd.f32 %v2786, %v2806
      %v2811 = vadd.f32 %v2787, %v2807
      %2812 = vset.pattern.permute.xlu0 2
      %2813 = vperm.xlu0 %2812, %v1955
      %v2814 = vpop.permute.xlu0 %2813
      %2816 = vset.pattern.permute.xlu0 2
      %2817 = vperm.xlu0 %2816, %v1956
      %v2818 = vpop.permute.xlu0 %2817
      %v2820 = vlaneseq
      %v2821 = vshrl.u32 %v2820, 7
      %v2822 = vsub.s32 2, %v2821
      %v2823 = vrot.slane %v2764, %v2822
      %v2824 = vlaneseq
      %v2825 = vshrl.u32 %v2824, 7
      %v2826 = vsub.s32 2, %v2825
      %v2827 = vrot.slane %v2765, %v2826
      %v2828 = vmul.f32 %v2814, %v2823
      %v2829 = vmul.f32 %v2814, %v2827
      %v2830 = vmul.f32 %v2818, %v2823
      %v2831 = vmul.f32 %v2818, %v2827
      %v2832 = vadd.f32 %v2808, %v2828
      %v2833 = vadd.f32 %v2809, %v2829
      %v2834 = vadd.f32 %v2810, %v2830
      %v2835 = vadd.f32 %v2811, %v2831
      %2836 = vset.pattern.permute.xlu0 3
      %2837 = vperm.xlu0 %2836, %v1955
      %v2838 = vpop.permute.xlu0 %2837
      %2840 = vset.pattern.permute.xlu0 3
      %2841 = vperm.xlu0 %2840, %v1956
      %v2842 = vpop.permute.xlu0 %2841
      %v2844 = vlaneseq
      %v2845 = vshrl.u32 %v2844, 7
      %v2846 = vsub.s32 3, %v2845
      %v2847 = vrot.slane %v2764, %v2846
      %v2848 = vlaneseq
      %v2849 = vshrl.u32 %v2848, 7
      %v2850 = vsub.s32 3, %v2849
      %v2851 = vrot.slane %v2765, %v2850
      %v2852 = vmul.f32 %v2838, %v2847
      %v2853 = vmul.f32 %v2838, %v2851
      %v2854 = vmul.f32 %v2842, %v2847
      %v2855 = vmul.f32 %v2842, %v2851
      %v2856 = vadd.f32 %v2832, %v2852
      %v2857 = vadd.f32 %v2833, %v2853
      %v2858 = vadd.f32 %v2834, %v2854
      %v2859 = vadd.f32 %v2835, %v2855
      %v2860 = vmul.f32 %v2856, 0.70710677
      %v2861 = vmul.f32 %v2857, 0.70710677
      %v2862 = vmul.f32 %v2858, 0.70710677
      %v2863 = vmul.f32 %v2859, 0.70710677
      %v2864 = vand.u32 2147483647, %v2860
      %v2865 = vand.u32 2147483647, %v2861
      %v2866 = vand.u32 2147483647, %v2862
      %v2867 = vand.u32 2147483647, %v2863
      %v2868 = vmul.f32 %v2864, 0.3275911
      %v2869 = vmul.f32 %v2865, 0.3275911
      %v2870 = vmul.f32 %v2866, 0.3275911
      %v2871 = vmul.f32 %v2867, 0.3275911
      %v2872 = vadd.f32 %v2868, 1.0
      %v2873 = vadd.f32 %v2869, 1.0
      %v2874 = vadd.f32 %v2870, 1.0
      %v2875 = vadd.f32 %v2871, 1.0
      %v2876 = vrcp.pop %v2872
      %v2877 = vmul.f32 1.0, %v2876
      %v2878 = vrcp.pop %v2873
      %v2879 = vmul.f32 1.0, %v2878
      %v2880 = vrcp.pop %v2874
      %v2881 = vmul.f32 1.0, %v2880
      %v2882 = vrcp.pop %v2875
      %v2883 = vmul.f32 1.0, %v2882
      %v2884 = vmul.f32 %v2877, 1.0614054
      %v2885 = vmul.f32 %v2879, 1.0614054
      %v2886 = vmul.f32 %v2881, 1.0614054
      %v2887 = vmul.f32 %v2883, 1.0614054
      %v2888 = vsub.f32 %v2884, 1.4531521
      %v2889 = vsub.f32 %v2885, 1.4531521
      %v2890 = vsub.f32 %v2886, 1.4531521
      %v2891 = vsub.f32 %v2887, 1.4531521
      %v2892 = vmul.f32 %v2888, %v2877
      %v2893 = vmul.f32 %v2889, %v2879
      %v2894 = vmul.f32 %v2890, %v2881
      %v2895 = vmul.f32 %v2891, %v2883
      %v2896 = vadd.f32 %v2892, 1.4214138
      %v2897 = vadd.f32 %v2893, 1.4214138
      %v2898 = vadd.f32 %v2894, 1.4214138
      %v2899 = vadd.f32 %v2895, 1.4214138
      %v2900 = vmul.f32 %v2896, %v2877
      %v2901 = vmul.f32 %v2897, %v2879
      %v2902 = vmul.f32 %v2898, %v2881
      %v2903 = vmul.f32 %v2899, %v2883
      %v2904 = vsub.f32 %v2900, 0.28449672
      %v2905 = vsub.f32 %v2901, 0.28449672
      %v2906 = vsub.f32 %v2902, 0.28449672
      %v2907 = vsub.f32 %v2903, 0.28449672
      %v2908 = vmul.f32 %v2904, %v2877
      %v2909 = vmul.f32 %v2905, %v2879
      %v2910 = vmul.f32 %v2906, %v2881
      %v2911 = vmul.f32 %v2907, %v2883
      %v2912 = vadd.f32 %v2908, 0.2548296
      %v2913 = vadd.f32 %v2909, 0.2548296
      %v2914 = vadd.f32 %v2910, 0.2548296
      %v2915 = vadd.f32 %v2911, 0.2548296
      %v2916 = vmul.f32 %v2912, %v2877
      %v2917 = vmul.f32 %v2913, %v2879
      %v2918 = vmul.f32 %v2914, %v2881
      %v2919 = vmul.f32 %v2915, %v2883
      %v2920 = vsub.f32 0.0, %v2864
      %v2921 = vsub.f32 0.0, %v2865
      %v2922 = vsub.f32 0.0, %v2866
      %v2923 = vsub.f32 0.0, %v2867
      %v2924 = vmul.f32 %v2920, %v2864
      %v2925 = vmul.f32 %v2921, %v2865
      %v2926 = vmul.f32 %v2922, %v2866
      %v2927 = vmul.f32 %v2923, %v2867
      %v2928 = vmul.f32 %v2924, 1.442695
      %v2929 = vpow.pop %v2928
      %v2930 = vmul.f32 %v2925, 1.442695
      %v2931 = vpow.pop %v2930
      %v2932 = vmul.f32 %v2926, 1.442695
      %v2933 = vpow.pop %v2932
      %v2934 = vmul.f32 %v2927, 1.442695
      %v2935 = vpow.pop %v2934
      %v2936 = vmul.f32 %v2916, %v2929
      %v2937 = vmul.f32 %v2917, %v2931
      %v2938 = vmul.f32 %v2918, %v2933
      %v2939 = vmul.f32 %v2919, %v2935
      %v2940 = vsub.f32 1.0, %v2936
      %v2941 = vsub.f32 1.0, %v2937
      %v2942 = vsub.f32 1.0, %v2938
      %v2943 = vsub.f32 1.0, %v2939
      %vm2944 = vcmp.ge.f32.partialorder %v2860, 0.0
      %vm2945 = vcmp.ge.f32.partialorder %v2861, 0.0
      %vm2946 = vcmp.ge.f32.partialorder %v2862, 0.0
      %vm2947 = vcmp.ge.f32.partialorder %v2863, 0.0
      %v2948 = vsub.f32 0.0, %v2940
      %v2949 = vsub.f32 0.0, %v2941
      %v2950 = vsub.f32 0.0, %v2942
      %v2951 = vsub.f32 0.0, %v2943
      %v2952 = vsel %vm2944, %v2940, %v2948
      %v2953 = vsel %vm2945, %v2941, %v2949
      %v2954 = vsel %vm2946, %v2942, %v2950
      %v2955 = vsel %vm2947, %v2943, %v2951
      %v2956 = vmul.f32 %v2856, 0.5
      %v2957 = vmul.f32 %v2857, 0.5
      %v2958 = vmul.f32 %v2858, 0.5
      %v2959 = vmul.f32 %v2859, 0.5
      %v2960 = vadd.f32 %v2952, 1.0
      %v2961 = vadd.f32 %v2953, 1.0
      %v2962 = vadd.f32 %v2954, 1.0
      %v2963 = vadd.f32 %v2955, 1.0
      %v2964 = vmul.f32 %v2956, %v2960
      %v2965 = vmul.f32 %v2957, %v2961
      %v2966 = vmul.f32 %v2958, %v2962
      %v2967 = vmul.f32 %v2959, %v2963
      %2968 = vset.pattern.permute.xlu0 8
      %2969 = vperm.xlu0 %2968, %v1955
      %v2970 = vpop.permute.xlu0 %2969
      %2972 = vset.pattern.permute.xlu0 8
      %2973 = vperm.xlu0 %2972, %v1956
      %v2974 = vpop.permute.xlu0 %2973
      %v2976 = vmul.f32 %v2970, %v2964
      %v2977 = vmul.f32 %v2970, %v2965
      %v2978 = vmul.f32 %v2974, %v2966
      %v2979 = vmul.f32 %v2974, %v2967
      %2980 = vrot.lane.b32.xlu0 %v2964, 17
      %v2981 = vpop.permute.xlu0 %2980
      %2982 = vrot.lane.b32.xlu0 %v2966, 17
      %v2983 = vpop.permute.xlu0 %2982
      %2984 = vrot.lane.b32.xlu0 %v2965, 17
      %v2985 = vpop.permute.xlu0 %2984
      %2986 = vrot.lane.b32.xlu0 %v2967, 17
      %v2987 = vpop.permute.xlu0 %2986
      %v2988 = vsel %vm704, %v2981, %v2985
      %v2989 = vsel %vm704, %v2983, %v2987
      %v2990 = vsel %vm704, %v2985, %v2981
      %v2991 = vsel %vm704, %v2987, %v2983
      %v2992 = vsel %vm709, %v2990, 0.0
      %v2993 = vsel %vm710, %v2988, 0.0
      %v2994 = vsel %vm709, %v2991, 0.0
      %v2995 = vsel %vm710, %v2989, 0.0
      %2996 = vset.pattern.permute.xlu0 4
      %2997 = vperm.xlu0 %2996, %v1955
      %v2998 = vpop.permute.xlu0 %2997
      %3000 = vset.pattern.permute.xlu0 4
      %3001 = vperm.xlu0 %3000, %v1956
      %v3002 = vpop.permute.xlu0 %3001
      %v3004 = vmul.f32 %v2998, %v2992
      %v3005 = vmul.f32 %v2998, %v2993
      %v3006 = vmul.f32 %v3002, %v2994
      %v3007 = vmul.f32 %v3002, %v2995
      %v3008 = vadd.f32 %v2976, %v3004
      %v3009 = vadd.f32 %v2977, %v3005
      %v3010 = vadd.f32 %v2978, %v3006
      %v3011 = vadd.f32 %v2979, %v3007
      %3012 = vrot.lane.b32.xlu0 %v2964, 16
      %v3013 = vpop.permute.xlu0 %3012
      %3014 = vrot.lane.b32.xlu0 %v2966, 16
      %v3015 = vpop.permute.xlu0 %3014
      %3016 = vrot.lane.b32.xlu0 %v2965, 16
      %v3017 = vpop.permute.xlu0 %3016
      %3018 = vrot.lane.b32.xlu0 %v2967, 16
      %v3019 = vpop.permute.xlu0 %3018
      %v3020 = vsel %vm725, %v3013, %v3017
      %v3021 = vsel %vm725, %v3015, %v3019
      %v3022 = vsel %vm725, %v3017, %v3013
      %v3023 = vsel %vm725, %v3019, %v3015
      %v3024 = vsel %vm730, %v3022, 0.0
      %v3025 = vsel %vm731, %v3020, 0.0
      %v3026 = vsel %vm730, %v3023, 0.0
      %v3027 = vsel %vm731, %v3021, 0.0
      %3028 = vset.pattern.permute.xlu0 5
      %3029 = vperm.xlu0 %3028, %v1955
      %v3030 = vpop.permute.xlu0 %3029
      %3032 = vset.pattern.permute.xlu0 5
      %3033 = vperm.xlu0 %3032, %v1956
      %v3034 = vpop.permute.xlu0 %3033
      %v3036 = vmul.f32 %v3030, %v3024
      %v3037 = vmul.f32 %v3030, %v3025
      %v3038 = vmul.f32 %v3034, %v3026
      %v3039 = vmul.f32 %v3034, %v3027
      %v3040 = vadd.f32 %v3008, %v3036
      %v3041 = vadd.f32 %v3009, %v3037
      %v3042 = vadd.f32 %v3010, %v3038
      %v3043 = vadd.f32 %v3011, %v3039
      %3044 = vrot.lane.b32.xlu0 %v2964, 15
      %v3045 = vpop.permute.xlu0 %3044
      %3046 = vrot.lane.b32.xlu0 %v2966, 15
      %v3047 = vpop.permute.xlu0 %3046
      %3048 = vrot.lane.b32.xlu0 %v2965, 15
      %v3049 = vpop.permute.xlu0 %3048
      %3050 = vrot.lane.b32.xlu0 %v2967, 15
      %v3051 = vpop.permute.xlu0 %3050
      %v3052 = vsel %vm746, %v3045, %v3049
      %v3053 = vsel %vm746, %v3047, %v3051
      %v3054 = vsel %vm746, %v3049, %v3045
      %v3055 = vsel %vm746, %v3051, %v3047
      %v3056 = vsel %vm751, %v3054, 0.0
      %v3057 = vsel %vm752, %v3052, 0.0
      %v3058 = vsel %vm751, %v3055, 0.0
      %v3059 = vsel %vm752, %v3053, 0.0
      %3060 = vset.pattern.permute.xlu0 6
      %3061 = vperm.xlu0 %3060, %v1955
      %v3062 = vpop.permute.xlu0 %3061
      %3064 = vset.pattern.permute.xlu0 6
      %3065 = vperm.xlu0 %3064, %v1956
      %v3066 = vpop.permute.xlu0 %3065
      %v3068 = vmul.f32 %v3062, %v3056
      %v3069 = vmul.f32 %v3062, %v3057
      %v3070 = vmul.f32 %v3066, %v3058
      %v3071 = vmul.f32 %v3066, %v3059
      %v3072 = vadd.f32 %v3040, %v3068
      %v3073 = vadd.f32 %v3041, %v3069
      %v3074 = vadd.f32 %v3042, %v3070
      %v3075 = vadd.f32 %v3043, %v3071
      %3076 = vrot.lane.b32.xlu0 %v2964, 1
      %v3077 = vpop.permute.xlu0 %3076
      %3078 = vrot.lane.b32.xlu0 %v2966, 1
      %v3079 = vpop.permute.xlu0 %3078
      %3080 = vrot.lane.b32.xlu0 %v2965, 1
      %v3081 = vpop.permute.xlu0 %3080
      %3082 = vrot.lane.b32.xlu0 %v2967, 1
      %v3083 = vpop.permute.xlu0 %3082
      %v3084 = vsel %vm767, %v3077, %v3081
      %v3085 = vsel %vm767, %v3079, %v3083
      %v3086 = vsel %vm767, %v3081, %v3077
      %v3087 = vsel %vm767, %v3083, %v3079
      %v3088 = vsel %vm772, %v3086, 0.0
      %v3089 = vsel %vm773, %v3084, 0.0
      %v3090 = vsel %vm772, %v3087, 0.0
      %v3091 = vsel %vm773, %v3085, 0.0
      %3092 = vset.pattern.permute.xlu0 7
      %3093 = vperm.xlu0 %3092, %v1955
      %v3094 = vpop.permute.xlu0 %3093
      %3096 = vset.pattern.permute.xlu0 7
      %3097 = vperm.xlu0 %3096, %v1956
      %v3098 = vpop.permute.xlu0 %3097
      %v3100 = vmul.f32 %v3094, %v3088
      %v3101 = vmul.f32 %v3094, %v3089
      %v3102 = vmul.f32 %v3098, %v3090
      %v3103 = vmul.f32 %v3098, %v3091
      %v3104 = vadd.f32 %v3072, %v3100
      %v3105 = vadd.f32 %v3073, %v3101
      %v3106 = vadd.f32 %v3074, %v3102
      %v3107 = vadd.f32 %v3075, %v3103
      %3108 = vrot.lane.b32.xlu0 %v2964, 127
      %v3109 = vpop.permute.xlu0 %3108
      %3110 = vrot.lane.b32.xlu0 %v2966, 127
      %v3111 = vpop.permute.xlu0 %3110
      %3112 = vrot.lane.b32.xlu0 %v2965, 127
      %v3113 = vpop.permute.xlu0 %3112
      %3114 = vrot.lane.b32.xlu0 %v2967, 127
      %v3115 = vpop.permute.xlu0 %3114
      %v3116 = vsel %vm788, %v3109, %v3113
      %v3117 = vsel %vm788, %v3111, %v3115
      %v3118 = vsel %vm788, %v3113, %v3109
      %v3119 = vsel %vm788, %v3115, %v3111
      %v3120 = vsel %vm793, %v3116, 0.0
      %v3121 = vsel %vm794, %v3118, 0.0
      %v3122 = vsel %vm793, %v3117, 0.0
      %v3123 = vsel %vm794, %v3119, 0.0
      %3124 = vset.pattern.permute.xlu0 9
      %3125 = vperm.xlu0 %3124, %v1955
      %v3126 = vpop.permute.xlu0 %3125
      %3128 = vset.pattern.permute.xlu0 9
      %3129 = vperm.xlu0 %3128, %v1956
      %v3130 = vpop.permute.xlu0 %3129
      %v3132 = vmul.f32 %v3126, %v3120
      %v3133 = vmul.f32 %v3126, %v3121
      %v3134 = vmul.f32 %v3130, %v3122
      %v3135 = vmul.f32 %v3130, %v3123
      %v3136 = vadd.f32 %v3104, %v3132
      %v3137 = vadd.f32 %v3105, %v3133
      %v3138 = vadd.f32 %v3106, %v3134
      %v3139 = vadd.f32 %v3107, %v3135
      %3140 = vrot.lane.b32.xlu0 %v2964, 113
      %v3141 = vpop.permute.xlu0 %3140
      %3142 = vrot.lane.b32.xlu0 %v2966, 113
      %v3143 = vpop.permute.xlu0 %3142
      %3144 = vrot.lane.b32.xlu0 %v2965, 113
      %v3145 = vpop.permute.xlu0 %3144
      %3146 = vrot.lane.b32.xlu0 %v2967, 113
      %v3147 = vpop.permute.xlu0 %3146
      %v3148 = vsel %vm809, %v3141, %v3145
      %v3149 = vsel %vm809, %v3143, %v3147
      %v3150 = vsel %vm809, %v3145, %v3141
      %v3151 = vsel %vm809, %v3147, %v3143
      %v3152 = vsel %vm814, %v3148, 0.0
      %v3153 = vsel %vm815, %v3150, 0.0
      %v3154 = vsel %vm814, %v3149, 0.0
      %v3155 = vsel %vm815, %v3151, 0.0
      %3156 = vset.pattern.permute.xlu0 10
      %3157 = vperm.xlu0 %3156, %v1955
      %v3158 = vpop.permute.xlu0 %3157
      %3160 = vset.pattern.permute.xlu0 10
      %3161 = vperm.xlu0 %3160, %v1956
      %v3162 = vpop.permute.xlu0 %3161
      %v3164 = vmul.f32 %v3158, %v3152
      %v3165 = vmul.f32 %v3158, %v3153
      %v3166 = vmul.f32 %v3162, %v3154
      %v3167 = vmul.f32 %v3162, %v3155
      %v3168 = vadd.f32 %v3136, %v3164
      %v3169 = vadd.f32 %v3137, %v3165
      %v3170 = vadd.f32 %v3138, %v3166
      %v3171 = vadd.f32 %v3139, %v3167
      %3172 = vrot.lane.b32.xlu0 %v2964, 112
      %v3173 = vpop.permute.xlu0 %3172
      %3174 = vrot.lane.b32.xlu0 %v2966, 112
      %v3175 = vpop.permute.xlu0 %3174
      %3176 = vrot.lane.b32.xlu0 %v2965, 112
      %v3177 = vpop.permute.xlu0 %3176
      %3178 = vrot.lane.b32.xlu0 %v2967, 112
      %v3179 = vpop.permute.xlu0 %3178
      %v3180 = vsel %vm830, %v3173, %v3177
      %v3181 = vsel %vm830, %v3175, %v3179
      %v3182 = vsel %vm830, %v3177, %v3173
      %v3183 = vsel %vm830, %v3179, %v3175
      %v3184 = vsel %vm835, %v3180, 0.0
      %v3185 = vsel %vm836, %v3182, 0.0
      %v3186 = vsel %vm835, %v3181, 0.0
      %v3187 = vsel %vm836, %v3183, 0.0
      %3188 = vset.pattern.permute.xlu0 11
      %3189 = vperm.xlu0 %3188, %v1955
      %v3190 = vpop.permute.xlu0 %3189
      %3192 = vset.pattern.permute.xlu0 11
      %3193 = vperm.xlu0 %3192, %v1956
      %v3194 = vpop.permute.xlu0 %3193
      %v3196 = vmul.f32 %v3190, %v3184
      %v3197 = vmul.f32 %v3190, %v3185
      %v3198 = vmul.f32 %v3194, %v3186
      %v3199 = vmul.f32 %v3194, %v3187
      %v3200 = vadd.f32 %v3168, %v3196
      %v3201 = vadd.f32 %v3169, %v3197
      %v3202 = vadd.f32 %v3170, %v3198
      %v3203 = vadd.f32 %v3171, %v3199
      %3204 = vrot.lane.b32.xlu0 %v2964, 111
      %v3205 = vpop.permute.xlu0 %3204
      %3206 = vrot.lane.b32.xlu0 %v2966, 111
      %v3207 = vpop.permute.xlu0 %3206
      %3208 = vrot.lane.b32.xlu0 %v2965, 111
      %v3209 = vpop.permute.xlu0 %3208
      %3210 = vrot.lane.b32.xlu0 %v2967, 111
      %v3211 = vpop.permute.xlu0 %3210
      %v3212 = vsel %vm851, %v3205, %v3209
      %v3213 = vsel %vm851, %v3207, %v3211
      %v3214 = vsel %vm851, %v3209, %v3205
      %v3215 = vsel %vm851, %v3211, %v3207
      %v3216 = vsel %vm856, %v3212, 0.0
      %v3217 = vsel %vm857, %v3214, 0.0
      %v3218 = vsel %vm856, %v3213, 0.0
      %v3219 = vsel %vm857, %v3215, 0.0
      %3220 = vset.pattern.permute.xlu0 12
      %3221 = vperm.xlu0 %3220, %v1955
      %v3222 = vpop.permute.xlu0 %3221
      %3224 = vset.pattern.permute.xlu0 12
      %3225 = vperm.xlu0 %3224, %v1956
      %v3226 = vpop.permute.xlu0 %3225
      %v3228 = vmul.f32 %v3222, %v3216
      %v3229 = vmul.f32 %v3222, %v3217
      %v3230 = vmul.f32 %v3226, %v3218
      %v3231 = vmul.f32 %v3226, %v3219
      %v3232 = vadd.f32 %v3200, %v3228
      %v3233 = vadd.f32 %v3201, %v3229
      %v3234 = vadd.f32 %v3202, %v3230
      %v3235 = vadd.f32 %v3203, %v3231
      %v3236 = vmul.f32 %v3232, 0.70710677
      %v3237 = vmul.f32 %v3233, 0.70710677
      %v3238 = vmul.f32 %v3234, 0.70710677
      %v3239 = vmul.f32 %v3235, 0.70710677
      %v3240 = vand.u32 2147483647, %v3236
      %v3241 = vand.u32 2147483647, %v3237
      %v3242 = vand.u32 2147483647, %v3238
      %v3243 = vand.u32 2147483647, %v3239
      %v3244 = vmul.f32 %v3240, 0.3275911
      %v3245 = vmul.f32 %v3241, 0.3275911
      %v3246 = vmul.f32 %v3242, 0.3275911
      %v3247 = vmul.f32 %v3243, 0.3275911
      %v3248 = vadd.f32 %v3244, 1.0
      %v3249 = vadd.f32 %v3245, 1.0
      %v3250 = vadd.f32 %v3246, 1.0
      %v3251 = vadd.f32 %v3247, 1.0
      %v3252 = vrcp.pop %v3248
      %v3253 = vmul.f32 1.0, %v3252
      %v3254 = vrcp.pop %v3249
      %v3255 = vmul.f32 1.0, %v3254
      %v3256 = vrcp.pop %v3250
      %v3257 = vmul.f32 1.0, %v3256
      %v3258 = vrcp.pop %v3251
      %v3259 = vmul.f32 1.0, %v3258
      %v3260 = vmul.f32 %v3253, 1.0614054
      %v3261 = vmul.f32 %v3255, 1.0614054
      %v3262 = vmul.f32 %v3257, 1.0614054
      %v3263 = vmul.f32 %v3259, 1.0614054
      %v3264 = vsub.f32 %v3260, 1.4531521
      %v3265 = vsub.f32 %v3261, 1.4531521
      %v3266 = vsub.f32 %v3262, 1.4531521
      %v3267 = vsub.f32 %v3263, 1.4531521
      %v3268 = vmul.f32 %v3264, %v3253
      %v3269 = vmul.f32 %v3265, %v3255
      %v3270 = vmul.f32 %v3266, %v3257
      %v3271 = vmul.f32 %v3267, %v3259
      %v3272 = vadd.f32 %v3268, 1.4214138
      %v3273 = vadd.f32 %v3269, 1.4214138
      %v3274 = vadd.f32 %v3270, 1.4214138
      %v3275 = vadd.f32 %v3271, 1.4214138
      %v3276 = vmul.f32 %v3272, %v3253
      %v3277 = vmul.f32 %v3273, %v3255
      %v3278 = vmul.f32 %v3274, %v3257
      %v3279 = vmul.f32 %v3275, %v3259
      %v3280 = vsub.f32 %v3276, 0.28449672
      %v3281 = vsub.f32 %v3277, 0.28449672
      %v3282 = vsub.f32 %v3278, 0.28449672
      %v3283 = vsub.f32 %v3279, 0.28449672
      %v3284 = vmul.f32 %v3280, %v3253
      %v3285 = vmul.f32 %v3281, %v3255
      %v3286 = vmul.f32 %v3282, %v3257
      %v3287 = vmul.f32 %v3283, %v3259
      %v3288 = vadd.f32 %v3284, 0.2548296
      %v3289 = vadd.f32 %v3285, 0.2548296
      %v3290 = vadd.f32 %v3286, 0.2548296
      %v3291 = vadd.f32 %v3287, 0.2548296
      %v3292 = vmul.f32 %v3288, %v3253
      %v3293 = vmul.f32 %v3289, %v3255
      %v3294 = vmul.f32 %v3290, %v3257
      %v3295 = vmul.f32 %v3291, %v3259
      %v3296 = vsub.f32 0.0, %v3240
      %v3297 = vsub.f32 0.0, %v3241
      %v3298 = vsub.f32 0.0, %v3242
      %v3299 = vsub.f32 0.0, %v3243
      %v3300 = vmul.f32 %v3296, %v3240
      %v3301 = vmul.f32 %v3297, %v3241
      %v3302 = vmul.f32 %v3298, %v3242
      %v3303 = vmul.f32 %v3299, %v3243
      %v3304 = vmul.f32 %v3300, 1.442695
      %v3305 = vpow.pop %v3304
      %v3306 = vmul.f32 %v3301, 1.442695
      %v3307 = vpow.pop %v3306
      %v3308 = vmul.f32 %v3302, 1.442695
      %v3309 = vpow.pop %v3308
      %v3310 = vmul.f32 %v3303, 1.442695
      %v3311 = vpow.pop %v3310
      %v3312 = vmul.f32 %v3292, %v3305
      %v3313 = vmul.f32 %v3293, %v3307
      %v3314 = vmul.f32 %v3294, %v3309
      %v3315 = vmul.f32 %v3295, %v3311
      %v3316 = vsub.f32 1.0, %v3312
      %v3317 = vsub.f32 1.0, %v3313
      %v3318 = vsub.f32 1.0, %v3314
      %v3319 = vsub.f32 1.0, %v3315
      %vm3320 = vcmp.ge.f32.partialorder %v3236, 0.0
      %vm3321 = vcmp.ge.f32.partialorder %v3237, 0.0
      %vm3322 = vcmp.ge.f32.partialorder %v3238, 0.0
      %vm3323 = vcmp.ge.f32.partialorder %v3239, 0.0
      %v3324 = vsub.f32 0.0, %v3316
      %v3325 = vsub.f32 0.0, %v3317
      %v3326 = vsub.f32 0.0, %v3318
      %v3327 = vsub.f32 0.0, %v3319
      %v3328 = vsel %vm3320, %v3316, %v3324
      %v3329 = vsel %vm3321, %v3317, %v3325
      %v3330 = vsel %vm3322, %v3318, %v3326
      %v3331 = vsel %vm3323, %v3319, %v3327
      %v3332 = vmul.f32 %v3232, 0.5
      %v3333 = vmul.f32 %v3233, 0.5
      %v3334 = vmul.f32 %v3234, 0.5
      %v3335 = vmul.f32 %v3235, 0.5
      %v3336 = vadd.f32 %v3328, 1.0
      %v3337 = vadd.f32 %v3329, 1.0
      %v3338 = vadd.f32 %v3330, 1.0
      %v3339 = vadd.f32 %v3331, 1.0
      %v3340 = vmul.f32 %v3332, %v3336
      %v3341 = vmul.f32 %v3333, %v3337
      %v3342 = vmul.f32 %v3334, %v3338
      %v3343 = vmul.f32 %v3335, %v3339
      %3344 = vset.pattern.permute.xlu0 37
      %3345 = vperm.xlu0 %3344, %v1952
      %v3346 = vpop.permute.xlu0 %3345
      %v3348 = vlaneseq
      %v3349 = vshrl.u32 %v3348, 7
      %v3350 = vsub.s32 0, %v3349
      %v3351 = vrot.slane %v3340, %v3350
      %v3352 = vlaneseq
      %v3353 = vshrl.u32 %v3352, 7
      %v3354 = vsub.s32 0, %v3353
      %v3355 = vrot.slane %v3341, %v3354
      %v3356 = vmul.f32 %v3346, %v3351
      %v3357 = vmul.f32 %v3346, %v3355
      %3358 = vset.pattern.permute.xlu0 38
      %3359 = vperm.xlu0 %3358, %v1952
      %v3360 = vpop.permute.xlu0 %3359
      %v3362 = vlaneseq
      %v3363 = vshrl.u32 %v3362, 7
      %v3364 = vsub.s32 1, %v3363
      %v3365 = vrot.slane %v3340, %v3364
      %v3366 = vlaneseq
      %v3367 = vshrl.u32 %v3366, 7
      %v3368 = vsub.s32 1, %v3367
      %v3369 = vrot.slane %v3341, %v3368
      %v3370 = vmul.f32 %v3360, %v3365
      %v3371 = vmul.f32 %v3360, %v3369
      %v3372 = vadd.f32 %v3356, %v3370
      %v3373 = vadd.f32 %v3357, %v3371
      %3374 = vset.pattern.permute.xlu0 39
      %3375 = vperm.xlu0 %3374, %v1952
      %v3376 = vpop.permute.xlu0 %3375
      %v3378 = vlaneseq
      %v3379 = vshrl.u32 %v3378, 7
      %v3380 = vsub.s32 2, %v3379
      %v3381 = vrot.slane %v3340, %v3380
      %v3382 = vlaneseq
      %v3383 = vshrl.u32 %v3382, 7
      %v3384 = vsub.s32 2, %v3383
      %v3385 = vrot.slane %v3341, %v3384
      %v3386 = vmul.f32 %v3376, %v3381
      %v3387 = vmul.f32 %v3376, %v3385
      %v3388 = vadd.f32 %v3372, %v3386
      %v3389 = vadd.f32 %v3373, %v3387
      %3390 = vset.pattern.permute.xlu0 40
      %3391 = vperm.xlu0 %3390, %v1952
      %v3392 = vpop.permute.xlu0 %3391
      %v3394 = vlaneseq
      %v3395 = vshrl.u32 %v3394, 7
      %v3396 = vsub.s32 3, %v3395
      %v3397 = vrot.slane %v3340, %v3396
      %v3398 = vlaneseq
      %v3399 = vshrl.u32 %v3398, 7
      %v3400 = vsub.s32 3, %v3399
      %v3401 = vrot.slane %v3341, %v3400
      %v3402 = vmul.f32 %v3392, %v3397
      %v3403 = vmul.f32 %v3392, %v3401
      %v3404 = vadd.f32 %v3388, %v3402
      %v3405 = vadd.f32 %v3389, %v3403
      %3406 = vset.pattern.permute.xlu0 41
      %3407 = vperm.xlu0 %3406, %v1952
      %v3408 = vpop.permute.xlu0 %3407
      %v3410 = vlaneseq
      %v3411 = vshrl.u32 %v3410, 7
      %v3412 = vsub.s32 4, %v3411
      %v3413 = vrot.slane %v3340, %v3412
      %v3414 = vlaneseq
      %v3415 = vshrl.u32 %v3414, 7
      %v3416 = vsub.s32 4, %v3415
      %v3417 = vrot.slane %v3341, %v3416
      %v3418 = vmul.f32 %v3408, %v3413
      %v3419 = vmul.f32 %v3408, %v3417
      %v3420 = vadd.f32 %v3404, %v3418
      %v3421 = vadd.f32 %v3405, %v3419
      %3422 = vset.pattern.permute.xlu0 42
      %3423 = vperm.xlu0 %3422, %v1952
      %v3424 = vpop.permute.xlu0 %3423
      %v3426 = vlaneseq
      %v3427 = vshrl.u32 %v3426, 7
      %v3428 = vsub.s32 5, %v3427
      %v3429 = vrot.slane %v3340, %v3428
      %v3430 = vlaneseq
      %v3431 = vshrl.u32 %v3430, 7
      %v3432 = vsub.s32 5, %v3431
      %v3433 = vrot.slane %v3341, %v3432
      %v3434 = vmul.f32 %v3424, %v3429
      %v3435 = vmul.f32 %v3424, %v3433
      %v3436 = vadd.f32 %v3420, %v3434
      %v3437 = vadd.f32 %v3421, %v3435
      %3438 = vset.pattern.permute.xlu0 43
      %3439 = vperm.xlu0 %3438, %v1952
      %v3440 = vpop.permute.xlu0 %3439
      %v3442 = vlaneseq
      %v3443 = vshrl.u32 %v3442, 7
      %v3444 = vsub.s32 6, %v3443
      %v3445 = vrot.slane %v3340, %v3444
      %v3446 = vlaneseq
      %v3447 = vshrl.u32 %v3446, 7
      %v3448 = vsub.s32 6, %v3447
      %v3449 = vrot.slane %v3341, %v3448
      %v3450 = vmul.f32 %v3440, %v3445
      %v3451 = vmul.f32 %v3440, %v3449
      %v3452 = vadd.f32 %v3436, %v3450
      %v3453 = vadd.f32 %v3437, %v3451
      %3454 = vset.pattern.permute.xlu0 44
      %3455 = vperm.xlu0 %3454, %v1952
      %v3456 = vpop.permute.xlu0 %3455
      %v3458 = vlaneseq
      %v3459 = vshrl.u32 %v3458, 7
      %v3460 = vsub.s32 7, %v3459
      %v3461 = vrot.slane %v3340, %v3460
      %v3462 = vlaneseq
      %v3463 = vshrl.u32 %v3462, 7
      %v3464 = vsub.s32 7, %v3463
      %v3465 = vrot.slane %v3341, %v3464
      %v3466 = vmul.f32 %v3456, %v3461
      %v3467 = vmul.f32 %v3456, %v3465
      %v3468 = vadd.f32 %v3452, %v3466
      %v3469 = vadd.f32 %v3453, %v3467
      %3470 = vset.pattern.permute.xlu0 45
      %3471 = vperm.xlu0 %3470, %v1952
      %v3472 = vpop.permute.xlu0 %3471
      %v3474 = vlaneseq
      %v3475 = vshrl.u32 %v3474, 7
      %v3476 = vsub.s32 0, %v3475
      %v3477 = vrot.slane %v3342, %v3476
      %v3478 = vlaneseq
      %v3479 = vshrl.u32 %v3478, 7
      %v3480 = vsub.s32 0, %v3479
      %v3481 = vrot.slane %v3343, %v3480
      %v3482 = vmul.f32 %v3472, %v3477
      %v3483 = vmul.f32 %v3472, %v3481
      %v3484 = vadd.f32 %v3468, %v3482
      %v3485 = vadd.f32 %v3469, %v3483
      %3486 = vset.pattern.permute.xlu0 46
      %3487 = vperm.xlu0 %3486, %v1952
      %v3488 = vpop.permute.xlu0 %3487
      %v3490 = vlaneseq
      %v3491 = vshrl.u32 %v3490, 7
      %v3492 = vsub.s32 1, %v3491
      %v3493 = vrot.slane %v3342, %v3492
      %v3494 = vlaneseq
      %v3495 = vshrl.u32 %v3494, 7
      %v3496 = vsub.s32 1, %v3495
      %v3497 = vrot.slane %v3343, %v3496
      %v3498 = vmul.f32 %v3488, %v3493
      %v3499 = vmul.f32 %v3488, %v3497
      %v3500 = vadd.f32 %v3484, %v3498
      %v3501 = vadd.f32 %v3485, %v3499
      %3502 = vset.pattern.permute.xlu0 47
      %3503 = vperm.xlu0 %3502, %v1952
      %v3504 = vpop.permute.xlu0 %3503
      %v3506 = vlaneseq
      %v3507 = vshrl.u32 %v3506, 7
      %v3508 = vsub.s32 2, %v3507
      %v3509 = vrot.slane %v3342, %v3508
      %v3510 = vlaneseq
      %v3511 = vshrl.u32 %v3510, 7
      %v3512 = vsub.s32 2, %v3511
      %v3513 = vrot.slane %v3343, %v3512
      %v3514 = vmul.f32 %v3504, %v3509
      %v3515 = vmul.f32 %v3504, %v3513
      %v3516 = vadd.f32 %v3500, %v3514
      %v3517 = vadd.f32 %v3501, %v3515
      %3518 = vset.pattern.permute.xlu0 48
      %3519 = vperm.xlu0 %3518, %v1952
      %v3520 = vpop.permute.xlu0 %3519
      %v3522 = vlaneseq
      %v3523 = vshrl.u32 %v3522, 7
      %v3524 = vsub.s32 3, %v3523
      %v3525 = vrot.slane %v3342, %v3524
      %v3526 = vlaneseq
      %v3527 = vshrl.u32 %v3526, 7
      %v3528 = vsub.s32 3, %v3527
      %v3529 = vrot.slane %v3343, %v3528
      %v3530 = vmul.f32 %v3520, %v3525
      %v3531 = vmul.f32 %v3520, %v3529
      %v3532 = vadd.f32 %v3516, %v3530
      %v3533 = vadd.f32 %v3517, %v3531
      %3534 = vset.pattern.permute.xlu0 49
      %3535 = vperm.xlu0 %3534, %v1952
      %v3536 = vpop.permute.xlu0 %3535
      %v3538 = vlaneseq
      %v3539 = vshrl.u32 %v3538, 7
      %v3540 = vsub.s32 4, %v3539
      %v3541 = vrot.slane %v3342, %v3540
      %v3542 = vlaneseq
      %v3543 = vshrl.u32 %v3542, 7
      %v3544 = vsub.s32 4, %v3543
      %v3545 = vrot.slane %v3343, %v3544
      %v3546 = vmul.f32 %v3536, %v3541
      %v3547 = vmul.f32 %v3536, %v3545
      %v3548 = vadd.f32 %v3532, %v3546
      %v3549 = vadd.f32 %v3533, %v3547
      %3550 = vset.pattern.permute.xlu0 50
      %3551 = vperm.xlu0 %3550, %v1952
      %v3552 = vpop.permute.xlu0 %3551
      %v3554 = vlaneseq
      %v3555 = vshrl.u32 %v3554, 7
      %v3556 = vsub.s32 5, %v3555
      %v3557 = vrot.slane %v3342, %v3556
      %v3558 = vlaneseq
      %v3559 = vshrl.u32 %v3558, 7
      %v3560 = vsub.s32 5, %v3559
      %v3561 = vrot.slane %v3343, %v3560
      %v3562 = vmul.f32 %v3552, %v3557
      %v3563 = vmul.f32 %v3552, %v3561
      %v3564 = vadd.f32 %v3548, %v3562
      %v3565 = vadd.f32 %v3549, %v3563
      %3566 = vset.pattern.permute.xlu0 51
      %3567 = vperm.xlu0 %3566, %v1952
      %v3568 = vpop.permute.xlu0 %3567
      %v3570 = vlaneseq
      %v3571 = vshrl.u32 %v3570, 7
      %v3572 = vsub.s32 6, %v3571
      %v3573 = vrot.slane %v3342, %v3572
      %v3574 = vlaneseq
      %v3575 = vshrl.u32 %v3574, 7
      %v3576 = vsub.s32 6, %v3575
      %v3577 = vrot.slane %v3343, %v3576
      %v3578 = vmul.f32 %v3568, %v3573
      %v3579 = vmul.f32 %v3568, %v3577
      %v3580 = vadd.f32 %v3564, %v3578
      %v3581 = vadd.f32 %v3565, %v3579
      %3582 = vset.pattern.permute.xlu0 52
      %3583 = vperm.xlu0 %3582, %v1952
      %v3584 = vpop.permute.xlu0 %3583
      %v3586 = vlaneseq
      %v3587 = vshrl.u32 %v3586, 7
      %v3588 = vsub.s32 7, %v3587
      %v3589 = vrot.slane %v3342, %v3588
      %v3590 = vlaneseq
      %v3591 = vshrl.u32 %v3590, 7
      %v3592 = vsub.s32 7, %v3591
      %v3593 = vrot.slane %v3343, %v3592
      %v3594 = vmul.f32 %v3584, %v3589
      %v3595 = vmul.f32 %v3584, %v3593
      %v3596 = vadd.f32 %v3580, %v3594
      %v3597 = vadd.f32 %v3581, %v3595
      %v3598 = vadd.f32 %v2710, %v3596
      %v3599 = vadd.f32 %v2711, %v3597
      %v3602 = vcombine.low %v3598, %v3599
      %3604 = vst [vmem:[%s170] sm:$0xff] %v3602
      %p3605 = scmp.lt.s32.totalorder %s14, 1
      %s3606 = scalar_select %p3605, %s14, 1
      %s3607 = smul.addr %s3606, 2
      %s3608 = smul.addr %s3607, 4
      %s3609 = scalar_lea.vmem %s3, %s3608
      // Predicated region
      $region33: #{spectral_ab.1} parent=31 // pred_check
        %p3610 = pneg %p100
      $region34: #{spectral_ab.1} parent=31 // pred_check_branch
        %3612 = sbr.rel (%p3610) target = $region36
      $region35: #{spectral_ab.1} parent=31 // pred_region
        _
      $region36: #{spectral_ab.1} parent=31 // pred_fallthru
        _
    $region32: #{spectral_ab.1} parent=5 // pred_fallthru
      _
    %p3613 = scmp.le.s32.totalorder 2, %s9
    // Predicated region
    $region37: #{spectral_ab.1} parent=5 // pred_check
      %p3614 = pneg %p3613
    $region38: #{spectral_ab.1} parent=5 // pred_check_branch
      %3616 = sbr.rel (%p3614) target = $region40
    $region39: #{spectral_ab.1} parent=5 // pred_region
      %s3617 = ssub.s32 %s9, 2
      // Predicated region
      $region41: #{spectral_ab.1} parent=39 // pred_check
        %p3618 = pneg %p106
      $region42: #{spectral_ab.1} parent=39 // pred_check_branch
        %3620 = sbr.rel (%p3618) target = $region44
      $region43: #{spectral_ab.1} parent=39 // pred_region
        %p3621 = scmp.lt.s32.totalorder %s15, 1
        %s3622 = scalar_select %p3621, %s15, 1
        %s3623 = smul.addr %s3622, 2
        %s3624 = smul.addr %s3623, 4
        %s3625 = scalar_lea.vmem %s3, %s3624
      $region44: #{spectral_ab.1} parent=39 // pred_fallthru
        _
    $region40: #{spectral_ab.1} parent=5 // pred_fallthru
      _
  $region6: #{spectral_ab.1} parent=0 // loop_footer
    %s13 = sadd.s32 1, %s9
  $region7: #{spectral_ab.1} parent=0 // loop_footer_branch
    %8 = sbr.rel target = $region3
  $region8: #{spectral_ab.1} parent=0 // loop_exit
    _

</llo_original>
